<compile_context>
chip_gen: v5e
topology: v5e:2x2
jax: 0.10.0
libtpu: 0.0.40
codegen_flags: <defaults>
</compile_context>

<pallas_src>
import math
from functools import partial

import jax
import jax.numpy as jnp
from jax import lax
from jax.experimental import pallas as pl
from jax.experimental.pallas import tpu as pltpu

LN_EPS = 1e-5


def _layernorm(x, gamma, beta):
    # x: (rows, D) f32, gamma/beta: (1, D) f32
    mu = jnp.mean(x, axis=-1, keepdims=True)
    xc = x - mu
    var = jnp.mean(xc * xc, axis=-1, keepdims=True)
    return xc * lax.rsqrt(var + LN_EPS) * gamma + beta


# --------------------------------------------------------------------------- #
# Fused encoder-block kernel                                                   #
# --------------------------------------------------------------------------- #
def encoder_block_kernel(x_ref, pe_ref, g1_ref, be1_ref, wqkv_ref, bqkv_ref,
                         wo_ref, bo_ref, g2_ref, be2_ref,
                         w1_ref, b1_ref, w2_ref, b2_ref,
                         out_ref, attn_ref,
                         q_sc, k_sc, v_sc, *, scale, tile_s):
    s = pl.program_id(1)

    # Once per batch (q-tile axis is sequential "arbitrary"): PE add, LayerNorm1 and the
    # fused QKV projection over the FULL sequence; stash q/k/v (bf16) in VMEM scratch.
    @pl.when(s == 0)
    def _():
        xpe = x_ref[...] + pe_ref[...]                           # (S, D) f32
        xn = _layernorm(xpe, g1_ref[...], be1_ref[...])
        qkv = jnp.dot(xn.astype(jnp.bfloat16), wqkv_ref[...],
                      preferred_element_type=jnp.float32) + bqkv_ref[...]
        d = q_sc.shape[-1]
        # Fold the 1/sqrt(d_head) attention scale into q (exact, in f32, once).
        q_sc[...] = (qkv[:, :d] * scale).astype(jnp.bfloat16)
        k_sc[...] = qkv[:, d:2 * d].astype(jnp.bfloat16)
        v_sc[...] = qkv[:, 2 * d:].astype(jnp.bfloat16)

    row0 = pl.multiple_of(s * tile_s, tile_s)
    x_row = x_ref[pl.ds(row0, tile_s), :] + pe_ref[pl.ds(row0, tile_s), :]   # residual base
    q_row = q_sc[pl.ds(row0, tile_s), :]                                     # (tile_s, D) bf16

    # scores: contract q (tile_s, D) against k (S, D) on their last axes on the MXU
    # (no k.T materialization). q already carries the 1/sqrt(d) scale.
    scores = lax.dot_general(
        q_row, k_sc[...],
        dimension_numbers=(((1,), (1,)), ((), ())),
        preferred_element_type=jnp.float32)                      # (tile_s, S) f32

    m = jnp.max(scores, axis=-1, keepdims=True)
    p = jnp.exp(scores - m)
    inv_den = pl.reciprocal(jnp.sum(p, axis=-1, keepdims=True), approx=True)  # EUP slot
    attn = p * inv_den
    attn_ref[...] = attn                                         # f32, lane-dense (last dim = S)

    ctx = jnp.dot(attn.astype(jnp.bfloat16), v_sc[...],
                  preferred_element_type=jnp.float32)            # (tile_s, D)
    x_att = jnp.dot(ctx.astype(jnp.bfloat16), wo_ref[...],
                    preferred_element_type=jnp.float32) + bo_ref[...]

    x1 = x_row + x_att                                           # residual 1 (f32)
    xn2 = _layernorm(x1, g2_ref[...], be2_ref[...])

    h = jnp.dot(xn2.astype(jnp.bfloat16), w1_ref[...],
                preferred_element_type=jnp.float32) + b1_ref[...]
    h = jnp.maximum(h, 0.0)
    ff = jnp.dot(h.astype(jnp.bfloat16), w2_ref[...],
                 preferred_element_type=jnp.float32) + b2_ref[...]

    out_ref[...] = x1 + ff                                       # residual 2 (f32)


# --------------------------------------------------------------------------- #
# Wrappers                                                                     #
# --------------------------------------------------------------------------- #
def encoder_block(x, pe, kp, *, tile_s=128):
    """One EncoderBlock forward (with PE added before norm1 and to the residual stream).
    x: (B, S, D) f32, pe: (S, D) f32, kp: packed kernel params.
    Returns (x_out (B, S, D) f32, attn (B, S, S) f32)."""
    B, S, D = x.shape
    H = kp["w1"].shape[1]
    tile_s = min(tile_s, S)
    assert S % tile_s == 0, "S must be a multiple of the q-row tile"
    grid = (B, S // tile_s)

    def full_spec(shape):     # whole-array block, same for every grid step
        nd = len(shape)
        return pl.BlockSpec(shape, lambda b, s: (0,) * nd)

    kernel = partial(encoder_block_kernel, scale=1.0 / math.sqrt(D), tile_s=tile_s)

    call = pl.pallas_call(
        kernel,
        grid_spec=pltpu.PrefetchScalarGridSpec(
            num_scalar_prefetch=0,
            grid=grid,
            in_specs=[
                # full-sequence x for this batch (fetched once per batch step)
                pl.BlockSpec((pl.Squeezed(), S, D), lambda b, s: (b, 0, 0)),   # x
                full_spec((S, D)),                                             # pe
                full_spec((1, D)), full_spec((1, D)),                          # gamma1, beta1
                full_spec((D, 3 * D)), full_spec((1, 3 * D)),                  # Wqkv (bf16), bqkv
                full_spec((D, D)), full_spec((1, D)),                          # Wo (bf16), bo
                full_spec((1, D)), full_spec((1, D)),                          # gamma2, beta2
                full_spec((D, H)), full_spec((1, H)),                          # W1 (bf16), b1
                full_spec((H, D)), full_spec((1, D)),                          # W2 (bf16), b2
            ],
            out_specs=[
                pl.BlockSpec((pl.Squeezed(), tile_s, D), lambda b, s: (b, s, 0)),   # x_out
                pl.BlockSpec((pl.Squeezed(), tile_s, S), lambda b, s: (b, s, 0)),   # attn
            ],
            scratch_shapes=[
                pltpu.VMEM((S, D), jnp.bfloat16),   # q (scaled)
                pltpu.VMEM((S, D), jnp.bfloat16),   # k
                pltpu.VMEM((S, D), jnp.bfloat16),   # v
            ],
        ),
        out_shape=[
            jax.ShapeDtypeStruct((B, S, D), jnp.float32),
            jax.ShapeDtypeStruct((B, S, S), jnp.float32),
        ],
        compiler_params=pltpu.CompilerParams(
            dimension_semantics=("parallel", "arbitrary")),
    )
    return call(x, pe, kp["gamma1"], kp["beta1"], kp["wqkv"], kp["bqkv"],
                kp["wo"], kp["bo"], kp["gamma2"], kp["beta2"],
                kp["w1"], kp["b1"], kp["w2"], kp["b2"])


def encoder(x, block_params, pe):
    """Encoder.forward: x <- PositionalEncoding(x), then the encoder blocks.
    Returns (x_out, {'self_attention': attn_weights_of_last_block})."""
    attn = None
    zero_pe = jnp.zeros_like(pe)
    for i, kp in enumerate(block_params):
        x, attn = encoder_block(x, pe if i == 0 else zero_pe, kp)
    return x, {"self_attention": attn}


# --------------------------------------------------------------------------- #
# Parameters / positional encoding / reference                                 #
# --------------------------------------------------------------------------- #
def sinusoidal_positional_encoding(seq_len, d_model):
    pos = jnp.arange(seq_len, dtype=jnp.float32)[:, None]
    idx = jnp.arange(0, d_model, 2, dtype=jnp.float32)[None, :]
    angle = pos / jnp.power(10000.0, idx / d_model)
    pe = jnp.zeros((seq_len, d_model), jnp.float32)
    pe = pe.at[:, 0::2].set(jnp.sin(angle))
    pe = pe.at[:, 1::2].set(jnp.cos(angle))
    return pe


def init_params(key, d_model, ff_hidden_ratio=4):
    """f32, torch-equivalent params (Linear weights stored (in, out) => y = x @ W + b)."""
    H = d_model * ff_hidden_ratio
    ks = jax.random.split(key, 12)
    s = 0.05
    p = {
        "gamma1": jnp.ones((1, d_model), jnp.float32) + s * jax.random.normal(ks[0], (1, d_model)),
        "beta1":  s * jax.random.normal(ks[1], (1, d_model)),
        "wq": s * jax.random.normal(ks[2], (d_model, d_model)),
        "bq": s * jax.random.normal(ks[3], (1, d_model)),
        "wk": s * jax.random.normal(ks[4], (d_model, d_model)),
        "bk": s * jax.random.normal(ks[5], (1, d_model)),
        "wv": s * jax.random.normal(ks[6], (d_model, d_model)),
        "bv": s * jax.random.normal(ks[7], (1, d_model)),
        "wo": s * jax.random.normal(ks[8], (d_model, d_model)),
        "bo": s * jax.random.normal(ks[9], (1, d_model)),
        "gamma2": jnp.ones((1, d_model), jnp.float32) + s * jax.random.normal(ks[10], (1, d_model)),
        "beta2":  s * jax.random.normal(ks[11], (1, d_model)),
        "w1": s * jax.random.normal(jax.random.fold_in(key, 100), (d_model, H)),
        "b1": s * jax.random.normal(jax.random.fold_in(key, 101), (1, H)),
        "w2": s * jax.random.normal(jax.random.fold_in(key, 102), (H, d_model)),
        "b2": s * jax.random.normal(jax.random.fold_in(key, 103), (1, d_model)),
    }
    return {k: v.astype(jnp.float32) for k, v in p.items()}


def pack_params(p):
    """Kernel-ready params: fused Wqkv + bf16 weight matrices, f32 biases / LN params."""
    return {
        "gamma1": p["gamma1"], "beta1": p["beta1"],
        "wqkv": jnp.concatenate([p["wq"], p["wk"], p["wv"]], axis=1).astype(jnp.bfloat16),
        "bqkv": jnp.concatenate([p["bq"], p["bk"], p["bv"]], axis=1),
        "wo": p["wo"].astype(jnp.bfloat16), "bo": p["bo"],
        "gamma2": p["gamma2"], "beta2": p["beta2"],
        "w1": p["w1"].astype(jnp.bfloat16), "b1": p["b1"],
        "w2": p["w2"].astype(jnp.bfloat16), "b2": p["b2"],
    }


def reference_encoder(x, params_list, pe):
    """Pure-JAX f32 reference mirroring the PyTorch Encoder forward (n_heads=1)."""
    def ln(v, g, b):
        mu = jnp.mean(v, -1, keepdims=True)
        var = jnp.mean((v - mu) ** 2, -1, keepdims=True)
        return (v - mu) / jnp.sqrt(var + LN_EPS) * g + b

    x = x + pe[None]
    attn = None
    for p in params_list:
        xn = ln(x, p["gamma1"], p["beta1"])
        q = xn @ p["wq"] + p["bq"]
        k = xn @ p["wk"] + p["bk"]
        v = xn @ p["wv"] + p["bv"]
        scores = jnp.einsum("bsd,btd->bst", q, k) / math.sqrt(x.shape[-1])
        attn = jax.nn.softmax(scores, axis=-1)
        ctx = jnp.einsum("bst,btd->bsd", attn, v)
        x1 = x + ctx @ p["wo"] + p["bo"]
        xn2 = ln(x1, p["gamma2"], p["beta2"])
        ff = jnp.maximum(xn2 @ p["w1"] + p["b1"], 0.0) @ p["w2"] + p["b2"]
        x = x1 + ff
    return x, {"self_attention": attn}


if __name__ == "__main__":
    # S, D multiples of 128: lane-dense blocks/stores, MXU M-dim = 128 per q-tile,
    # and a (2 batch)-parallel grid so both v7x TensorCores get work at B=2.
    B, S, D, FF_RATIO = 2, 256, 128, 4
    key = jax.random.PRNGKey(0)
    kx, kparam = jax.random.split(key)
    x = jax.random.normal(kx, (B, S, D), dtype=jnp.float32)
    raw_params = init_params(kparam, D, ff_hidden_ratio=FF_RATIO)
    pe = sinusoidal_positional_encoding(S, D)

    packed = [pack_params(raw_params)]          # num_enc_blocks = 1 (module default)
    out, attn_dict = encoder(x, packed, pe)
    out = jax.block_until_ready(out)
    attn = jax.block_until_ready(attn_dict["self_attention"])

    ref_out, ref_dict = reference_encoder(x, [raw_params], pe)
    ref_attn = ref_dict["self_attention"]

    assert out.shape == (B, S, D) and attn.shape == (B, S, S)
    # bf16 MXU operands (f32 accumulation) vs. a pure-f32 reference -> bf16-level tolerances.
    assert jnp.allclose(attn, ref_attn, atol=2e-3, rtol=2e-2), (
        "attn mismatch: max abs err %e" % float(jnp.max(jnp.abs(attn - ref_attn))))
    assert jnp.allclose(out, ref_out, atol=5e-2, rtol=5e-2), (
        "output mismatch: max abs err %e" % float(jnp.max(jnp.abs(out - ref_out))))

    print("KERNEL_OK")
</pallas_src>

<mosaic_0001>
module attributes {stable_mosaic.version = 11 : i64} {
  func.func @encoder_block_kernel(%arg0: i32, %arg1: i32, %arg2: memref<1x256x128xf32, #tpu.memory_space<vmem>>, %arg3: memref<256x128xf32, #tpu.memory_space<vmem>>, %arg4: memref<1x128xf32, #tpu.memory_space<vmem>>, %arg5: memref<1x128xf32, #tpu.memory_space<vmem>>, %arg6: memref<128x384xbf16, #tpu.memory_space<vmem>>, %arg7: memref<1x384xf32, #tpu.memory_space<vmem>>, %arg8: memref<128x128xbf16, #tpu.memory_space<vmem>>, %arg9: memref<1x128xf32, #tpu.memory_space<vmem>>, %arg10: memref<1x128xf32, #tpu.memory_space<vmem>>, %arg11: memref<1x128xf32, #tpu.memory_space<vmem>>, %arg12: memref<128x512xbf16, #tpu.memory_space<vmem>>, %arg13: memref<1x512xf32, #tpu.memory_space<vmem>>, %arg14: memref<512x128xbf16, #tpu.memory_space<vmem>>, %arg15: memref<1x128xf32, #tpu.memory_space<vmem>>, %arg16: memref<1x128x128xf32, #tpu.memory_space<vmem>>, %arg17: memref<1x128x256xf32, #tpu.memory_space<vmem>>, %arg18: memref<256x128xbf16, #tpu.memory_space<vmem>>, %arg19: memref<256x128xbf16, #tpu.memory_space<vmem>>, %arg20: memref<256x128xbf16, #tpu.memory_space<vmem>>) attributes {dimension_semantics = [#tpu.dimension_semantics<parallel>, #tpu.dimension_semantics<arbitrary>], iteration_bounds = array<i64: 2, 2>, scalar_prefetch = 0 : i64, scratch_operands = 3 : i64, tpu.core_type = #tpu.core_type<tc>, window_params = [{transform_indices = @transform_0, window_bounds = array<i64: 1, 256, 128>}, {pipeline_mode = #tpu.pipeline_mode<synchronous>, transform_indices = @transform_1, window_bounds = array<i64: 256, 128>}, {pipeline_mode = #tpu.pipeline_mode<synchronous>, transform_indices = @transform_2, window_bounds = array<i64: 1, 128>}, {pipeline_mode = #tpu.pipeline_mode<synchronous>, transform_indices = @transform_3, window_bounds = array<i64: 1, 128>}, {pipeline_mode = #tpu.pipeline_mode<synchronous>, transform_indices = @transform_4, window_bounds = array<i64: 128, 384>}, {pipeline_mode = #tpu.pipeline_mode<synchronous>, transform_indices = @transform_5, window_bounds = array<i64: 1, 384>}, {pipeline_mode = #tpu.pipeline_mode<synchronous>, transform_indices = @transform_6, window_bounds = array<i64: 128, 128>}, {pipeline_mode = #tpu.pipeline_mode<synchronous>, transform_indices = @transform_7, window_bounds = array<i64: 1, 128>}, {pipeline_mode = #tpu.pipeline_mode<synchronous>, transform_indices = @transform_8, window_bounds = array<i64: 1, 128>}, {pipeline_mode = #tpu.pipeline_mode<synchronous>, transform_indices = @transform_9, window_bounds = array<i64: 1, 128>}, {pipeline_mode = #tpu.pipeline_mode<synchronous>, transform_indices = @transform_10, window_bounds = array<i64: 128, 512>}, {pipeline_mode = #tpu.pipeline_mode<synchronous>, transform_indices = @transform_11, window_bounds = array<i64: 1, 512>}, {pipeline_mode = #tpu.pipeline_mode<synchronous>, transform_indices = @transform_12, window_bounds = array<i64: 512, 128>}, {pipeline_mode = #tpu.pipeline_mode<synchronous>, transform_indices = @transform_13, window_bounds = array<i64: 1, 128>}, {transform_indices = @transform_14, window_bounds = array<i64: 1, 128, 128>}, {transform_indices = @transform_15, window_bounds = array<i64: 1, 128, 256>}]} {
    %c0_i32 = arith.constant 0 : i32
    %0 = arith.cmpi eq, %arg1, %c0_i32 : i32
    %1 = arith.extui %0 : i1 to i32
    %c0_i32_0 = arith.constant 0 : i32
    %2 = arith.cmpi ne, %1, %c0_i32_0 : i32
    scf.if %2 {
      %c0_42 = arith.constant 0 : index
      %c0_43 = arith.constant 0 : index
      %c0_44 = arith.constant 0 : index
      %78 = vector.load %arg2[%c0_42, %c0_43, %c0_44] : memref<1x256x128xf32, #tpu.memory_space<vmem>>, vector<1x256x128xf32>
      %79 = vector.shape_cast %78 : vector<1x256x128xf32> to vector<256x128xf32>
      %c0_45 = arith.constant 0 : index
      %c0_46 = arith.constant 0 : index
      %80 = vector.load %arg3[%c0_45, %c0_46] : memref<256x128xf32, #tpu.memory_space<vmem>>, vector<256x128xf32>
      %81 = arith.addf %79, %80 : vector<256x128xf32>
      %c0_47 = arith.constant 0 : index
      %c0_48 = arith.constant 0 : index
      %82 = vector.load %arg4[%c0_47, %c0_48] : memref<1x128xf32, #tpu.memory_space<vmem>>, vector<1x128xf32>
      %c0_49 = arith.constant 0 : index
      %c0_50 = arith.constant 0 : index
      %83 = vector.load %arg5[%c0_49, %c0_50] : memref<1x128xf32, #tpu.memory_space<vmem>>, vector<1x128xf32>
      %cst_51 = arith.constant dense<0.000000e+00> : vector<256xf32>
      %84 = vector.multi_reduction <add>, %81, %cst_51 [1] : vector<256x128xf32> to vector<256xf32>
      %85 = vector.shape_cast %84 : vector<256xf32> to vector<256x1xf32>
      %cst_52 = arith.constant 1.280000e+02 : f32
      %86 = vector.broadcast %cst_52 : f32 to vector<256x1xf32>
      %87 = arith.divf %85, %86 : vector<256x1xf32>
      %88 = vector.broadcast %87 : vector<256x1xf32> to vector<256x128xf32>
      %89 = arith.subf %81, %88 : vector<256x128xf32>
      %90 = arith.mulf %89, %89 : vector<256x128xf32>
      %cst_53 = arith.constant dense<0.000000e+00> : vector<256xf32>
      %91 = vector.multi_reduction <add>, %90, %cst_53 [1] : vector<256x128xf32> to vector<256xf32>
      %92 = vector.shape_cast %91 : vector<256xf32> to vector<256x1xf32>
      %cst_54 = arith.constant 1.280000e+02 : f32
      %93 = vector.broadcast %cst_54 : f32 to vector<256x1xf32>
      %94 = arith.divf %92, %93 : vector<256x1xf32>
      %cst_55 = arith.constant 9.99999974E-6 : f32
      %95 = vector.broadcast %cst_55 : f32 to vector<256x1xf32>
      %96 = arith.addf %94, %95 : vector<256x1xf32>
      %97 = math.rsqrt %96 : vector<256x1xf32>
      %98 = vector.broadcast %97 : vector<256x1xf32> to vector<256x128xf32>
      %99 = arith.mulf %89, %98 : vector<256x128xf32>
      %100 = vector.broadcast %82 : vector<1x128xf32> to vector<256x128xf32>
      %101 = arith.mulf %99, %100 : vector<256x128xf32>
      %102 = vector.broadcast %83 : vector<1x128xf32> to vector<256x128xf32>
      %103 = arith.addf %101, %102 : vector<256x128xf32>
      %104 = arith.truncf %103 : vector<256x128xf32> to vector<256x128xbf16>
      %c0_56 = arith.constant 0 : index
      %c0_57 = arith.constant 0 : index
      %105 = vector.load %arg6[%c0_56, %c0_57] : memref<128x384xbf16, #tpu.memory_space<vmem>>, vector<128x384xbf16>
      %cst_58 = arith.constant dense<0.000000e+00> : vector<256x384xf32>
      %106 = tpu.matmul %104, %105, %cst_58 {dimension_numbers = #tpu.dot_dimension_numbers<[1], [0], [0], [1], [0, 0, 1, 1], [], []>} : vector<256x128xbf16>, vector<128x384xbf16>, vector<256x384xf32> -> vector<256x384xf32>
      %c0_59 = arith.constant 0 : index
      %c0_60 = arith.constant 0 : index
      %107 = vector.load %arg7[%c0_59, %c0_60] : memref<1x384xf32, #tpu.memory_space<vmem>>, vector<1x384xf32>
      %108 = vector.broadcast %107 : vector<1x384xf32> to vector<256x384xf32>
      %109 = arith.addf %106, %108 : vector<256x384xf32>
      %110 = vector.extract_strided_slice %109 {offsets = [0, 0], sizes = [256, 128], strides = [1, 1]} : vector<256x384xf32> to vector<256x128xf32>
      %cst_61 = arith.constant 0.0883883461 : f32
      %111 = vector.broadcast %cst_61 : f32 to vector<256x128xf32>
      %112 = arith.mulf %110, %111 : vector<256x128xf32>
      %113 = arith.truncf %112 : vector<256x128xf32> to vector<256x128xbf16>
      %c0_62 = arith.constant 0 : index
      %c0_63 = arith.constant 0 : index
      %114 = vector.load %arg18[%c0_62, %c0_63] : memref<256x128xbf16, #tpu.memory_space<vmem>>, vector<256x128xbf16>
      tpu.vector_store %arg18[%c0_62, %c0_63], %113 {strides = array<i32>} : memref<256x128xbf16, #tpu.memory_space<vmem>>, vector<256x128xbf16>,
      %115 = vector.extract_strided_slice %109 {offsets = [0, 128], sizes = [256, 128], strides = [1, 1]} : vector<256x384xf32> to vector<256x128xf32>
      %116 = arith.truncf %115 : vector<256x128xf32> to vector<256x128xbf16>
      %c0_64 = arith.constant 0 : index
      %c0_65 = arith.constant 0 : index
      %117 = vector.load %arg19[%c0_64, %c0_65] : memref<256x128xbf16, #tpu.memory_space<vmem>>, vector<256x128xbf16>
      tpu.vector_store %arg19[%c0_64, %c0_65], %116 {strides = array<i32>} : memref<256x128xbf16, #tpu.memory_space<vmem>>, vector<256x128xbf16>,
      %118 = vector.extract_strided_slice %109 {offsets = [0, 256], sizes = [256, 128], strides = [1, 1]} : vector<256x384xf32> to vector<256x128xf32>
      %119 = arith.truncf %118 : vector<256x128xf32> to vector<256x128xbf16>
      %c0_66 = arith.constant 0 : index
      %c0_67 = arith.constant 0 : index
      %120 = vector.load %arg20[%c0_66, %c0_67] : memref<256x128xbf16, #tpu.memory_space<vmem>>, vector<256x128xbf16>
      tpu.vector_store %arg20[%c0_66, %c0_67], %119 {strides = array<i32>} : memref<256x128xbf16, #tpu.memory_space<vmem>>, vector<256x128xbf16>,
    } else {
    }
    %c128_i32 = arith.constant 128 : i32
    %3 = arith.muli %arg1, %c128_i32 : i32
    %4 = tpu.assume_multiple %3, 128 : i32
    %c0 = arith.constant 0 : index
    %5 = arith.index_cast %4 : i32 to index
    %c0_1 = arith.constant 0 : index
    %6 = vector.load %arg2[%c0, %5, %c0_1] : memref<1x256x128xf32, #tpu.memory_space<vmem>>, vector<1x128x128xf32>
    %7 = vector.shape_cast %6 : vector<1x128x128xf32> to vector<128x128xf32>
    %8 = arith.index_cast %4 : i32 to index
    %c0_2 = arith.constant 0 : index
    %9 = vector.load %arg3[%8, %c0_2] : memref<256x128xf32, #tpu.memory_space<vmem>>, vector<128x128xf32>
    %10 = arith.addf %7, %9 : vector<128x128xf32>
    %11 = arith.index_cast %4 : i32 to index
    %c0_3 = arith.constant 0 : index
    %12 = vector.load %arg18[%11, %c0_3] : memref<256x128xbf16, #tpu.memory_space<vmem>>, vector<128x128xbf16>
    %c0_4 = arith.constant 0 : index
    %c0_5 = arith.constant 0 : index
    %13 = vector.load %arg19[%c0_4, %c0_5] : memref<256x128xbf16, #tpu.memory_space<vmem>>, vector<256x128xbf16>
    %cst = arith.constant dense<0.000000e+00> : vector<128x256xf32>
    %14 = tpu.matmul %12, %13, %cst {dimension_numbers = #tpu.dot_dimension_numbers<[1], [1], [0], [0], [0, 0, 1, 0], [], []>} : vector<128x128xbf16>, vector<256x128xbf16>, vector<128x256xf32> -> vector<128x256xf32>
    %cst_6 = arith.constant dense<0xFF800000> : vector<128xf32>
    %15 = vector.multi_reduction <maximumf>, %14, %cst_6 [1] : vector<128x256xf32> to vector<128xf32>
    %16 = vector.shape_cast %15 : vector<128xf32> to vector<128x1xf32>
    %17 = vector.broadcast %16 : vector<128x1xf32> to vector<128x256xf32>
    %18 = arith.subf %14, %17 : vector<128x256xf32>
    %19 = math.exp %18 : vector<128x256xf32>
    %cst_7 = arith.constant dense<0.000000e+00> : vector<128xf32>
    %20 = vector.multi_reduction <add>, %19, %cst_7 [1] : vector<128x256xf32> to vector<128xf32>
    %21 = vector.shape_cast %20 : vector<128xf32> to vector<128x1xf32>
    %22 = tpu.reciprocal %21 {approx = true} : vector<128x1xf32> -> vector<128x1xf32>
    %23 = vector.broadcast %22 : vector<128x1xf32> to vector<128x256xf32>
    %24 = arith.mulf %19, %23 : vector<128x256xf32>
    %c0_8 = arith.constant 0 : index
    %c0_9 = arith.constant 0 : index
    %c0_10 = arith.constant 0 : index
    %25 = vector.load %arg17[%c0_8, %c0_9, %c0_10] : memref<1x128x256xf32, #tpu.memory_space<vmem>>, vector<1x128x256xf32>
    %26 = vector.shape_cast %25 : vector<1x128x256xf32> to vector<128x256xf32>
    %27 = vector.shape_cast %24 : vector<128x256xf32> to vector<1x128x256xf32>
    tpu.vector_store %arg17[%c0_8, %c0_9, %c0_10], %27 {strides = array<i32>} : memref<1x128x256xf32, #tpu.memory_space<vmem>>, vector<1x128x256xf32>,
    %28 = arith.truncf %24 : vector<128x256xf32> to vector<128x256xbf16>
    %c0_11 = arith.constant 0 : index
    %c0_12 = arith.constant 0 : index
    %29 = vector.load %arg20[%c0_11, %c0_12] : memref<256x128xbf16, #tpu.memory_space<vmem>>, vector<256x128xbf16>
    %cst_13 = arith.constant dense<0.000000e+00> : vector<128x128xf32>
    %30 = tpu.matmul %28, %29, %cst_13 {dimension_numbers = #tpu.dot_dimension_numbers<[1], [0], [0], [1], [0, 0, 1, 1], [], []>} : vector<128x256xbf16>, vector<256x128xbf16>, vector<128x128xf32> -> vector<128x128xf32>
    %31 = arith.truncf %30 : vector<128x128xf32> to vector<128x128xbf16>
    %c0_14 = arith.constant 0 : index
    %c0_15 = arith.constant 0 : index
    %32 = vector.load %arg8[%c0_14, %c0_15] : memref<128x128xbf16, #tpu.memory_space<vmem>>, vector<128x128xbf16>
    %cst_16 = arith.constant dense<0.000000e+00> : vector<128x128xf32>
    %33 = tpu.matmul %31, %32, %cst_16 {dimension_numbers = #tpu.dot_dimension_numbers<[1], [0], [0], [1], [0, 0, 1, 1], [], []>} : vector<128x128xbf16>, vector<128x128xbf16>, vector<128x128xf32> -> vector<128x128xf32>
    %c0_17 = arith.constant 0 : index
    %c0_18 = arith.constant 0 : index
    %34 = vector.load %arg9[%c0_17, %c0_18] : memref<1x128xf32, #tpu.memory_space<vmem>>, vector<1x128xf32>
    %35 = vector.broadcast %34 : vector<1x128xf32> to vector<128x128xf32>
    %36 = arith.addf %33, %35 : vector<128x128xf32>
    %37 = arith.addf %10, %36 : vector<128x128xf32>
    %c0_19 = arith.constant 0 : index
    %c0_20 = arith.constant 0 : index
    %38 = vector.load %arg10[%c0_19, %c0_20] : memref<1x128xf32, #tpu.memory_space<vmem>>, vector<1x128xf32>
    %c0_21 = arith.constant 0 : index
    %c0_22 = arith.constant 0 : index
    %39 = vector.load %arg11[%c0_21, %c0_22] : memref<1x128xf32, #tpu.memory_space<vmem>>, vector<1x128xf32>
    %cst_23 = arith.constant dense<0.000000e+00> : vector<128xf32>
    %40 = vector.multi_reduction <add>, %37, %cst_23 [1] : vector<128x128xf32> to vector<128xf32>
    %41 = vector.shape_cast %40 : vector<128xf32> to vector<128x1xf32>
    %cst_24 = arith.constant 1.280000e+02 : f32
    %42 = vector.broadcast %cst_24 : f32 to vector<128x1xf32>
    %43 = arith.divf %41, %42 : vector<128x1xf32>
    %44 = vector.broadcast %43 : vector<128x1xf32> to vector<128x128xf32>
    %45 = arith.subf %37, %44 : vector<128x128xf32>
    %46 = arith.mulf %45, %45 : vector<128x128xf32>
    %cst_25 = arith.constant dense<0.000000e+00> : vector<128xf32>
    %47 = vector.multi_reduction <add>, %46, %cst_25 [1] : vector<128x128xf32> to vector<128xf32>
    %48 = vector.shape_cast %47 : vector<128xf32> to vector<128x1xf32>
    %cst_26 = arith.constant 1.280000e+02 : f32
    %49 = vector.broadcast %cst_26 : f32 to vector<128x1xf32>
    %50 = arith.divf %48, %49 : vector<128x1xf32>
    %cst_27 = arith.constant 9.99999974E-6 : f32
    %51 = vector.broadcast %cst_27 : f32 to vector<128x1xf32>
    %52 = arith.addf %50, %51 : vector<128x1xf32>
    %53 = math.rsqrt %52 : vector<128x1xf32>
    %54 = vector.broadcast %53 : vector<128x1xf32> to vector<128x128xf32>
    %55 = arith.mulf %45, %54 : vector<128x128xf32>
    %56 = vector.broadcast %38 : vector<1x128xf32> to vector<128x128xf32>
    %57 = arith.mulf %55, %56 : vector<128x128xf32>
    %58 = vector.broadcast %39 : vector<1x128xf32> to vector<128x128xf32>
    %59 = arith.addf %57, %58 : vector<128x128xf32>
    %60 = arith.truncf %59 : vector<128x128xf32> to vector<128x128xbf16>
    %c0_28 = arith.constant 0 : index
    %c0_29 = arith.constant 0 : index
    %61 = vector.load %arg12[%c0_28, %c0_29] : memref<128x512xbf16, #tpu.memory_space<vmem>>, vector<128x512xbf16>
    %cst_30 = arith.constant dense<0.000000e+00> : vector<128x512xf32>
    %62 = tpu.matmul %60, %61, %cst_30 {dimension_numbers = #tpu.dot_dimension_numbers<[1], [0], [0], [1], [0, 0, 1, 1], [], []>} : vector<128x128xbf16>, vector<128x512xbf16>, vector<128x512xf32> -> vector<128x512xf32>
    %c0_31 = arith.constant 0 : index
    %c0_32 = arith.constant 0 : index
    %63 = vector.load %arg13[%c0_31, %c0_32] : memref<1x512xf32, #tpu.memory_space<vmem>>, vector<1x512xf32>
    %64 = vector.broadcast %63 : vector<1x512xf32> to vector<128x512xf32>
    %65 = arith.addf %62, %64 : vector<128x512xf32>
    %cst_33 = arith.constant 0.000000e+00 : f32
    %66 = vector.broadcast %cst_33 : f32 to vector<128x512xf32>
    %67 = arith.maximumf %65, %66 : vector<128x512xf32>
    %68 = arith.truncf %67 : vector<128x512xf32> to vector<128x512xbf16>
    %c0_34 = arith.constant 0 : index
    %c0_35 = arith.constant 0 : index
    %69 = vector.load %arg14[%c0_34, %c0_35] : memref<512x128xbf16, #tpu.memory_space<vmem>>, vector<512x128xbf16>
    %cst_36 = arith.constant dense<0.000000e+00> : vector<128x128xf32>
    %70 = tpu.matmul %68, %69, %cst_36 {dimension_numbers = #tpu.dot_dimension_numbers<[1], [0], [0], [1], [0, 0, 1, 1], [], []>} : vector<128x512xbf16>, vector<512x128xbf16>, vector<128x128xf32> -> vector<128x128xf32>
    %c0_37 = arith.constant 0 : index
    %c0_38 = arith.constant 0 : index
    %71 = vector.load %arg15[%c0_37, %c0_38] : memref<1x128xf32, #tpu.memory_space<vmem>>, vector<1x128xf32>
    %72 = vector.broadcast %71 : vector<1x128xf32> to vector<128x128xf32>
    %73 = arith.addf %70, %72 : vector<128x128xf32>
    %74 = arith.addf %37, %73 : vector<128x128xf32>
    %c0_39 = arith.constant 0 : index
    %c0_40 = arith.constant 0 : index
    %c0_41 = arith.constant 0 : index
    %75 = vector.load %arg16[%c0_39, %c0_40, %c0_41] : memref<1x128x128xf32, #tpu.memory_space<vmem>>, vector<1x128x128xf32>
    %76 = vector.shape_cast %75 : vector<1x128x128xf32> to vector<128x128xf32>
    %77 = vector.shape_cast %74 : vector<128x128xf32> to vector<1x128x128xf32>
    tpu.vector_store %arg16[%c0_39, %c0_40, %c0_41], %77 {strides = array<i32>} : memref<1x128x128xf32, #tpu.memory_space<vmem>>, vector<1x128x128xf32>,
    return
  }
  func.func @transform_0(%arg0: i32, %arg1: i32) -> (i32, i32, i32) {
    %c0_i32 = arith.constant 0 : i32
    %c0_i32_0 = arith.constant 0 : i32
    %c0_i32_1 = arith.constant 0 : i32
    return %arg0, %c0_i32, %c0_i32_0 : i32, i32, i32
  }
  func.func @transform_1(%arg0: i32, %arg1: i32) -> (i32, i32) {
    %c0_i32 = arith.constant 0 : i32
    %c0_i32_0 = arith.constant 0 : i32
    %c0_i32_1 = arith.constant 0 : i32
    return %c0_i32, %c0_i32_0 : i32, i32
  }
  func.func @transform_2(%arg0: i32, %arg1: i32) -> (i32, i32) {
    %c0_i32 = arith.constant 0 : i32
    %c0_i32_0 = arith.constant 0 : i32
    %c0_i32_1 = arith.constant 0 : i32
    return %c0_i32, %c0_i32_0 : i32, i32
  }
  func.func @transform_3(%arg0: i32, %arg1: i32) -> (i32, i32) {
    %c0_i32 = arith.constant 0 : i32
    %c0_i32_0 = arith.constant 0 : i32
    %c0_i32_1 = arith.constant 0 : i32
    return %c0_i32, %c0_i32_0 : i32, i32
  }
  func.func @transform_4(%arg0: i32, %arg1: i32) -> (i32, i32) {
    %c0_i32 = arith.constant 0 : i32
    %c0_i32_0 = arith.constant 0 : i32
    %c0_i32_1 = arith.constant 0 : i32
    return %c0_i32, %c0_i32_0 : i32, i32
  }
  func.func @transform_5(%arg0: i32, %arg1: i32) -> (i32, i32) {
    %c0_i32 = arith.constant 0 : i32
    %c0_i32_0 = arith.constant 0 : i32
    %c0_i32_1 = arith.constant 0 : i32
    return %c0_i32, %c0_i32_0 : i32, i32
  }
  func.func @transform_6(%arg0: i32, %arg1: i32) -> (i32, i32) {
    %c0_i32 = arith.constant 0 : i32
    %c0_i32_0 = arith.constant 0 : i32
    %c0_i32_1 = arith.constant 0 : i32
    return %c0_i32, %c0_i32_0 : i32, i32
  }
  func.func @transform_7(%arg0: i32, %arg1: i32) -> (i32, i32) {
    %c0_i32 = arith.constant 0 : i32
    %c0_i32_0 = arith.constant 0 : i32
    %c0_i32_1 = arith.constant 0 : i32
    return %c0_i32, %c0_i32_0 : i32, i32
  }
  func.func @transform_8(%arg0: i32, %arg1: i32) -> (i32, i32) {
    %c0_i32 = arith.constant 0 : i32
    %c0_i32_0 = arith.constant 0 : i32
    %c0_i32_1 = arith.constant 0 : i32
    return %c0_i32, %c0_i32_0 : i32, i32
  }
  func.func @transform_9(%arg0: i32, %arg1: i32) -> (i32, i32) {
    %c0_i32 = arith.constant 0 : i32
    %c0_i32_0 = arith.constant 0 : i32
    %c0_i32_1 = arith.constant 0 : i32
    return %c0_i32, %c0_i32_0 : i32, i32
  }
  func.func @transform_10(%arg0: i32, %arg1: i32) -> (i32, i32) {
    %c0_i32 = arith.constant 0 : i32
    %c0_i32_0 = arith.constant 0 : i32
    %c0_i32_1 = arith.constant 0 : i32
    return %c0_i32, %c0_i32_0 : i32, i32
  }
  func.func @transform_11(%arg0: i32, %arg1: i32) -> (i32, i32) {
    %c0_i32 = arith.constant 0 : i32
    %c0_i32_0 = arith.constant 0 : i32
    %c0_i32_1 = arith.constant 0 : i32
    return %c0_i32, %c0_i32_0 : i32, i32
  }
  func.func @transform_12(%arg0: i32, %arg1: i32) -> (i32, i32) {
    %c0_i32 = arith.constant 0 : i32
    %c0_i32_0 = arith.constant 0 : i32
    %c0_i32_1 = arith.constant 0 : i32
    return %c0_i32, %c0_i32_0 : i32, i32
  }
  func.func @transform_13(%arg0: i32, %arg1: i32) -> (i32, i32) {
    %c0_i32 = arith.constant 0 : i32
    %c0_i32_0 = arith.constant 0 : i32
    %c0_i32_1 = arith.constant 0 : i32
    return %c0_i32, %c0_i32_0 : i32, i32
  }
  func.func @transform_14(%arg0: i32, %arg1: i32) -> (i32, i32, i32) {
    %c0_i32 = arith.constant 0 : i32
    %c0_i32_0 = arith.constant 0 : i32
    return %arg0, %arg1, %c0_i32 : i32, i32, i32
  }
  func.func @transform_15(%arg0: i32, %arg1: i32) -> (i32, i32, i32) {
    %c0_i32 = arith.constant 0 : i32
    %c0_i32_0 = arith.constant 0 : i32
    return %arg0, %arg1, %c0_i32 : i32, i32, i32
  }
}

</mosaic_0001>

<llo_original>
// kernel: tpu_custom_call.1
$region0: #{tpu_custom_call.1}
  #allocation0 [shape = 'u32[]', space=smem, size = 0x4, offset = 0x4, fixed_abs, tag = 'smem constant byte address 0x4 - core index']
  #allocation1 [shape = 'u32[72,128]{1,0:T(1,128)}', space=vmem, size = 0x9000, scoped, tag = 'internal scratch']
  #allocation2 [shape = 'bf16[256,128]{1,0:T(8,128)(2,1)}', space=vmem, size = 0x10000, scoped, tag = 'scratch operand']
  #allocation3 [shape = 'bf16[256,128]{1,0:T(8,128)(2,1)}', space=vmem, size = 0x10000, scoped, tag = 'scratch operand']
  #allocation4 [shape = 'bf16[256,128]{1,0:T(8,128)(2,1)}', space=vmem, size = 0x10000, scoped, tag = 'scratch operand']
  %s0 = inlined_call_operand.hbm [shape: f32[2,256,128], index: 0, kind: input, shape index: {}]
  %s1 = inlined_call_operand.hbm [shape: f32[256,128], index: 1, kind: input, shape index: {}]
  %s2 = inlined_call_operand.hbm [shape: f32[1,128], index: 2, kind: input, shape index: {}]
  %s3 = inlined_call_operand.hbm [shape: f32[1,128], index: 3, kind: input, shape index: {}]
  %s4 = inlined_call_operand.hbm [shape: bf16[128,384], index: 4, kind: input, shape index: {}]
  %s5 = inlined_call_operand.vmem [shape: f32[1,384], index: 5, kind: input, shape index: {}]
  %s6 = inlined_call_operand.hbm [shape: bf16[128,128], index: 6, kind: input, shape index: {}]
  %s7 = inlined_call_operand.hbm [shape: f32[1,128], index: 7, kind: input, shape index: {}]
  %s8 = inlined_call_operand.hbm [shape: f32[1,128], index: 8, kind: input, shape index: {}]
  %s9 = inlined_call_operand.vmem [shape: f32[1,128], index: 9, kind: input, shape index: {}]
  %s10 = inlined_call_operand.hbm [shape: bf16[128,512], index: 10, kind: input, shape index: {}]
  %s11 = inlined_call_operand.vmem [shape: f32[1,512], index: 11, kind: input, shape index: {}]
  %s12 = inlined_call_operand.hbm [shape: bf16[512,128], index: 12, kind: input, shape index: {}]
  %s13 = inlined_call_operand.vmem [shape: f32[1,128], index: 13, kind: input, shape index: {}]
  %s14 = inlined_call_operand.hbm [shape: f32[2,256,128], index: 14, kind: output, shape index: {0}]
  %s15 = inlined_call_operand.hbm [shape: f32[2,256,256], index: 15, kind: output, shape index: {1}]
  %16 = xla_tuple %s14, %s15
  %s17 = sld [smem:[#allocation0]]
  $region141: #{tpu_custom_call.1} parent=0
    _
  %s19 = ssub.s32 1, %s17
  %s20 = scalar_select 0, %s19, %s17
  $region1: #{tpu_custom_call.1} parent=0
    #allocation5 [shape = 'u8[262144]{0}', space=vmem, size = 0x40000, scoped, tag = 'input window, operand 0']
    #allocation6 [shape = 's32[2]{0}', space=sflag, size = 0x8, scoped, tag = 'scoped memory for tpu_custom_call.1']
    #allocation7 [shape = 's32[2]{0}', space=sflag, size = 0x8, scoped, tag = 'scoped memory for tpu_custom_call.1']
    #allocation8 [shape = 'u8[131072]{0}', space=vmem, size = 0x20000, scoped, tag = 'input window, operand 1, single buffered']
    #allocation9 [shape = 's32[1]{0}', space=sflag, size = 0x4, scoped, tag = 'scoped memory for tpu_custom_call.1']
    #allocation10 [shape = 'u8[512]{0}', space=vmem, size = 0x400, scoped, tag = 'input window, operand 2, single buffered']
    #allocation11 [shape = 'u8[512]{0}', space=vmem, size = 0x400, scoped, tag = 'input window, operand 3, single buffered']
    #allocation12 [shape = 's32[1]{0}', space=sflag, size = 0x4, scoped, tag = 'scoped memory for tpu_custom_call.1']
    #allocation13 [shape = 'u8[98304]{0}', space=vmem, size = 0x18000, scoped, tag = 'input window, operand 4, single buffered']
    #allocation14 [shape = 'u8[32768]{0}', space=vmem, size = 0x8000, scoped, tag = 'input window, operand 6, single buffered']
    #allocation15 [shape = 's32[1]{0}', space=sflag, size = 0x4, scoped, tag = 'scoped memory for tpu_custom_call.1']
    #allocation16 [shape = 'u8[512]{0}', space=vmem, size = 0x400, scoped, tag = 'input window, operand 7, single buffered']
    #allocation17 [shape = 'u8[512]{0}', space=vmem, size = 0x400, scoped, tag = 'input window, operand 8, single buffered']
    #allocation18 [shape = 's32[1]{0}', space=sflag, size = 0x4, scoped, tag = 'scoped memory for tpu_custom_call.1']
    #allocation19 [shape = 'u8[131072]{0}', space=vmem, size = 0x20000, scoped, tag = 'input window, operand 10, single buffered']
    #allocation20 [shape = 'u8[131072]{0}', space=vmem, size = 0x20000, scoped, tag = 'input window, operand 12, single buffered']
    #allocation21 [shape = 's32[1]{0}', space=sflag, size = 0x4, scoped, tag = 'scoped memory for tpu_custom_call.1']
    #allocation22 [shape = 'u8[131072]{0}', space=vmem, size = 0x20000, scoped, tag = 'output window, operand 0']
    #allocation23 [shape = 'u8[262144]{0}', space=vmem, size = 0x40000, scoped, tag = 'output window, operand 1']
    #allocation24 [shape = 's32[2]{0}', space=sflag, size = 0x8, scoped, tag = 'scoped memory for tpu_custom_call.1']
    %21 = vsyncpa [#allocation6], 0
    %s22 = scalar_lea.sflag [#allocation6], 1
    %23 = vsyncpa %s22, 0
    %24 = vsyncpa [#allocation9], 0
    %25 = vsyncpa [#allocation12], 0
    %26 = vsyncpa [#allocation15], 0
    %27 = vsyncpa [#allocation18], 0
    %28 = vsyncpa [#allocation21], 0
    %29 = vsyncpa [#allocation7], 0
    %s30 = scalar_lea.sflag [#allocation7], 1
    %31 = vsyncpa %s30, 0
    %32 = vsyncpa [#allocation24], 0
    %s33 = scalar_lea.sflag [#allocation24], 1
    %34 = vsyncpa %s33, 0
    loop: start=0, step=1, limit=6
    $region2: #{tpu_custom_call.1} parent=1 // loop_pre_header
      _
    $region3: #{tpu_custom_call.1} parent=1 // loop_header
      %s36 = sphi 0, %s40
      %p37 = scmp.ge.s32.totalorder %s36, 6
      %s43 = sphi 0, %s55
      %s44 = sphi 0, %s51
      %s45 = sphi 0, %s43
      %s46 = sphi 0, %s44
      %s47 = sphi 0, %s45
      %s48 = sphi 0, %s46
      %s58 = sphi 0, %s60
      %s61 = sphi 0, %s58
      %s62 = sphi 0, %s61
      %s78 = sphi 0, %s62
      %s82 = sphi 0, %s82
      %s84 = sphi 0, %s82
      %s85 = sphi 0, %s84
      %s99 = sphi 0, %s85
      %s103 = sphi 0, %s103
      %s105 = sphi 0, %s103
      %s106 = sphi 0, %s105
      %s120 = sphi 0, %s106
      %s124 = sphi 0, %s124
      %s126 = sphi 0, %s124
      %s127 = sphi 0, %s126
      %s141 = sphi 0, %s127
      %s145 = sphi 0, %s145
      %s147 = sphi 0, %s145
      %s148 = sphi 0, %s147
      %s162 = sphi 0, %s148
      %s166 = sphi 0, %s166
      %s168 = sphi 0, %s166
      %s169 = sphi 0, %s168
      %s183 = sphi 0, %s169
      %s187 = sphi 0, %s187
      %s189 = sphi 0, %s187
      %s190 = sphi 0, %s189
      %s204 = sphi 0, %s190
      %s208 = sphi 0, %s208
      %s210 = sphi 0, %s208
      %s211 = sphi 0, %s210
      %s225 = sphi 0, %s211
      %s229 = sphi 0, %s229
      %s231 = sphi 0, %s229
      %s232 = sphi 0, %s231
      %s246 = sphi 0, %s232
      %s250 = sphi 0, %s250
      %s252 = sphi 0, %s250
      %s253 = sphi 0, %s252
      %s267 = sphi 0, %s253
      %s271 = sphi 0, %s271
      %s273 = sphi 0, %s271
      %s274 = sphi 0, %s273
      %s288 = sphi 0, %s274
      %s292 = sphi 0, %s292
      %s294 = sphi 0, %s292
      %s295 = sphi 0, %s294
      %s309 = sphi 0, %s295
      %s313 = sphi 0, %s313
      %s315 = sphi 0, %s313
      %s316 = sphi 0, %s315
      %s330 = sphi 0, %s316
      %s334 = sphi 0, %s334
      %s336 = sphi 0, %s334
      %s337 = sphi 0, %s336
      %s351 = sphi 0, %s337
      %s359 = sphi 0, %s361
      %s362 = sphi 0, %s359
      %s363 = sphi 0, %s362
      %s379 = sphi 0, %s363
      %s387 = sphi 0, %s389
      %s390 = sphi 0, %s387
      %s391 = sphi 0, %s390
      %s407 = sphi 0, %s391
    $region4: #{tpu_custom_call.1} parent=1 // loop_header_branch
      %39 = sbr.rel (%p37) target = $region8
    $region5: #{tpu_custom_call.1} parent=1 // loop_body
      %s41 = ssub.s32 %s36, 1
      %s42 = ssub.s32 %s36, 2
      %s49 = sadd.s32 1, %s44
      %p50 = scmp.ge.s32.totalorder %s49, 2
      %s51 = scalar_select %p50, 0, %s49
      %s52 = sadd.s32 1, %s43
      %s53 = scalar_select %p50, %s52, %s43
      %p54 = scmp.ge.s32.totalorder %s53, 2
      %s55 = scalar_select %p54, 0, %s53
      %s56 = ssub.s32 %s43, %s55
      %p57 = scmp.eq.s32.totalorder %s56, 0
      %s59 = sadd.s32 %s58, 1
      %s60 = scalar_select %p57, %s58, %s59
      %p63 = pneg %p57
      %p64 = scmp.eq.s32.totalorder %s36, 3
      %p65 = por %p63, %p64
      %p66 = scmp.ne.s32.totalorder %s58, %s61
      %p67 = scmp.eq.s32.totalorder %s36, 0
      %p68 = por %p66, %p67
      %p69 = scmp.ne.s32.totalorder %s58, %s61
      %p70 = scmp.eq.s32.totalorder %s41, 3
      %p71 = por %p69, %p70
      %p72 = scmp.ne.s32.totalorder %s61, %s62
      %p73 = scmp.eq.s32.totalorder %s41, 0
      %p74 = por %p72, %p73
      %p75 = scmp.ne.s32.totalorder %s61, %s62
      %p76 = scmp.eq.s32.totalorder %s42, 3
      %p77 = por %p75, %p76
      %p79 = scmp.ne.s32.totalorder %s62, %s78
      %p80 = scmp.eq.s32.totalorder %s42, 0
      %p81 = por %p79, %p80
      %s83 = sadd.s32 %s82, 1
      %p86 = scmp.eq.s32.totalorder %s36, 3
      %p87 = scmp.ne.s32.totalorder %s82, %s84
      %p88 = scmp.eq.s32.totalorder %s36, 0
      %p89 = por %p87, %p88
      %p90 = scmp.ne.s32.totalorder %s82, %s84
      %p91 = scmp.eq.s32.totalorder %s41, 3
      %p92 = por %p90, %p91
      %p93 = scmp.ne.s32.totalorder %s84, %s85
      %p94 = scmp.eq.s32.totalorder %s41, 0
      %p95 = por %p93, %p94
      %p96 = scmp.ne.s32.totalorder %s84, %s85
      %p97 = scmp.eq.s32.totalorder %s42, 3
      %p98 = por %p96, %p97
      %p100 = scmp.ne.s32.totalorder %s85, %s99
      %p101 = scmp.eq.s32.totalorder %s42, 0
      %p102 = por %p100, %p101
      %s104 = sadd.s32 %s103, 1
      %p107 = scmp.eq.s32.totalorder %s36, 3
      %p108 = scmp.ne.s32.totalorder %s103, %s105
      %p109 = scmp.eq.s32.totalorder %s36, 0
      %p110 = por %p108, %p109
      %p111 = scmp.ne.s32.totalorder %s103, %s105
      %p112 = scmp.eq.s32.totalorder %s41, 3
      %p113 = por %p111, %p112
      %p114 = scmp.ne.s32.totalorder %s105, %s106
      %p115 = scmp.eq.s32.totalorder %s41, 0
      %p116 = por %p114, %p115
      %p117 = scmp.ne.s32.totalorder %s105, %s106
      %p118 = scmp.eq.s32.totalorder %s42, 3
      %p119 = por %p117, %p118
      %p121 = scmp.ne.s32.totalorder %s106, %s120
      %p122 = scmp.eq.s32.totalorder %s42, 0
      %p123 = por %p121, %p122
      %s125 = sadd.s32 %s124, 1
      %p128 = scmp.eq.s32.totalorder %s36, 3
      %p129 = scmp.ne.s32.totalorder %s124, %s126
      %p130 = scmp.eq.s32.totalorder %s36, 0
      %p131 = por %p129, %p130
      %p132 = scmp.ne.s32.totalorder %s124, %s126
      %p133 = scmp.eq.s32.totalorder %s41, 3
      %p134 = por %p132, %p133
      %p135 = scmp.ne.s32.totalorder %s126, %s127
      %p136 = scmp.eq.s32.totalorder %s41, 0
      %p137 = por %p135, %p136
      %p138 = scmp.ne.s32.totalorder %s126, %s127
      %p139 = scmp.eq.s32.totalorder %s42, 3
      %p140 = por %p138, %p139
      %p142 = scmp.ne.s32.totalorder %s127, %s141
      %p143 = scmp.eq.s32.totalorder %s42, 0
      %p144 = por %p142, %p143
      %s146 = sadd.s32 %s145, 1
      %p149 = scmp.eq.s32.totalorder %s36, 3
      %p150 = scmp.ne.s32.totalorder %s145, %s147
      %p151 = scmp.eq.s32.totalorder %s36, 0
      %p152 = por %p150, %p151
      %p153 = scmp.ne.s32.totalorder %s145, %s147
      %p154 = scmp.eq.s32.totalorder %s41, 3
      %p155 = por %p153, %p154
      %p156 = scmp.ne.s32.totalorder %s147, %s148
      %p157 = scmp.eq.s32.totalorder %s41, 0
      %p158 = por %p156, %p157
      %p159 = scmp.ne.s32.totalorder %s147, %s148
      %p160 = scmp.eq.s32.totalorder %s42, 3
      %p161 = por %p159, %p160
      %p163 = scmp.ne.s32.totalorder %s148, %s162
      %p164 = scmp.eq.s32.totalorder %s42, 0
      %p165 = por %p163, %p164
      %s167 = sadd.s32 %s166, 1
      %p170 = scmp.eq.s32.totalorder %s36, 3
      %p171 = scmp.ne.s32.totalorder %s166, %s168
      %p172 = scmp.eq.s32.totalorder %s36, 0
      %p173 = por %p171, %p172
      %p174 = scmp.ne.s32.totalorder %s166, %s168
      %p175 = scmp.eq.s32.totalorder %s41, 3
      %p176 = por %p174, %p175
      %p177 = scmp.ne.s32.totalorder %s168, %s169
      %p178 = scmp.eq.s32.totalorder %s41, 0
      %p179 = por %p177, %p178
      %p180 = scmp.ne.s32.totalorder %s168, %s169
      %p181 = scmp.eq.s32.totalorder %s42, 3
      %p182 = por %p180, %p181
      %p184 = scmp.ne.s32.totalorder %s169, %s183
      %p185 = scmp.eq.s32.totalorder %s42, 0
      %p186 = por %p184, %p185
      %s188 = sadd.s32 %s187, 1
      %p191 = scmp.eq.s32.totalorder %s36, 3
      %p192 = scmp.ne.s32.totalorder %s187, %s189
      %p193 = scmp.eq.s32.totalorder %s36, 0
      %p194 = por %p192, %p193
      %p195 = scmp.ne.s32.totalorder %s187, %s189
      %p196 = scmp.eq.s32.totalorder %s41, 3
      %p197 = por %p195, %p196
      %p198 = scmp.ne.s32.totalorder %s189, %s190
      %p199 = scmp.eq.s32.totalorder %s41, 0
      %p200 = por %p198, %p199
      %p201 = scmp.ne.s32.totalorder %s189, %s190
      %p202 = scmp.eq.s32.totalorder %s42, 3
      %p203 = por %p201, %p202
      %p205 = scmp.ne.s32.totalorder %s190, %s204
      %p206 = scmp.eq.s32.totalorder %s42, 0
      %p207 = por %p205, %p206
      %s209 = sadd.s32 %s208, 1
      %p212 = scmp.eq.s32.totalorder %s36, 3
      %p213 = scmp.ne.s32.totalorder %s208, %s210
      %p214 = scmp.eq.s32.totalorder %s36, 0
      %p215 = por %p213, %p214
      %p216 = scmp.ne.s32.totalorder %s208, %s210
      %p217 = scmp.eq.s32.totalorder %s41, 3
      %p218 = por %p216, %p217
      %p219 = scmp.ne.s32.totalorder %s210, %s211
      %p220 = scmp.eq.s32.totalorder %s41, 0
      %p221 = por %p219, %p220
      %p222 = scmp.ne.s32.totalorder %s210, %s211
      %p223 = scmp.eq.s32.totalorder %s42, 3
      %p224 = por %p222, %p223
      %p226 = scmp.ne.s32.totalorder %s211, %s225
      %p227 = scmp.eq.s32.totalorder %s42, 0
      %p228 = por %p226, %p227
      %s230 = sadd.s32 %s229, 1
      %p233 = scmp.eq.s32.totalorder %s36, 3
      %p234 = scmp.ne.s32.totalorder %s229, %s231
      %p235 = scmp.eq.s32.totalorder %s36, 0
      %p236 = por %p234, %p235
      %p237 = scmp.ne.s32.totalorder %s229, %s231
      %p238 = scmp.eq.s32.totalorder %s41, 3
      %p239 = por %p237, %p238
      %p240 = scmp.ne.s32.totalorder %s231, %s232
      %p241 = scmp.eq.s32.totalorder %s41, 0
      %p242 = por %p240, %p241
      %p243 = scmp.ne.s32.totalorder %s231, %s232
      %p244 = scmp.eq.s32.totalorder %s42, 3
      %p245 = por %p243, %p244
      %p247 = scmp.ne.s32.totalorder %s232, %s246
      %p248 = scmp.eq.s32.totalorder %s42, 0
      %p249 = por %p247, %p248
      %s251 = sadd.s32 %s250, 1
      %p254 = scmp.eq.s32.totalorder %s36, 3
      %p255 = scmp.ne.s32.totalorder %s250, %s252
      %p256 = scmp.eq.s32.totalorder %s36, 0
      %p257 = por %p255, %p256
      %p258 = scmp.ne.s32.totalorder %s250, %s252
      %p259 = scmp.eq.s32.totalorder %s41, 3
      %p260 = por %p258, %p259
      %p261 = scmp.ne.s32.totalorder %s252, %s253
      %p262 = scmp.eq.s32.totalorder %s41, 0
      %p263 = por %p261, %p262
      %p264 = scmp.ne.s32.totalorder %s252, %s253
      %p265 = scmp.eq.s32.totalorder %s42, 3
      %p266 = por %p264, %p265
      %p268 = scmp.ne.s32.totalorder %s253, %s267
      %p269 = scmp.eq.s32.totalorder %s42, 0
      %p270 = por %p268, %p269
      %s272 = sadd.s32 %s271, 1
      %p275 = scmp.eq.s32.totalorder %s36, 3
      %p276 = scmp.ne.s32.totalorder %s271, %s273
      %p277 = scmp.eq.s32.totalorder %s36, 0
      %p278 = por %p276, %p277
      %p279 = scmp.ne.s32.totalorder %s271, %s273
      %p280 = scmp.eq.s32.totalorder %s41, 3
      %p281 = por %p279, %p280
      %p282 = scmp.ne.s32.totalorder %s273, %s274
      %p283 = scmp.eq.s32.totalorder %s41, 0
      %p284 = por %p282, %p283
      %p285 = scmp.ne.s32.totalorder %s273, %s274
      %p286 = scmp.eq.s32.totalorder %s42, 3
      %p287 = por %p285, %p286
      %p289 = scmp.ne.s32.totalorder %s274, %s288
      %p290 = scmp.eq.s32.totalorder %s42, 0
      %p291 = por %p289, %p290
      %s293 = sadd.s32 %s292, 1
      %p296 = scmp.eq.s32.totalorder %s36, 3
      %p297 = scmp.ne.s32.totalorder %s292, %s294
      %p298 = scmp.eq.s32.totalorder %s36, 0
      %p299 = por %p297, %p298
      %p300 = scmp.ne.s32.totalorder %s292, %s294
      %p301 = scmp.eq.s32.totalorder %s41, 3
      %p302 = por %p300, %p301
      %p303 = scmp.ne.s32.totalorder %s294, %s295
      %p304 = scmp.eq.s32.totalorder %s41, 0
      %p305 = por %p303, %p304
      %p306 = scmp.ne.s32.totalorder %s294, %s295
      %p307 = scmp.eq.s32.totalorder %s42, 3
      %p308 = por %p306, %p307
      %p310 = scmp.ne.s32.totalorder %s295, %s309
      %p311 = scmp.eq.s32.totalorder %s42, 0
      %p312 = por %p310, %p311
      %s314 = sadd.s32 %s313, 1
      %p317 = scmp.eq.s32.totalorder %s36, 3
      %p318 = scmp.ne.s32.totalorder %s313, %s315
      %p319 = scmp.eq.s32.totalorder %s36, 0
      %p320 = por %p318, %p319
      %p321 = scmp.ne.s32.totalorder %s313, %s315
      %p322 = scmp.eq.s32.totalorder %s41, 3
      %p323 = por %p321, %p322
      %p324 = scmp.ne.s32.totalorder %s315, %s316
      %p325 = scmp.eq.s32.totalorder %s41, 0
      %p326 = por %p324, %p325
      %p327 = scmp.ne.s32.totalorder %s315, %s316
      %p328 = scmp.eq.s32.totalorder %s42, 3
      %p329 = por %p327, %p328
      %p331 = scmp.ne.s32.totalorder %s316, %s330
      %p332 = scmp.eq.s32.totalorder %s42, 0
      %p333 = por %p331, %p332
      %s335 = sadd.s32 %s334, 1
      %p338 = scmp.eq.s32.totalorder %s36, 3
      %p339 = scmp.ne.s32.totalorder %s334, %s336
      %p340 = scmp.eq.s32.totalorder %s36, 0
      %p341 = por %p339, %p340
      %p342 = scmp.ne.s32.totalorder %s334, %s336
      %p343 = scmp.eq.s32.totalorder %s41, 3
      %p344 = por %p342, %p343
      %p345 = scmp.ne.s32.totalorder %s336, %s337
      %p346 = scmp.eq.s32.totalorder %s41, 0
      %p347 = por %p345, %p346
      %p348 = scmp.ne.s32.totalorder %s336, %s337
      %p349 = scmp.eq.s32.totalorder %s42, 3
      %p350 = por %p348, %p349
      %p352 = scmp.ne.s32.totalorder %s337, %s351
      %p353 = scmp.eq.s32.totalorder %s42, 0
      %p354 = por %p352, %p353
      %s355 = ssub.s32 %s43, %s55
      %s356 = ssub.s32 %s44, %s51
      %s357 = sor.u32 %s355, %s356
      %p358 = scmp.eq.s32.totalorder %s357, 0
      %s360 = sadd.s32 %s359, 1
      %s361 = scalar_select %p358, %s359, %s360
      %p364 = pneg %p358
      %p365 = scmp.eq.s32.totalorder %s36, 3
      %p366 = por %p364, %p365
      %p367 = scmp.ne.s32.totalorder %s359, %s362
      %p368 = scmp.eq.s32.totalorder %s36, 0
      %p369 = por %p367, %p368
      %p370 = scmp.ne.s32.totalorder %s359, %s362
      %p371 = scmp.eq.s32.totalorder %s41, 3
      %p372 = por %p370, %p371
      %p373 = scmp.ne.s32.totalorder %s362, %s363
      %p374 = scmp.eq.s32.totalorder %s41, 0
      %p375 = por %p373, %p374
      %p376 = scmp.ne.s32.totalorder %s362, %s363
      %p377 = scmp.eq.s32.totalorder %s42, 3
      %p378 = por %p376, %p377
      %p380 = scmp.ne.s32.totalorder %s363, %s379
      %p381 = scmp.eq.s32.totalorder %s42, 0
      %p382 = por %p380, %p381
      %s383 = ssub.s32 %s43, %s55
      %s384 = ssub.s32 %s44, %s51
      %s385 = sor.u32 %s383, %s384
      %p386 = scmp.eq.s32.totalorder %s385, 0
      %s388 = sadd.s32 %s387, 1
      %s389 = scalar_select %p386, %s387, %s388
      %p392 = pneg %p386
      %p393 = scmp.eq.s32.totalorder %s36, 3
      %p394 = por %p392, %p393
      %p395 = scmp.ne.s32.totalorder %s387, %s390
      %p396 = scmp.eq.s32.totalorder %s36, 0
      %p397 = por %p395, %p396
      %p398 = scmp.ne.s32.totalorder %s387, %s390
      %p399 = scmp.eq.s32.totalorder %s41, 3
      %p400 = por %p398, %p399
      %p401 = scmp.ne.s32.totalorder %s390, %s391
      %p402 = scmp.eq.s32.totalorder %s41, 0
      %p403 = por %p401, %p402
      %p404 = scmp.ne.s32.totalorder %s390, %s391
      %p405 = scmp.eq.s32.totalorder %s42, 3
      %p406 = por %p404, %p405
      %p408 = scmp.ne.s32.totalorder %s391, %s407
      %p409 = scmp.eq.s32.totalorder %s42, 0
      %p410 = por %p408, %p409
      %p411 = scmp.le.s32.totalorder 1, %s36
      %p412 = scmp.lt.s32.totalorder %s36, 5
      %p413 = pnand %p411, %p412
      %p414 = pneg %p413
      // Predicated region
      $region9: #{tpu_custom_call.1} parent=5 // pred_check
        _
      $region10: #{tpu_custom_call.1} parent=5 // pred_check_branch
        %416 = sbr.rel (%p413) target = $region12
      $region11: #{tpu_custom_call.1} parent=5 // pred_region
        %s417 = ssub.s32 %s36, 1
        // Predicated region
        $region13: #{tpu_custom_call.1} parent=11 // pred_check
          %p418 = pneg %p95
        $region14: #{tpu_custom_call.1} parent=11 // pred_check_branch
          %420 = sbr.rel (%p418) target = $region16
        $region15: #{tpu_custom_call.1} parent=11 // pred_region
          %422 = vsyncadd [#allocation9], 0
          %s423 = sshll.u32 %s1, 4
          %s424 = int_to_ptr.hbm [resolvable:$true] %s423
          %s425 = sshll.u32 [#allocation8], 4
          %s426 = int_to_ptr.vmem [resolvable:$true] %s425
          %431 = dma.hbm_to_vmem [thread:$0]  %s424, 4096, %s426, [#allocation9], 128, 128, 8
        $region16: #{tpu_custom_call.1} parent=11 // pred_fallthru
          _
        // Predicated region
        $region17: #{tpu_custom_call.1} parent=11 // pred_check
          %p432 = pneg %p116
        $region18: #{tpu_custom_call.1} parent=11 // pred_check_branch
          %434 = sbr.rel (%p432) target = $region20
        $region19: #{tpu_custom_call.1} parent=11 // pred_region
          %436 = vsyncadd [#allocation9], 0
          %s438 = sshll.u32 %s2, 4
          %s439 = int_to_ptr.hbm [resolvable:$true] %s438
          %s440 = sshll.u32 [#allocation10], 4
          %s441 = int_to_ptr.vmem [resolvable:$true] %s440
          %443 = dma.hbm_to_vmem [thread:$0]  %s439, 16, %s441, [#allocation9]
        $region20: #{tpu_custom_call.1} parent=11 // pred_fallthru
          _
        // Predicated region
        $region21: #{tpu_custom_call.1} parent=11 // pred_check
          %p444 = pneg %p137
        $region22: #{tpu_custom_call.1} parent=11 // pred_check_branch
          %446 = sbr.rel (%p444) target = $region24
        $region23: #{tpu_custom_call.1} parent=11 // pred_region
          %448 = vsyncadd [#allocation12], 0
          %s450 = sshll.u32 %s3, 4
          %s451 = int_to_ptr.hbm [resolvable:$true] %s450
          %s452 = sshll.u32 [#allocation11], 4
          %s453 = int_to_ptr.vmem [resolvable:$true] %s452
          %455 = dma.hbm_to_vmem [thread:$0]  %s451, 16, %s453, [#allocation12]
        $region24: #{tpu_custom_call.1} parent=11 // pred_fallthru
          _
        // Predicated region
        $region25: #{tpu_custom_call.1} parent=11 // pred_check
          %p456 = pneg %p158
        $region26: #{tpu_custom_call.1} parent=11 // pred_check_branch
          %458 = sbr.rel (%p456) target = $region28
        $region27: #{tpu_custom_call.1} parent=11 // pred_region
          %460 = vsyncadd [#allocation12], 0
          %s461 = sshll.u32 %s4, 4
          %s462 = int_to_ptr.hbm [resolvable:$true] %s461
          %s463 = sshll.u32 [#allocation13], 4
          %s464 = int_to_ptr.vmem [resolvable:$true] %s463
          %469 = dma.hbm_to_vmem [thread:$0]  %s462, 3072, %s464, [#allocation12], 192, 192, 12
        $region28: #{tpu_custom_call.1} parent=11 // pred_fallthru
          _
        // Predicated region
        $region29: #{tpu_custom_call.1} parent=11 // pred_check
          %p470 = pneg %p179
        $region30: #{tpu_custom_call.1} parent=11 // pred_check_branch
          %472 = sbr.rel (%p470) target = $region32
        $region31: #{tpu_custom_call.1} parent=11 // pred_region
          _
        $region32: #{tpu_custom_call.1} parent=11 // pred_fallthru
          _
        // Predicated region
        $region33: #{tpu_custom_call.1} parent=11 // pred_check
          %p473 = pneg %p200
        $region34: #{tpu_custom_call.1} parent=11 // pred_check_branch
          %475 = sbr.rel (%p473) target = $region36
        $region35: #{tpu_custom_call.1} parent=11 // pred_region
          %477 = vsyncadd [#allocation15], 0
          %s478 = sshll.u32 %s6, 4
          %s479 = int_to_ptr.hbm [resolvable:$true] %s478
          %s480 = sshll.u32 [#allocation14], 4
          %s481 = int_to_ptr.vmem [resolvable:$true] %s480
          %486 = dma.hbm_to_vmem [thread:$0]  %s479, 1024, %s481, [#allocation15], 64, 64, 4
        $region36: #{tpu_custom_call.1} parent=11 // pred_fallthru
          _
        // Predicated region
        $region37: #{tpu_custom_call.1} parent=11 // pred_check
          %p487 = pneg %p221
        $region38: #{tpu_custom_call.1} parent=11 // pred_check_branch
          %489 = sbr.rel (%p487) target = $region40
        $region39: #{tpu_custom_call.1} parent=11 // pred_region
          %491 = vsyncadd [#allocation15], 0
          %s493 = sshll.u32 %s7, 4
          %s494 = int_to_ptr.hbm [resolvable:$true] %s493
          %s495 = sshll.u32 [#allocation16], 4
          %s496 = int_to_ptr.vmem [resolvable:$true] %s495
          %498 = dma.hbm_to_vmem [thread:$0]  %s494, 16, %s496, [#allocation15]
        $region40: #{tpu_custom_call.1} parent=11 // pred_fallthru
          _
        // Predicated region
        $region41: #{tpu_custom_call.1} parent=11 // pred_check
          %p499 = pneg %p242
        $region42: #{tpu_custom_call.1} parent=11 // pred_check_branch
          %501 = sbr.rel (%p499) target = $region44
        $region43: #{tpu_custom_call.1} parent=11 // pred_region
          %503 = vsyncadd [#allocation18], 0
          %s505 = sshll.u32 %s8, 4
          %s506 = int_to_ptr.hbm [resolvable:$true] %s505
          %s507 = sshll.u32 [#allocation17], 4
          %s508 = int_to_ptr.vmem [resolvable:$true] %s507
          %510 = dma.hbm_to_vmem [thread:$0]  %s506, 16, %s508, [#allocation18]
        $region44: #{tpu_custom_call.1} parent=11 // pred_fallthru
          _
        // Predicated region
        $region45: #{tpu_custom_call.1} parent=11 // pred_check
          %p511 = pneg %p263
        $region46: #{tpu_custom_call.1} parent=11 // pred_check_branch
          %513 = sbr.rel (%p511) target = $region48
        $region47: #{tpu_custom_call.1} parent=11 // pred_region
          _
        $region48: #{tpu_custom_call.1} parent=11 // pred_fallthru
          _
        // Predicated region
        $region49: #{tpu_custom_call.1} parent=11 // pred_check
          %p514 = pneg %p284
        $region50: #{tpu_custom_call.1} parent=11 // pred_check_branch
          %516 = sbr.rel (%p514) target = $region52
        $region51: #{tpu_custom_call.1} parent=11 // pred_region
          %518 = vsyncadd [#allocation18], 0
          %s519 = sshll.u32 %s10, 4
          %s520 = int_to_ptr.hbm [resolvable:$true] %s519
          %s521 = sshll.u32 [#allocation19], 4
          %s522 = int_to_ptr.vmem [resolvable:$true] %s521
          %527 = dma.hbm_to_vmem [thread:$0]  %s520, 4096, %s522, [#allocation18], 256, 256, 16
        $region52: #{tpu_custom_call.1} parent=11 // pred_fallthru
          _
        // Predicated region
        $region53: #{tpu_custom_call.1} parent=11 // pred_check
          %p528 = pneg %p305
        $region54: #{tpu_custom_call.1} parent=11 // pred_check_branch
          %530 = sbr.rel (%p528) target = $region56
        $region55: #{tpu_custom_call.1} parent=11 // pred_region
          _
        $region56: #{tpu_custom_call.1} parent=11 // pred_fallthru
          _
        // Predicated region
        $region57: #{tpu_custom_call.1} parent=11 // pred_check
          %p531 = pneg %p326
        $region58: #{tpu_custom_call.1} parent=11 // pred_check_branch
          %533 = sbr.rel (%p531) target = $region60
        $region59: #{tpu_custom_call.1} parent=11 // pred_region
          %535 = vsyncadd [#allocation21], 0
          %s536 = sshll.u32 %s12, 4
          %s537 = int_to_ptr.hbm [resolvable:$true] %s536
          %s538 = sshll.u32 [#allocation20], 4
          %s539 = int_to_ptr.vmem [resolvable:$true] %s538
          %544 = dma.hbm_to_vmem [thread:$0]  %s537, 4096, %s539, [#allocation21], 64, 64, 4
        $region60: #{tpu_custom_call.1} parent=11 // pred_fallthru
          _
        // Predicated region
        $region61: #{tpu_custom_call.1} parent=11 // pred_check
          %p545 = pneg %p347
        $region62: #{tpu_custom_call.1} parent=11 // pred_check_branch
          %547 = sbr.rel (%p545) target = $region64
        $region63: #{tpu_custom_call.1} parent=11 // pred_region
          _
        $region64: #{tpu_custom_call.1} parent=11 // pred_fallthru
          _
      $region12: #{tpu_custom_call.1} parent=5 // pred_fallthru
        _
      %p548 = scmp.lt.s32.totalorder %s36, 4
      // Predicated region
      $region65: #{tpu_custom_call.1} parent=5 // pred_check
        %p549 = pneg %p548
      $region66: #{tpu_custom_call.1} parent=5 // pred_check_branch
        %551 = sbr.rel (%p549) target = $region68
      $region67: #{tpu_custom_call.1} parent=5 // pred_region
        // Predicated region
        $region69: #{tpu_custom_call.1} parent=67 // pred_check
          %p552 = pneg %p68
        $region70: #{tpu_custom_call.1} parent=67 // pred_check_branch
          %554 = sbr.rel (%p552) target = $region72
        $region71: #{tpu_custom_call.1} parent=67 // pred_region
          %s555 = sand.u32 %s58, 1
          %s556 = scalar_lea.sflag [#allocation6], %s555
          %s557 = sand.u32 %s58, 1
          %s558 = smul.addr %s557, 256
          %s559 = scalar_lea.vmem [#allocation5], %s558
          %561 = vsyncadd %s556, 0
          %s562 = smul.addr %s43, 32
          %s563 = smul.addr %s562, 8
          %s564 = scalar_lea.hbm %s0, %s563
          %s565 = sshll.u32 %s564, 4
          %s566 = int_to_ptr.hbm [resolvable:$true] %s565
          %s567 = sshll.u32 %s559, 4
          %s568 = int_to_ptr.vmem [resolvable:$true] %s567
          %573 = dma.hbm_to_vmem [thread:$0]  %s566, 4096, %s568, %s556, 128, 128, 8
        $region72: #{tpu_custom_call.1} parent=67 // pred_fallthru
          _
      $region68: #{tpu_custom_call.1} parent=5 // pred_fallthru
        _
      %p574 = scmp.le.s32.totalorder 1, %s36
      %p575 = scmp.lt.s32.totalorder %s36, 5
      %p576 = pnand %p574, %p575
      %p577 = pneg %p576
      // Predicated region
      $region73: #{tpu_custom_call.1} parent=5 // pred_check
        _
      $region74: #{tpu_custom_call.1} parent=5 // pred_check_branch
        %579 = sbr.rel (%p576) target = $region76
      $region75: #{tpu_custom_call.1} parent=5 // pred_region
        %s580 = ssub.s32 %s36, 1
        %s581 = sand.u32 %s61, 1
        %s582 = scalar_lea.sflag [#allocation6], %s581
        %s583 = sand.u32 %s61, 1
        %s584 = smul.addr %s583, 256
        %s585 = scalar_lea.vmem [#allocation5], %s584
        // Predicated region
        $region77: #{tpu_custom_call.1} parent=75 // pred_check
          %p586 = pneg %p74
        $region78: #{tpu_custom_call.1} parent=75 // pred_check_branch
          %588 = sbr.rel (%p586) target = $region80
        $region79: #{tpu_custom_call.1} parent=75 // pred_region
          %590 = dma.done %s582, 4096
        $region80: #{tpu_custom_call.1} parent=75 // pred_fallthru
          _
        // Predicated region
        $region81: #{tpu_custom_call.1} parent=75 // pred_check
          %p591 = pneg %p95
        $region82: #{tpu_custom_call.1} parent=75 // pred_check_branch
          %593 = sbr.rel (%p591) target = $region84
        $region83: #{tpu_custom_call.1} parent=75 // pred_region
          %595 = dma.done [#allocation9], 4096
        $region84: #{tpu_custom_call.1} parent=75 // pred_fallthru
          _
        // Predicated region
        $region85: #{tpu_custom_call.1} parent=75 // pred_check
          %p596 = pneg %p116
        $region86: #{tpu_custom_call.1} parent=75 // pred_check_branch
          %598 = sbr.rel (%p596) target = $region88
        $region87: #{tpu_custom_call.1} parent=75 // pred_region
          %600 = dma.done [#allocation9], 16
        $region88: #{tpu_custom_call.1} parent=75 // pred_fallthru
          _
        // Predicated region
        $region89: #{tpu_custom_call.1} parent=75 // pred_check
          %p601 = pneg %p137
        $region90: #{tpu_custom_call.1} parent=75 // pred_check_branch
          %603 = sbr.rel (%p601) target = $region92
        $region91: #{tpu_custom_call.1} parent=75 // pred_region
          %605 = dma.done [#allocation12], 16
        $region92: #{tpu_custom_call.1} parent=75 // pred_fallthru
          _
        // Predicated region
        $region93: #{tpu_custom_call.1} parent=75 // pred_check
          %p606 = pneg %p158
        $region94: #{tpu_custom_call.1} parent=75 // pred_check_branch
          %608 = sbr.rel (%p606) target = $region96
        $region95: #{tpu_custom_call.1} parent=75 // pred_region
          %610 = dma.done [#allocation12], 3072
        $region96: #{tpu_custom_call.1} parent=75 // pred_fallthru
          _
        // Predicated region
        $region97: #{tpu_custom_call.1} parent=75 // pred_check
          %p611 = pneg %p200
        $region98: #{tpu_custom_call.1} parent=75 // pred_check_branch
          %613 = sbr.rel (%p611) target = $region100
        $region99: #{tpu_custom_call.1} parent=75 // pred_region
          %615 = dma.done [#allocation15], 1024
        $region100: #{tpu_custom_call.1} parent=75 // pred_fallthru
          _
        // Predicated region
        $region101: #{tpu_custom_call.1} parent=75 // pred_check
          %p616 = pneg %p221
        $region102: #{tpu_custom_call.1} parent=75 // pred_check_branch
          %618 = sbr.rel (%p616) target = $region104
        $region103: #{tpu_custom_call.1} parent=75 // pred_region
          %620 = dma.done [#allocation15], 16
        $region104: #{tpu_custom_call.1} parent=75 // pred_fallthru
          _
        // Predicated region
        $region105: #{tpu_custom_call.1} parent=75 // pred_check
          %p621 = pneg %p242
        $region106: #{tpu_custom_call.1} parent=75 // pred_check_branch
          %623 = sbr.rel (%p621) target = $region108
        $region107: #{tpu_custom_call.1} parent=75 // pred_region
          %625 = dma.done [#allocation18], 16
        $region108: #{tpu_custom_call.1} parent=75 // pred_fallthru
          _
        // Predicated region
        $region109: #{tpu_custom_call.1} parent=75 // pred_check
          %p626 = pneg %p284
        $region110: #{tpu_custom_call.1} parent=75 // pred_check_branch
          %628 = sbr.rel (%p626) target = $region112
        $region111: #{tpu_custom_call.1} parent=75 // pred_region
          %630 = dma.done [#allocation18], 4096
        $region112: #{tpu_custom_call.1} parent=75 // pred_fallthru
          _
        // Predicated region
        $region113: #{tpu_custom_call.1} parent=75 // pred_check
          %p631 = pneg %p326
        $region114: #{tpu_custom_call.1} parent=75 // pred_check_branch
          %633 = sbr.rel (%p631) target = $region116
        $region115: #{tpu_custom_call.1} parent=75 // pred_region
          %635 = dma.done [#allocation21], 4096
        $region116: #{tpu_custom_call.1} parent=75 // pred_fallthru
          _
        %s636 = sand.u32 %s61, 1
        %s637 = scalar_lea.sflag [#allocation6], %s636
        %s638 = sand.u32 %s61, 1
        %s639 = smul.addr %s638, 256
        %s640 = scalar_lea.vmem [#allocation5], %s639
        %p641 = pneg %p74
        %p642 = pneg %p71
        %p643 = pneg %p95
        %p644 = pneg %p92
        %p645 = pneg %p116
        %p646 = pneg %p113
        %p647 = pneg %p137
        %p648 = pneg %p134
        %p649 = pneg %p158
        %p650 = pneg %p155
        %p651 = pneg %p179
        %p652 = pneg %p176
        %p653 = pneg %p200
        %p654 = pneg %p197
        %p655 = pneg %p221
        %p656 = pneg %p218
        %p657 = pneg %p242
        %p658 = pneg %p239
        %p659 = pneg %p263
        %p660 = pneg %p260
        %p661 = pneg %p284
        %p662 = pneg %p281
        %p663 = pneg %p305
        %p664 = pneg %p302
        %p665 = pneg %p326
        %p666 = pneg %p323
        %p667 = pneg %p347
        %p668 = pneg %p344
        %p669 = pneg %p375
        %p670 = pneg %p372
        %s671 = sand.u32 %s362, 1
        %s672 = scalar_lea.sflag [#allocation7], %s671
        %s673 = sand.u32 %s362, 1
        %s674 = smul.addr %s673, 128
        %s675 = scalar_lea.vmem [#allocation22], %s674
        %p676 = pneg %p403
        %p677 = pneg %p400
        %s678 = sand.u32 %s390, 1
        %s679 = scalar_lea.sflag [#allocation24], %s678
        %s680 = sand.u32 %s390, 1
        %s681 = smul.addr %s680, 256
        %s682 = scalar_lea.vmem [#allocation23], %s681
        %s683 = smul.u32 16, %s46
        %s684 = smul.u32 16, %s46
        %p685 = scmp.eq.s32.totalorder %s46, 0
        // Predicated region
        $region117: #{tpu_custom_call.1} parent=75 // pred_check
          %p686 = pneg %p685
        $region118: #{tpu_custom_call.1} parent=75 // pred_check_branch
          %688 = sbr.rel (%p686) target = $region120
        $region119: #{tpu_custom_call.1} parent=75 // pred_region
          %v689 = vld [vmem:[%s585] sm:$0xff]
          %v690 = vld [vmem:[%s585 + $0x8] sm:$0xff]
          %v691 = vld [vmem:[%s585 + $0x10] sm:$0xff]
          %v692 = vld [vmem:[%s585 + $0x18] sm:$0xff]
          %v693 = vld [vmem:[%s585 + $0x20] sm:$0xff]
          %v694 = vld [vmem:[%s585 + $0x28] sm:$0xff]
          %v695 = vld [vmem:[%s585 + $0x30] sm:$0xff]
          %v696 = vld [vmem:[%s585 + $0x38] sm:$0xff]
          %v697 = vld [vmem:[%s585 + $0x40] sm:$0xff]
          %v698 = vld [vmem:[%s585 + $0x48] sm:$0xff]
          %v699 = vld [vmem:[%s585 + $0x50] sm:$0xff]
          %v700 = vld [vmem:[%s585 + $0x58] sm:$0xff]
          %v701 = vld [vmem:[%s585 + $0x60] sm:$0xff]
          %v702 = vld [vmem:[%s585 + $0x68] sm:$0xff]
          %v703 = vld [vmem:[%s585 + $0x70] sm:$0xff]
          %v704 = vld [vmem:[%s585 + $0x78] sm:$0xff]
          %v705 = vld [vmem:[%s585 + $0x80] sm:$0xff]
          %v706 = vld [vmem:[%s585 + $0x88] sm:$0xff]
          %v707 = vld [vmem:[%s585 + $0x90] sm:$0xff]
          %v708 = vld [vmem:[%s585 + $0x98] sm:$0xff]
          %v709 = vld [vmem:[%s585 + $0xa0] sm:$0xff]
          %v710 = vld [vmem:[%s585 + $0xa8] sm:$0xff]
          %v711 = vld [vmem:[%s585 + $0xb0] sm:$0xff]
          %v712 = vld [vmem:[%s585 + $0xb8] sm:$0xff]
          %v713 = vld [vmem:[%s585 + $0xc0] sm:$0xff]
          %v714 = vld [vmem:[%s585 + $0xc8] sm:$0xff]
          %v715 = vld [vmem:[%s585 + $0xd0] sm:$0xff]
          %v716 = vld [vmem:[%s585 + $0xd8] sm:$0xff]
          %v717 = vld [vmem:[%s585 + $0xe0] sm:$0xff]
          %v718 = vld [vmem:[%s585 + $0xe8] sm:$0xff]
          %v719 = vld [vmem:[%s585 + $0xf0] sm:$0xff]
          %v720 = vld [vmem:[%s585 + $0xf8] sm:$0xff]
          %v721 = vld [vmem:[#allocation8] sm:$0xff]
          %v722 = vld [vmem:[#allocation8 + $0x8] sm:$0xff]
          %v723 = vld [vmem:[#allocation8 + $0x10] sm:$0xff]
          %v724 = vld [vmem:[#allocation8 + $0x18] sm:$0xff]
          %v725 = vld [vmem:[#allocation8 + $0x20] sm:$0xff]
          %v726 = vld [vmem:[#allocation8 + $0x28] sm:$0xff]
          %v727 = vld [vmem:[#allocation8 + $0x30] sm:$0xff]
          %v728 = vld [vmem:[#allocation8 + $0x38] sm:$0xff]
          %v729 = vld [vmem:[#allocation8 + $0x40] sm:$0xff]
          %v730 = vld [vmem:[#allocation8 + $0x48] sm:$0xff]
          %v731 = vld [vmem:[#allocation8 + $0x50] sm:$0xff]
          %v732 = vld [vmem:[#allocation8 + $0x58] sm:$0xff]
          %v733 = vld [vmem:[#allocation8 + $0x60] sm:$0xff]
          %v734 = vld [vmem:[#allocation8 + $0x68] sm:$0xff]
          %v735 = vld [vmem:[#allocation8 + $0x70] sm:$0xff]
          %v736 = vld [vmem:[#allocation8 + $0x78] sm:$0xff]
          %v737 = vld [vmem:[#allocation8 + $0x80] sm:$0xff]
          %v738 = vld [vmem:[#allocation8 + $0x88] sm:$0xff]
          %v739 = vld [vmem:[#allocation8 + $0x90] sm:$0xff]
          %v740 = vld [vmem:[#allocation8 + $0x98] sm:$0xff]
          %v741 = vld [vmem:[#allocation8 + $0xa0] sm:$0xff]
          %v742 = vld [vmem:[#allocation8 + $0xa8] sm:$0xff]
          %v743 = vld [vmem:[#allocation8 + $0xb0] sm:$0xff]
          %v744 = vld [vmem:[#allocation8 + $0xb8] sm:$0xff]
          %v745 = vld [vmem:[#allocation8 + $0xc0] sm:$0xff]
          %v746 = vld [vmem:[#allocation8 + $0xc8] sm:$0xff]
          %v747 = vld [vmem:[#allocation8 + $0xd0] sm:$0xff]
          %v748 = vld [vmem:[#allocation8 + $0xd8] sm:$0xff]
          %v749 = vld [vmem:[#allocation8 + $0xe0] sm:$0xff]
          %v750 = vld [vmem:[#allocation8 + $0xe8] sm:$0xff]
          %v751 = vld [vmem:[#allocation8 + $0xf0] sm:$0xff]
          %v752 = vld [vmem:[#allocation8 + $0xf8] sm:$0xff]
          %v753 = vadd.f32 %v689, %v721
          %v754 = vadd.f32 %v690, %v722
          %v755 = vadd.f32 %v691, %v723
          %v756 = vadd.f32 %v692, %v724
          %v757 = vadd.f32 %v693, %v725
          %v758 = vadd.f32 %v694, %v726
          %v759 = vadd.f32 %v695, %v727
          %v760 = vadd.f32 %v696, %v728
          %v761 = vadd.f32 %v697, %v729
          %v762 = vadd.f32 %v698, %v730
          %v763 = vadd.f32 %v699, %v731
          %v764 = vadd.f32 %v700, %v732
          %v765 = vadd.f32 %v701, %v733
          %v766 = vadd.f32 %v702, %v734
          %v767 = vadd.f32 %v703, %v735
          %v768 = vadd.f32 %v704, %v736
          %v769 = vadd.f32 %v705, %v737
          %v770 = vadd.f32 %v706, %v738
          %v771 = vadd.f32 %v707, %v739
          %v772 = vadd.f32 %v708, %v740
          %v773 = vadd.f32 %v709, %v741
          %v774 = vadd.f32 %v710, %v742
          %v775 = vadd.f32 %v711, %v743
          %v776 = vadd.f32 %v712, %v744
          %v777 = vadd.f32 %v713, %v745
          %v778 = vadd.f32 %v714, %v746
          %v779 = vadd.f32 %v715, %v747
          %v780 = vadd.f32 %v716, %v748
          %v781 = vadd.f32 %v717, %v749
          %v782 = vadd.f32 %v718, %v750
          %v783 = vadd.f32 %v719, %v751
          %v784 = vadd.f32 %v720, %v752
          %v785 = vld [vmem:[#allocation10] sm:$0x1]
          %v786 = vld [vmem:[#allocation11] sm:$0x1]
          %787 = vadd.xlane.f32.xlu0 %v753
          %v788 = vpop.xlane.xlu0 %787
          %789 = vadd.xlane.f32.xlu0 %v754
          %v790 = vpop.xlane.xlu0 %789
          %791 = vadd.xlane.f32.xlu0 %v755
          %v792 = vpop.xlane.xlu0 %791
          %793 = vadd.xlane.f32.xlu0 %v756
          %v794 = vpop.xlane.xlu0 %793
          %795 = vadd.xlane.f32.xlu0 %v757
          %v796 = vpop.xlane.xlu0 %795
          %797 = vadd.xlane.f32.xlu0 %v758
          %v798 = vpop.xlane.xlu0 %797
          %799 = vadd.xlane.f32.xlu0 %v759
          %v800 = vpop.xlane.xlu0 %799
          %801 = vadd.xlane.f32.xlu0 %v760
          %v802 = vpop.xlane.xlu0 %801
          %803 = vadd.xlane.f32.xlu0 %v761
          %v804 = vpop.xlane.xlu0 %803
          %805 = vadd.xlane.f32.xlu0 %v762
          %v806 = vpop.xlane.xlu0 %805
          %807 = vadd.xlane.f32.xlu0 %v763
          %v808 = vpop.xlane.xlu0 %807
          %809 = vadd.xlane.f32.xlu0 %v764
          %v810 = vpop.xlane.xlu0 %809
          %811 = vadd.xlane.f32.xlu0 %v765
          %v812 = vpop.xlane.xlu0 %811
          %813 = vadd.xlane.f32.xlu0 %v766
          %v814 = vpop.xlane.xlu0 %813
          %815 = vadd.xlane.f32.xlu0 %v767
          %v816 = vpop.xlane.xlu0 %815
          %817 = vadd.xlane.f32.xlu0 %v768
          %v818 = vpop.xlane.xlu0 %817
          %819 = vadd.xlane.f32.xlu0 %v769
          %v820 = vpop.xlane.xlu0 %819
          %821 = vadd.xlane.f32.xlu0 %v770
          %v822 = vpop.xlane.xlu0 %821
          %823 = vadd.xlane.f32.xlu0 %v771
          %v824 = vpop.xlane.xlu0 %823
          %825 = vadd.xlane.f32.xlu0 %v772
          %v826 = vpop.xlane.xlu0 %825
          %827 = vadd.xlane.f32.xlu0 %v773
          %v828 = vpop.xlane.xlu0 %827
          %829 = vadd.xlane.f32.xlu0 %v774
          %v830 = vpop.xlane.xlu0 %829
          %831 = vadd.xlane.f32.xlu0 %v775
          %v832 = vpop.xlane.xlu0 %831
          %833 = vadd.xlane.f32.xlu0 %v776
          %v834 = vpop.xlane.xlu0 %833
          %835 = vadd.xlane.f32.xlu0 %v777
          %v836 = vpop.xlane.xlu0 %835
          %837 = vadd.xlane.f32.xlu0 %v778
          %v838 = vpop.xlane.xlu0 %837
          %839 = vadd.xlane.f32.xlu0 %v779
          %v840 = vpop.xlane.xlu0 %839
          %841 = vadd.xlane.f32.xlu0 %v780
          %v842 = vpop.xlane.xlu0 %841
          %843 = vadd.xlane.f32.xlu0 %v781
          %v844 = vpop.xlane.xlu0 %843
          %845 = vadd.xlane.f32.xlu0 %v782
          %v846 = vpop.xlane.xlu0 %845
          %847 = vadd.xlane.f32.xlu0 %v783
          %v848 = vpop.xlane.xlu0 %847
          %849 = vadd.xlane.f32.xlu0 %v784
          %v850 = vpop.xlane.xlu0 %849
          %v851 = vrcp.pop 128.0
          %v852 = vmul.f32 128.0, %v851
          %v853 = vsub.f32 1.0, %v852
          %v854 = vmul.f32 %v851, %v853
          %v855 = vadd.f32 %v851, %v854
          %vm856 = vweird.f32 %v851
          %v857 = vsel %vm856, %v851, %v855
          %v858 = vmul.f32 %v788, %v857
          %v859 = vmul.f32 %v790, %v857
          %v860 = vmul.f32 %v792, %v857
          %v861 = vmul.f32 %v794, %v857
          %v862 = vmul.f32 %v796, %v857
          %v863 = vmul.f32 %v798, %v857
          %v864 = vmul.f32 %v800, %v857
          %v865 = vmul.f32 %v802, %v857
          %v866 = vmul.f32 %v804, %v857
          %v867 = vmul.f32 %v806, %v857
          %v868 = vmul.f32 %v808, %v857
          %v869 = vmul.f32 %v810, %v857
          %v870 = vmul.f32 %v812, %v857
          %v871 = vmul.f32 %v814, %v857
          %v872 = vmul.f32 %v816, %v857
          %v873 = vmul.f32 %v818, %v857
          %v874 = vmul.f32 %v820, %v857
          %v875 = vmul.f32 %v822, %v857
          %v876 = vmul.f32 %v824, %v857
          %v877 = vmul.f32 %v826, %v857
          %v878 = vmul.f32 %v828, %v857
          %v879 = vmul.f32 %v830, %v857
          %v880 = vmul.f32 %v832, %v857
          %v881 = vmul.f32 %v834, %v857
          %v882 = vmul.f32 %v836, %v857
          %v883 = vmul.f32 %v838, %v857
          %v884 = vmul.f32 %v840, %v857
          %v885 = vmul.f32 %v842, %v857
          %v886 = vmul.f32 %v844, %v857
          %v887 = vmul.f32 %v846, %v857
          %v888 = vmul.f32 %v848, %v857
          %v889 = vmul.f32 %v850, %v857
          %v890 = vsub.f32 %v753, %v858
          %v891 = vsub.f32 %v754, %v859
          %v892 = vsub.f32 %v755, %v860
          %v893 = vsub.f32 %v756, %v861
          %v894 = vsub.f32 %v757, %v862
          %v895 = vsub.f32 %v758, %v863
          %v896 = vsub.f32 %v759, %v864
          %v897 = vsub.f32 %v760, %v865
          %v898 = vsub.f32 %v761, %v866
          %v899 = vsub.f32 %v762, %v867
          %v900 = vsub.f32 %v763, %v868
          %v901 = vsub.f32 %v764, %v869
          %v902 = vsub.f32 %v765, %v870
          %v903 = vsub.f32 %v766, %v871
          %v904 = vsub.f32 %v767, %v872
          %v905 = vsub.f32 %v768, %v873
          %v906 = vsub.f32 %v769, %v874
          %v907 = vsub.f32 %v770, %v875
          %v908 = vsub.f32 %v771, %v876
          %v909 = vsub.f32 %v772, %v877
          %v910 = vsub.f32 %v773, %v878
          %v911 = vsub.f32 %v774, %v879
          %v912 = vsub.f32 %v775, %v880
          %v913 = vsub.f32 %v776, %v881
          %v914 = vsub.f32 %v777, %v882
          %v915 = vsub.f32 %v778, %v883
          %v916 = vsub.f32 %v779, %v884
          %v917 = vsub.f32 %v780, %v885
          %v918 = vsub.f32 %v781, %v886
          %v919 = vsub.f32 %v782, %v887
          %v920 = vsub.f32 %v783, %v888
          %v921 = vsub.f32 %v784, %v889
          %v922 = vmul.f32 %v890, %v890
          %v923 = vmul.f32 %v891, %v891
          %v924 = vmul.f32 %v892, %v892
          %v925 = vmul.f32 %v893, %v893
          %v926 = vmul.f32 %v894, %v894
          %v927 = vmul.f32 %v895, %v895
          %v928 = vmul.f32 %v896, %v896
          %v929 = vmul.f32 %v897, %v897
          %v930 = vmul.f32 %v898, %v898
          %v931 = vmul.f32 %v899, %v899
          %v932 = vmul.f32 %v900, %v900
          %v933 = vmul.f32 %v901, %v901
          %v934 = vmul.f32 %v902, %v902
          %v935 = vmul.f32 %v903, %v903
          %v936 = vmul.f32 %v904, %v904
          %v937 = vmul.f32 %v905, %v905
          %v938 = vmul.f32 %v906, %v906
          %v939 = vmul.f32 %v907, %v907
          %v940 = vmul.f32 %v908, %v908
          %v941 = vmul.f32 %v909, %v909
          %v942 = vmul.f32 %v910, %v910
          %v943 = vmul.f32 %v911, %v911
          %v944 = vmul.f32 %v912, %v912
          %v945 = vmul.f32 %v913, %v913
          %v946 = vmul.f32 %v914, %v914
          %v947 = vmul.f32 %v915, %v915
          %v948 = vmul.f32 %v916, %v916
          %v949 = vmul.f32 %v917, %v917
          %v950 = vmul.f32 %v918, %v918
          %v951 = vmul.f32 %v919, %v919
          %v952 = vmul.f32 %v920, %v920
          %v953 = vmul.f32 %v921, %v921
          %954 = vadd.xlane.f32.xlu0 %v922
          %v955 = vpop.xlane.xlu0 %954
          %956 = vadd.xlane.f32.xlu0 %v923
          %v957 = vpop.xlane.xlu0 %956
          %958 = vadd.xlane.f32.xlu0 %v924
          %v959 = vpop.xlane.xlu0 %958
          %960 = vadd.xlane.f32.xlu0 %v925
          %v961 = vpop.xlane.xlu0 %960
          %962 = vadd.xlane.f32.xlu0 %v926
          %v963 = vpop.xlane.xlu0 %962
          %964 = vadd.xlane.f32.xlu0 %v927
          %v965 = vpop.xlane.xlu0 %964
          %966 = vadd.xlane.f32.xlu0 %v928
          %v967 = vpop.xlane.xlu0 %966
          %968 = vadd.xlane.f32.xlu0 %v929
          %v969 = vpop.xlane.xlu0 %968
          %970 = vadd.xlane.f32.xlu0 %v930
          %v971 = vpop.xlane.xlu0 %970
          %972 = vadd.xlane.f32.xlu0 %v931
          %v973 = vpop.xlane.xlu0 %972
          %974 = vadd.xlane.f32.xlu0 %v932
          %v975 = vpop.xlane.xlu0 %974
          %976 = vadd.xlane.f32.xlu0 %v933
          %v977 = vpop.xlane.xlu0 %976
          %978 = vadd.xlane.f32.xlu0 %v934
          %v979 = vpop.xlane.xlu0 %978
          %980 = vadd.xlane.f32.xlu0 %v935
          %v981 = vpop.xlane.xlu0 %980
          %982 = vadd.xlane.f32.xlu0 %v936
          %v983 = vpop.xlane.xlu0 %982
          %984 = vadd.xlane.f32.xlu0 %v937
          %v985 = vpop.xlane.xlu0 %984
          %986 = vadd.xlane.f32.xlu0 %v938
          %v987 = vpop.xlane.xlu0 %986
          %988 = vadd.xlane.f32.xlu0 %v939
          %v989 = vpop.xlane.xlu0 %988
          %990 = vadd.xlane.f32.xlu0 %v940
          %v991 = vpop.xlane.xlu0 %990
          %992 = vadd.xlane.f32.xlu0 %v941
          %v993 = vpop.xlane.xlu0 %992
          %994 = vadd.xlane.f32.xlu0 %v942
          %v995 = vpop.xlane.xlu0 %994
          %996 = vadd.xlane.f32.xlu0 %v943
          %v997 = vpop.xlane.xlu0 %996
          %998 = vadd.xlane.f32.xlu0 %v944
          %v999 = vpop.xlane.xlu0 %998
          %1000 = vadd.xlane.f32.xlu0 %v945
          %v1001 = vpop.xlane.xlu0 %1000
          %1002 = vadd.xlane.f32.xlu0 %v946
          %v1003 = vpop.xlane.xlu0 %1002
          %1004 = vadd.xlane.f32.xlu0 %v947
          %v1005 = vpop.xlane.xlu0 %1004
          %1006 = vadd.xlane.f32.xlu0 %v948
          %v1007 = vpop.xlane.xlu0 %1006
          %1008 = vadd.xlane.f32.xlu0 %v949
          %v1009 = vpop.xlane.xlu0 %1008
          %1010 = vadd.xlane.f32.xlu0 %v950
          %v1011 = vpop.xlane.xlu0 %1010
          %1012 = vadd.xlane.f32.xlu0 %v951
          %v1013 = vpop.xlane.xlu0 %1012
          %1014 = vadd.xlane.f32.xlu0 %v952
          %v1015 = vpop.xlane.xlu0 %1014
          %1016 = vadd.xlane.f32.xlu0 %v953
          %v1017 = vpop.xlane.xlu0 %1016
          %v1018 = vmul.f32 %v955, %v857
          %v1019 = vmul.f32 %v957, %v857
          %v1020 = vmul.f32 %v959, %v857
          %v1021 = vmul.f32 %v961, %v857
          %v1022 = vmul.f32 %v963, %v857
          %v1023 = vmul.f32 %v965, %v857
          %v1024 = vmul.f32 %v967, %v857
          %v1025 = vmul.f32 %v969, %v857
          %v1026 = vmul.f32 %v971, %v857
          %v1027 = vmul.f32 %v973, %v857
          %v1028 = vmul.f32 %v975, %v857
          %v1029 = vmul.f32 %v977, %v857
          %v1030 = vmul.f32 %v979, %v857
          %v1031 = vmul.f32 %v981, %v857
          %v1032 = vmul.f32 %v983, %v857
          %v1033 = vmul.f32 %v985, %v857
          %v1034 = vmul.f32 %v987, %v857
          %v1035 = vmul.f32 %v989, %v857
          %v1036 = vmul.f32 %v991, %v857
          %v1037 = vmul.f32 %v993, %v857
          %v1038 = vmul.f32 %v995, %v857
          %v1039 = vmul.f32 %v997, %v857
          %v1040 = vmul.f32 %v999, %v857
          %v1041 = vmul.f32 %v1001, %v857
          %v1042 = vmul.f32 %v1003, %v857
          %v1043 = vmul.f32 %v1005, %v857
          %v1044 = vmul.f32 %v1007, %v857
          %v1045 = vmul.f32 %v1009, %v857
          %v1046 = vmul.f32 %v1011, %v857
          %v1047 = vmul.f32 %v1013, %v857
          %v1048 = vmul.f32 %v1015, %v857
          %v1049 = vmul.f32 %v1017, %v857
          %v1050 = vadd.f32 %v1018, 1e-05
          %v1051 = vadd.f32 %v1019, 1e-05
          %v1052 = vadd.f32 %v1020, 1e-05
          %v1053 = vadd.f32 %v1021, 1e-05
          %v1054 = vadd.f32 %v1022, 1e-05
          %v1055 = vadd.f32 %v1023, 1e-05
          %v1056 = vadd.f32 %v1024, 1e-05
          %v1057 = vadd.f32 %v1025, 1e-05
          %v1058 = vadd.f32 %v1026, 1e-05
          %v1059 = vadd.f32 %v1027, 1e-05
          %v1060 = vadd.f32 %v1028, 1e-05
          %v1061 = vadd.f32 %v1029, 1e-05
          %v1062 = vadd.f32 %v1030, 1e-05
          %v1063 = vadd.f32 %v1031, 1e-05
          %v1064 = vadd.f32 %v1032, 1e-05
          %v1065 = vadd.f32 %v1033, 1e-05
          %v1066 = vadd.f32 %v1034, 1e-05
          %v1067 = vadd.f32 %v1035, 1e-05
          %v1068 = vadd.f32 %v1036, 1e-05
          %v1069 = vadd.f32 %v1037, 1e-05
          %v1070 = vadd.f32 %v1038, 1e-05
          %v1071 = vadd.f32 %v1039, 1e-05
          %v1072 = vadd.f32 %v1040, 1e-05
          %v1073 = vadd.f32 %v1041, 1e-05
          %v1074 = vadd.f32 %v1042, 1e-05
          %v1075 = vadd.f32 %v1043, 1e-05
          %v1076 = vadd.f32 %v1044, 1e-05
          %v1077 = vadd.f32 %v1045, 1e-05
          %v1078 = vadd.f32 %v1046, 1e-05
          %v1079 = vadd.f32 %v1047, 1e-05
          %v1080 = vadd.f32 %v1048, 1e-05
          %v1081 = vadd.f32 %v1049, 1e-05
          %v1082 = vrsqrt.pop %v1050
          %v1083 = vmul.f32 %v1082, %v1050
          %v1084 = vmul.f32 %v1083, %v1082
          %v1085 = vmul.f32 0.5, %v1084
          %v1086 = vsub.f32 1.5, %v1085
          %v1087 = vmul.f32 %v1082, %v1086
          %vm1088 = vweird.f32 %v1050
          %vm1089 = vweird.f32 %v1082
          %vm1090 = vmor %vm1088, %vm1089
          %v1091 = vsel %vm1090, %v1082, %v1087
          %v1092 = vrsqrt.pop %v1051
          %v1093 = vmul.f32 %v1092, %v1051
          %v1094 = vmul.f32 %v1093, %v1092
          %v1095 = vmul.f32 0.5, %v1094
          %v1096 = vsub.f32 1.5, %v1095
          %v1097 = vmul.f32 %v1092, %v1096
          %vm1098 = vweird.f32 %v1051
          %vm1099 = vweird.f32 %v1092
          %vm1100 = vmor %vm1098, %vm1099
          %v1101 = vsel %vm1100, %v1092, %v1097
          %v1102 = vrsqrt.pop %v1052
          %v1103 = vmul.f32 %v1102, %v1052
          %v1104 = vmul.f32 %v1103, %v1102
          %v1105 = vmul.f32 0.5, %v1104
          %v1106 = vsub.f32 1.5, %v1105
          %v1107 = vmul.f32 %v1102, %v1106
          %vm1108 = vweird.f32 %v1052
          %vm1109 = vweird.f32 %v1102
          %vm1110 = vmor %vm1108, %vm1109
          %v1111 = vsel %vm1110, %v1102, %v1107
          %v1112 = vrsqrt.pop %v1053
          %v1113 = vmul.f32 %v1112, %v1053
          %v1114 = vmul.f32 %v1113, %v1112
          %v1115 = vmul.f32 0.5, %v1114
          %v1116 = vsub.f32 1.5, %v1115
          %v1117 = vmul.f32 %v1112, %v1116
          %vm1118 = vweird.f32 %v1053
          %vm1119 = vweird.f32 %v1112
          %vm1120 = vmor %vm1118, %vm1119
          %v1121 = vsel %vm1120, %v1112, %v1117
          %v1122 = vrsqrt.pop %v1054
          %v1123 = vmul.f32 %v1122, %v1054
          %v1124 = vmul.f32 %v1123, %v1122
          %v1125 = vmul.f32 0.5, %v1124
          %v1126 = vsub.f32 1.5, %v1125
          %v1127 = vmul.f32 %v1122, %v1126
          %vm1128 = vweird.f32 %v1054
          %vm1129 = vweird.f32 %v1122
          %vm1130 = vmor %vm1128, %vm1129
          %v1131 = vsel %vm1130, %v1122, %v1127
          %v1132 = vrsqrt.pop %v1055
          %v1133 = vmul.f32 %v1132, %v1055
          %v1134 = vmul.f32 %v1133, %v1132
          %v1135 = vmul.f32 0.5, %v1134
          %v1136 = vsub.f32 1.5, %v1135
          %v1137 = vmul.f32 %v1132, %v1136
          %vm1138 = vweird.f32 %v1055
          %vm1139 = vweird.f32 %v1132
          %vm1140 = vmor %vm1138, %vm1139
          %v1141 = vsel %vm1140, %v1132, %v1137
          %v1142 = vrsqrt.pop %v1056
          %v1143 = vmul.f32 %v1142, %v1056
          %v1144 = vmul.f32 %v1143, %v1142
          %v1145 = vmul.f32 0.5, %v1144
          %v1146 = vsub.f32 1.5, %v1145
          %v1147 = vmul.f32 %v1142, %v1146
          %vm1148 = vweird.f32 %v1056
          %vm1149 = vweird.f32 %v1142
          %vm1150 = vmor %vm1148, %vm1149
          %v1151 = vsel %vm1150, %v1142, %v1147
          %v1152 = vrsqrt.pop %v1057
          %v1153 = vmul.f32 %v1152, %v1057
          %v1154 = vmul.f32 %v1153, %v1152
          %v1155 = vmul.f32 0.5, %v1154
          %v1156 = vsub.f32 1.5, %v1155
          %v1157 = vmul.f32 %v1152, %v1156
          %vm1158 = vweird.f32 %v1057
          %vm1159 = vweird.f32 %v1152
          %vm1160 = vmor %vm1158, %vm1159
          %v1161 = vsel %vm1160, %v1152, %v1157
          %v1162 = vrsqrt.pop %v1058
          %v1163 = vmul.f32 %v1162, %v1058
          %v1164 = vmul.f32 %v1163, %v1162
          %v1165 = vmul.f32 0.5, %v1164
          %v1166 = vsub.f32 1.5, %v1165
          %v1167 = vmul.f32 %v1162, %v1166
          %vm1168 = vweird.f32 %v1058
          %vm1169 = vweird.f32 %v1162
          %vm1170 = vmor %vm1168, %vm1169
          %v1171 = vsel %vm1170, %v1162, %v1167
          %v1172 = vrsqrt.pop %v1059
          %v1173 = vmul.f32 %v1172, %v1059
          %v1174 = vmul.f32 %v1173, %v1172
          %v1175 = vmul.f32 0.5, %v1174
          %v1176 = vsub.f32 1.5, %v1175
          %v1177 = vmul.f32 %v1172, %v1176
          %vm1178 = vweird.f32 %v1059
          %vm1179 = vweird.f32 %v1172
          %vm1180 = vmor %vm1178, %vm1179
          %v1181 = vsel %vm1180, %v1172, %v1177
          %v1182 = vrsqrt.pop %v1060
          %v1183 = vmul.f32 %v1182, %v1060
          %v1184 = vmul.f32 %v1183, %v1182
          %v1185 = vmul.f32 0.5, %v1184
          %v1186 = vsub.f32 1.5, %v1185
          %v1187 = vmul.f32 %v1182, %v1186
          %vm1188 = vweird.f32 %v1060
          %vm1189 = vweird.f32 %v1182
          %vm1190 = vmor %vm1188, %vm1189
          %v1191 = vsel %vm1190, %v1182, %v1187
          %v1192 = vrsqrt.pop %v1061
          %v1193 = vmul.f32 %v1192, %v1061
          %v1194 = vmul.f32 %v1193, %v1192
          %v1195 = vmul.f32 0.5, %v1194
          %v1196 = vsub.f32 1.5, %v1195
          %v1197 = vmul.f32 %v1192, %v1196
          %vm1198 = vweird.f32 %v1061
          %vm1199 = vweird.f32 %v1192
          %vm1200 = vmor %vm1198, %vm1199
          %v1201 = vsel %vm1200, %v1192, %v1197
          %v1202 = vrsqrt.pop %v1062
          %v1203 = vmul.f32 %v1202, %v1062
          %v1204 = vmul.f32 %v1203, %v1202
          %v1205 = vmul.f32 0.5, %v1204
          %v1206 = vsub.f32 1.5, %v1205
          %v1207 = vmul.f32 %v1202, %v1206
          %vm1208 = vweird.f32 %v1062
          %vm1209 = vweird.f32 %v1202
          %vm1210 = vmor %vm1208, %vm1209
          %v1211 = vsel %vm1210, %v1202, %v1207
          %v1212 = vrsqrt.pop %v1063
          %v1213 = vmul.f32 %v1212, %v1063
          %v1214 = vmul.f32 %v1213, %v1212
          %v1215 = vmul.f32 0.5, %v1214
          %v1216 = vsub.f32 1.5, %v1215
          %v1217 = vmul.f32 %v1212, %v1216
          %vm1218 = vweird.f32 %v1063
          %vm1219 = vweird.f32 %v1212
          %vm1220 = vmor %vm1218, %vm1219
          %v1221 = vsel %vm1220, %v1212, %v1217
          %v1222 = vrsqrt.pop %v1064
          %v1223 = vmul.f32 %v1222, %v1064
          %v1224 = vmul.f32 %v1223, %v1222
          %v1225 = vmul.f32 0.5, %v1224
          %v1226 = vsub.f32 1.5, %v1225
          %v1227 = vmul.f32 %v1222, %v1226
          %vm1228 = vweird.f32 %v1064
          %vm1229 = vweird.f32 %v1222
          %vm1230 = vmor %vm1228, %vm1229
          %v1231 = vsel %vm1230, %v1222, %v1227
          %v1232 = vrsqrt.pop %v1065
          %v1233 = vmul.f32 %v1232, %v1065
          %v1234 = vmul.f32 %v1233, %v1232
          %v1235 = vmul.f32 0.5, %v1234
          %v1236 = vsub.f32 1.5, %v1235
          %v1237 = vmul.f32 %v1232, %v1236
          %vm1238 = vweird.f32 %v1065
          %vm1239 = vweird.f32 %v1232
          %vm1240 = vmor %vm1238, %vm1239
          %v1241 = vsel %vm1240, %v1232, %v1237
          %v1242 = vrsqrt.pop %v1066
          %v1243 = vmul.f32 %v1242, %v1066
          %v1244 = vmul.f32 %v1243, %v1242
          %v1245 = vmul.f32 0.5, %v1244
          %v1246 = vsub.f32 1.5, %v1245
          %v1247 = vmul.f32 %v1242, %v1246
          %vm1248 = vweird.f32 %v1066
          %vm1249 = vweird.f32 %v1242
          %vm1250 = vmor %vm1248, %vm1249
          %v1251 = vsel %vm1250, %v1242, %v1247
          %v1252 = vrsqrt.pop %v1067
          %v1253 = vmul.f32 %v1252, %v1067
          %v1254 = vmul.f32 %v1253, %v1252
          %v1255 = vmul.f32 0.5, %v1254
          %v1256 = vsub.f32 1.5, %v1255
          %v1257 = vmul.f32 %v1252, %v1256
          %vm1258 = vweird.f32 %v1067
          %vm1259 = vweird.f32 %v1252
          %vm1260 = vmor %vm1258, %vm1259
          %v1261 = vsel %vm1260, %v1252, %v1257
          %v1262 = vrsqrt.pop %v1068
          %v1263 = vmul.f32 %v1262, %v1068
          %v1264 = vmul.f32 %v1263, %v1262
          %v1265 = vmul.f32 0.5, %v1264
          %v1266 = vsub.f32 1.5, %v1265
          %v1267 = vmul.f32 %v1262, %v1266
          %vm1268 = vweird.f32 %v1068
          %vm1269 = vweird.f32 %v1262
          %vm1270 = vmor %vm1268, %vm1269
          %v1271 = vsel %vm1270, %v1262, %v1267
          %v1272 = vrsqrt.pop %v1069
          %v1273 = vmul.f32 %v1272, %v1069
          %v1274 = vmul.f32 %v1273, %v1272
          %v1275 = vmul.f32 0.5, %v1274
          %v1276 = vsub.f32 1.5, %v1275
          %v1277 = vmul.f32 %v1272, %v1276
          %vm1278 = vweird.f32 %v1069
          %vm1279 = vweird.f32 %v1272
          %vm1280 = vmor %vm1278, %vm1279
          %v1281 = vsel %vm1280, %v1272, %v1277
          %v1282 = vrsqrt.pop %v1070
          %v1283 = vmul.f32 %v1282, %v1070
          %v1284 = vmul.f32 %v1283, %v1282
          %v1285 = vmul.f32 0.5, %v1284
          %v1286 = vsub.f32 1.5, %v1285
          %v1287 = vmul.f32 %v1282, %v1286
          %vm1288 = vweird.f32 %v1070
          %vm1289 = vweird.f32 %v1282
          %vm1290 = vmor %vm1288, %vm1289
          %v1291 = vsel %vm1290, %v1282, %v1287
          %v1292 = vrsqrt.pop %v1071
          %v1293 = vmul.f32 %v1292, %v1071
          %v1294 = vmul.f32 %v1293, %v1292
          %v1295 = vmul.f32 0.5, %v1294
          %v1296 = vsub.f32 1.5, %v1295
          %v1297 = vmul.f32 %v1292, %v1296
          %vm1298 = vweird.f32 %v1071
          %vm1299 = vweird.f32 %v1292
          %vm1300 = vmor %vm1298, %vm1299
          %v1301 = vsel %vm1300, %v1292, %v1297
          %v1302 = vrsqrt.pop %v1072
          %v1303 = vmul.f32 %v1302, %v1072
          %v1304 = vmul.f32 %v1303, %v1302
          %v1305 = vmul.f32 0.5, %v1304
          %v1306 = vsub.f32 1.5, %v1305
          %v1307 = vmul.f32 %v1302, %v1306
          %vm1308 = vweird.f32 %v1072
          %vm1309 = vweird.f32 %v1302
          %vm1310 = vmor %vm1308, %vm1309
          %v1311 = vsel %vm1310, %v1302, %v1307
          %v1312 = vrsqrt.pop %v1073
          %v1313 = vmul.f32 %v1312, %v1073
          %v1314 = vmul.f32 %v1313, %v1312
          %v1315 = vmul.f32 0.5, %v1314
          %v1316 = vsub.f32 1.5, %v1315
          %v1317 = vmul.f32 %v1312, %v1316
          %vm1318 = vweird.f32 %v1073
          %vm1319 = vweird.f32 %v1312
          %vm1320 = vmor %vm1318, %vm1319
          %v1321 = vsel %vm1320, %v1312, %v1317
          %v1322 = vrsqrt.pop %v1074
          %v1323 = vmul.f32 %v1322, %v1074
          %v1324 = vmul.f32 %v1323, %v1322
          %v1325 = vmul.f32 0.5, %v1324
          %v1326 = vsub.f32 1.5, %v1325
          %v1327 = vmul.f32 %v1322, %v1326
          %vm1328 = vweird.f32 %v1074
          %vm1329 = vweird.f32 %v1322
          %vm1330 = vmor %vm1328, %vm1329
          %v1331 = vsel %vm1330, %v1322, %v1327
          %v1332 = vrsqrt.pop %v1075
          %v1333 = vmul.f32 %v1332, %v1075
          %v1334 = vmul.f32 %v1333, %v1332
          %v1335 = vmul.f32 0.5, %v1334
          %v1336 = vsub.f32 1.5, %v1335
          %v1337 = vmul.f32 %v1332, %v1336
          %vm1338 = vweird.f32 %v1075
          %vm1339 = vweird.f32 %v1332
          %vm1340 = vmor %vm1338, %vm1339
          %v1341 = vsel %vm1340, %v1332, %v1337
          %v1342 = vrsqrt.pop %v1076
          %v1343 = vmul.f32 %v1342, %v1076
          %v1344 = vmul.f32 %v1343, %v1342
          %v1345 = vmul.f32 0.5, %v1344
          %v1346 = vsub.f32 1.5, %v1345
          %v1347 = vmul.f32 %v1342, %v1346
          %vm1348 = vweird.f32 %v1076
          %vm1349 = vweird.f32 %v1342
          %vm1350 = vmor %vm1348, %vm1349
          %v1351 = vsel %vm1350, %v1342, %v1347
          %v1352 = vrsqrt.pop %v1077
          %v1353 = vmul.f32 %v1352, %v1077
          %v1354 = vmul.f32 %v1353, %v1352
          %v1355 = vmul.f32 0.5, %v1354
          %v1356 = vsub.f32 1.5, %v1355
          %v1357 = vmul.f32 %v1352, %v1356
          %vm1358 = vweird.f32 %v1077
          %vm1359 = vweird.f32 %v1352
          %vm1360 = vmor %vm1358, %vm1359
          %v1361 = vsel %vm1360, %v1352, %v1357
          %v1362 = vrsqrt.pop %v1078
          %v1363 = vmul.f32 %v1362, %v1078
          %v1364 = vmul.f32 %v1363, %v1362
          %v1365 = vmul.f32 0.5, %v1364
          %v1366 = vsub.f32 1.5, %v1365
          %v1367 = vmul.f32 %v1362, %v1366
          %vm1368 = vweird.f32 %v1078
          %vm1369 = vweird.f32 %v1362
          %vm1370 = vmor %vm1368, %vm1369
          %v1371 = vsel %vm1370, %v1362, %v1367
          %v1372 = vrsqrt.pop %v1079
          %v1373 = vmul.f32 %v1372, %v1079
          %v1374 = vmul.f32 %v1373, %v1372
          %v1375 = vmul.f32 0.5, %v1374
          %v1376 = vsub.f32 1.5, %v1375
          %v1377 = vmul.f32 %v1372, %v1376
          %vm1378 = vweird.f32 %v1079
          %vm1379 = vweird.f32 %v1372
          %vm1380 = vmor %vm1378, %vm1379
          %v1381 = vsel %vm1380, %v1372, %v1377
          %v1382 = vrsqrt.pop %v1080
          %v1383 = vmul.f32 %v1382, %v1080
          %v1384 = vmul.f32 %v1383, %v1382
          %v1385 = vmul.f32 0.5, %v1384
          %v1386 = vsub.f32 1.5, %v1385
          %v1387 = vmul.f32 %v1382, %v1386
          %vm1388 = vweird.f32 %v1080
          %vm1389 = vweird.f32 %v1382
          %vm1390 = vmor %vm1388, %vm1389
          %v1391 = vsel %vm1390, %v1382, %v1387
          %v1392 = vrsqrt.pop %v1081
          %v1393 = vmul.f32 %v1392, %v1081
          %v1394 = vmul.f32 %v1393, %v1392
          %v1395 = vmul.f32 0.5, %v1394
          %v1396 = vsub.f32 1.5, %v1395
          %v1397 = vmul.f32 %v1392, %v1396
          %vm1398 = vweird.f32 %v1081
          %vm1399 = vweird.f32 %v1392
          %vm1400 = vmor %vm1398, %vm1399
          %v1401 = vsel %vm1400, %v1392, %v1397
          %v1402 = vmul.f32 %v890, %v1091
          %v1403 = vmul.f32 %v891, %v1101
          %v1404 = vmul.f32 %v892, %v1111
          %v1405 = vmul.f32 %v893, %v1121
          %v1406 = vmul.f32 %v894, %v1131
          %v1407 = vmul.f32 %v895, %v1141
          %v1408 = vmul.f32 %v896, %v1151
          %v1409 = vmul.f32 %v897, %v1161
          %v1410 = vmul.f32 %v898, %v1171
          %v1411 = vmul.f32 %v899, %v1181
          %v1412 = vmul.f32 %v900, %v1191
          %v1413 = vmul.f32 %v901, %v1201
          %v1414 = vmul.f32 %v902, %v1211
          %v1415 = vmul.f32 %v903, %v1221
          %v1416 = vmul.f32 %v904, %v1231
          %v1417 = vmul.f32 %v905, %v1241
          %v1418 = vmul.f32 %v906, %v1251
          %v1419 = vmul.f32 %v907, %v1261
          %v1420 = vmul.f32 %v908, %v1271
          %v1421 = vmul.f32 %v909, %v1281
          %v1422 = vmul.f32 %v910, %v1291
          %v1423 = vmul.f32 %v911, %v1301
          %v1424 = vmul.f32 %v912, %v1311
          %v1425 = vmul.f32 %v913, %v1321
          %v1426 = vmul.f32 %v914, %v1331
          %v1427 = vmul.f32 %v915, %v1341
          %v1428 = vmul.f32 %v916, %v1351
          %v1429 = vmul.f32 %v917, %v1361
          %v1430 = vmul.f32 %v918, %v1371
          %v1431 = vmul.f32 %v919, %v1381
          %v1432 = vmul.f32 %v920, %v1391
          %v1433 = vmul.f32 %v921, %v1401
          %v1435 = vperm.slane %v785, 0
          %v1437 = vmul.f32 %v1402, %v1435
          %v1438 = vmul.f32 %v1403, %v1435
          %v1439 = vmul.f32 %v1404, %v1435
          %v1440 = vmul.f32 %v1405, %v1435
          %v1441 = vmul.f32 %v1406, %v1435
          %v1442 = vmul.f32 %v1407, %v1435
          %v1443 = vmul.f32 %v1408, %v1435
          %v1444 = vmul.f32 %v1409, %v1435
          %v1445 = vmul.f32 %v1410, %v1435
          %v1446 = vmul.f32 %v1411, %v1435
          %v1447 = vmul.f32 %v1412, %v1435
          %v1448 = vmul.f32 %v1413, %v1435
          %v1449 = vmul.f32 %v1414, %v1435
          %v1450 = vmul.f32 %v1415, %v1435
          %v1451 = vmul.f32 %v1416, %v1435
          %v1452 = vmul.f32 %v1417, %v1435
          %v1453 = vmul.f32 %v1418, %v1435
          %v1454 = vmul.f32 %v1419, %v1435
          %v1455 = vmul.f32 %v1420, %v1435
          %v1456 = vmul.f32 %v1421, %v1435
          %v1457 = vmul.f32 %v1422, %v1435
          %v1458 = vmul.f32 %v1423, %v1435
          %v1459 = vmul.f32 %v1424, %v1435
          %v1460 = vmul.f32 %v1425, %v1435
          %v1461 = vmul.f32 %v1426, %v1435
          %v1462 = vmul.f32 %v1427, %v1435
          %v1463 = vmul.f32 %v1428, %v1435
          %v1464 = vmul.f32 %v1429, %v1435
          %v1465 = vmul.f32 %v1430, %v1435
          %v1466 = vmul.f32 %v1431, %v1435
          %v1467 = vmul.f32 %v1432, %v1435
          %v1468 = vmul.f32 %v1433, %v1435
          %v1470 = vperm.slane %v786, 0
          %v1472 = vadd.f32 %v1437, %v1470
          %v1473 = vadd.f32 %v1438, %v1470
          %v1474 = vadd.f32 %v1439, %v1470
          %v1475 = vadd.f32 %v1440, %v1470
          %v1476 = vadd.f32 %v1441, %v1470
          %v1477 = vadd.f32 %v1442, %v1470
          %v1478 = vadd.f32 %v1443, %v1470
          %v1479 = vadd.f32 %v1444, %v1470
          %v1480 = vadd.f32 %v1445, %v1470
          %v1481 = vadd.f32 %v1446, %v1470
          %v1482 = vadd.f32 %v1447, %v1470
          %v1483 = vadd.f32 %v1448, %v1470
          %v1484 = vadd.f32 %v1449, %v1470
          %v1485 = vadd.f32 %v1450, %v1470
          %v1486 = vadd.f32 %v1451, %v1470
          %v1487 = vadd.f32 %v1452, %v1470
          %v1488 = vadd.f32 %v1453, %v1470
          %v1489 = vadd.f32 %v1454, %v1470
          %v1490 = vadd.f32 %v1455, %v1470
          %v1491 = vadd.f32 %v1456, %v1470
          %v1492 = vadd.f32 %v1457, %v1470
          %v1493 = vadd.f32 %v1458, %v1470
          %v1494 = vadd.f32 %v1459, %v1470
          %v1495 = vadd.f32 %v1460, %v1470
          %v1496 = vadd.f32 %v1461, %v1470
          %v1497 = vadd.f32 %v1462, %v1470
          %v1498 = vadd.f32 %v1463, %v1470
          %v1499 = vadd.f32 %v1464, %v1470
          %v1500 = vadd.f32 %v1465, %v1470
          %v1501 = vadd.f32 %v1466, %v1470
          %v1502 = vadd.f32 %v1467, %v1470
          %v1503 = vadd.f32 %v1468, %v1470
          %v1504 = vpack.c.bf16 %v1473, %v1472
          %v1505 = vpack.c.bf16 %v1475, %v1474
          %v1506 = vpack.c.bf16 %v1477, %v1476
          %v1507 = vpack.c.bf16 %v1479, %v1478
          %v1508 = vpack.c.bf16 %v1481, %v1480
          %v1509 = vpack.c.bf16 %v1483, %v1482
          %v1510 = vpack.c.bf16 %v1485, %v1484
          %v1511 = vpack.c.bf16 %v1487, %v1486
          %v1512 = vpack.c.bf16 %v1489, %v1488
          %v1513 = vpack.c.bf16 %v1491, %v1490
          %v1514 = vpack.c.bf16 %v1493, %v1492
          %v1515 = vpack.c.bf16 %v1495, %v1494
          %v1516 = vpack.c.bf16 %v1497, %v1496
          %v1517 = vpack.c.bf16 %v1499, %v1498
          %v1518 = vpack.c.bf16 %v1501, %v1500
          %v1519 = vpack.c.bf16 %v1503, %v1502
          %v1520 = vld [vmem:[#allocation13] sm:$0xff]
          %v1521 = vld [vmem:[#allocation13 + $0x8] sm:$0xf]
          %v1522 = vld [vmem:[#allocation13 + $0xc] sm:$0xff]
          %v1523 = vld [vmem:[#allocation13 + $0x14] sm:$0xf]
          %v1524 = vld [vmem:[#allocation13 + $0x18] sm:$0xff]
          %v1525 = vld [vmem:[#allocation13 + $0x20] sm:$0xf]
          %v1526 = vld [vmem:[#allocation13 + $0x24] sm:$0xff]
          %v1527 = vld [vmem:[#allocation13 + $0x2c] sm:$0xf]
          %v1528 = vld [vmem:[#allocation13 + $0x30] sm:$0xff]
          %v1529 = vld [vmem:[#allocation13 + $0x38] sm:$0xf]
          %v1530 = vld [vmem:[#allocation13 + $0x3c] sm:$0xff]
          %v1531 = vld [vmem:[#allocation13 + $0x44] sm:$0xf]
          %v1532 = vld [vmem:[#allocation13 + $0x48] sm:$0xff]
          %v1533 = vld [vmem:[#allocation13 + $0x50] sm:$0xf]
          %v1534 = vld [vmem:[#allocation13 + $0x54] sm:$0xff]
          %v1535 = vld [vmem:[#allocation13 + $0x5c] sm:$0xf]
          %v1536 = vld [vmem:[#allocation13 + $0x60] sm:$0xff]
          %v1537 = vld [vmem:[#allocation13 + $0x68] sm:$0xf]
          %v1538 = vld [vmem:[#allocation13 + $0x6c] sm:$0xff]
          %v1539 = vld [vmem:[#allocation13 + $0x74] sm:$0xf]
          %v1540 = vld [vmem:[#allocation13 + $0x78] sm:$0xff]
          %v1541 = vld [vmem:[#allocation13 + $0x80] sm:$0xf]
          %v1542 = vld [vmem:[#allocation13 + $0x84] sm:$0xff]
          %v1543 = vld [vmem:[#allocation13 + $0x8c] sm:$0xf]
          %v1544 = vld [vmem:[#allocation13 + $0x90] sm:$0xff]
          %v1545 = vld [vmem:[#allocation13 + $0x98] sm:$0xf]
          %v1546 = vld [vmem:[#allocation13 + $0x9c] sm:$0xff]
          %v1547 = vld [vmem:[#allocation13 + $0xa4] sm:$0xf]
          %v1548 = vld [vmem:[#allocation13 + $0xa8] sm:$0xff]
          %v1549 = vld [vmem:[#allocation13 + $0xb0] sm:$0xf]
          %v1550 = vld [vmem:[#allocation13 + $0xb4] sm:$0xff]
          %v1551 = vld [vmem:[#allocation13 + $0xbc] sm:$0xf]
          %v1552 = vld [vmem:[%s5] sm:$0x7]
          %v1554 = vperm.slane %v1552, 0
          %v1555 = vperm.slane %v1552, 1
          %v1556 = vperm.slane %v1552, 2
          %v1592 = vunpack.c.l.b16 %v1520
          %v1593 = vunpack.c.h.b16 %v1520
          %v1594 = vunpack.c.l.b16 %v1521
          %v1595 = vunpack.c.l.b16 %v1522
          %v1596 = vunpack.c.h.b16 %v1522
          %v1597 = vunpack.c.l.b16 %v1523
          %v1598 = vunpack.c.l.b16 %v1524
          %v1599 = vunpack.c.h.b16 %v1524
          %v1600 = vunpack.c.l.b16 %v1525
          %v1601 = vunpack.c.l.b16 %v1526
          %v1602 = vunpack.c.h.b16 %v1526
          %v1603 = vunpack.c.l.b16 %v1527
          %v1604 = vunpack.c.l.b16 %v1528
          %v1605 = vunpack.c.h.b16 %v1528
          %v1606 = vunpack.c.l.b16 %v1529
          %v1607 = vunpack.c.l.b16 %v1530
          %v1608 = vunpack.c.h.b16 %v1530
          %v1609 = vunpack.c.l.b16 %v1531
          %v1610 = vunpack.c.l.b16 %v1532
          %v1611 = vunpack.c.h.b16 %v1532
          %v1612 = vunpack.c.l.b16 %v1533
          %v1613 = vunpack.c.l.b16 %v1534
          %v1614 = vunpack.c.h.b16 %v1534
          %v1615 = vunpack.c.l.b16 %v1535
          %v1616 = vunpack.c.l.b16 %v1536
          %v1617 = vunpack.c.h.b16 %v1536
          %v1618 = vunpack.c.l.b16 %v1537
          %v1619 = vunpack.c.l.b16 %v1538
          %v1620 = vunpack.c.h.b16 %v1538
          %v1621 = vunpack.c.l.b16 %v1539
          %v1622 = vunpack.c.l.b16 %v1540
          %v1623 = vunpack.c.h.b16 %v1540
          %v1624 = vunpack.c.l.b16 %v1541
          %v1625 = vunpack.c.l.b16 %v1542
          %v1626 = vunpack.c.h.b16 %v1542
          %v1627 = vunpack.c.l.b16 %v1543
          %v1628 = vunpack.c.l.b16 %v1544
          %v1629 = vunpack.c.h.b16 %v1544
          %v1630 = vunpack.c.l.b16 %v1545
          %v1631 = vunpack.c.l.b16 %v1546
          %v1632 = vunpack.c.h.b16 %v1546
          %v1633 = vunpack.c.l.b16 %v1547
          %v1634 = vunpack.c.l.b16 %v1548
          %v1635 = vunpack.c.h.b16 %v1548
          %v1636 = vunpack.c.l.b16 %v1549
          %v1637 = vunpack.c.l.b16 %v1550
          %v1638 = vunpack.c.h.b16 %v1550
          %v1639 = vunpack.c.l.b16 %v1551
          %v1640 = vpack.c.b16 %v1595, %v1592
          %v1641 = vpack.c.b16 %v1596, %v1593
          %v1642 = vpack.c.b16 %v1597, %v1594
          %v1643 = vpack.c.b16 %v1601, %v1598
          %v1644 = vpack.c.b16 %v1602, %v1599
          %v1645 = vpack.c.b16 %v1603, %v1600
          %v1646 = vpack.c.b16 %v1607, %v1604
          %v1647 = vpack.c.b16 %v1608, %v1605
          %v1648 = vpack.c.b16 %v1609, %v1606
          %v1649 = vpack.c.b16 %v1613, %v1610
          %v1650 = vpack.c.b16 %v1614, %v1611
          %v1651 = vpack.c.b16 %v1615, %v1612
          %v1652 = vpack.c.b16 %v1619, %v1616
          %v1653 = vpack.c.b16 %v1620, %v1617
          %v1654 = vpack.c.b16 %v1621, %v1618
          %v1655 = vpack.c.b16 %v1625, %v1622
          %v1656 = vpack.c.b16 %v1626, %v1623
          %v1657 = vpack.c.b16 %v1627, %v1624
          %v1658 = vpack.c.b16 %v1631, %v1628
          %v1659 = vpack.c.b16 %v1632, %v1629
          %v1660 = vpack.c.b16 %v1633, %v1630
          %v1661 = vpack.c.b16 %v1637, %v1634
          %v1662 = vpack.c.b16 %v1638, %v1635
          %v1663 = vpack.c.b16 %v1639, %v1636
          %1688 = vmatpush.bf16.msra.mxu0 %v1661
          %1689 = vmatpush.bf16.msra.mxu0 %v1658
          %1690 = vmatpush.bf16.msra.mxu0 %v1655
          %1691 = vmatpush.bf16.msra.mxu0 %v1652
          %1692 = vmatpush.bf16.msra.mxu0 %v1649
          %1693 = vmatpush.bf16.msra.mxu0 %v1646
          %1694 = vmatpush.bf16.msra.mxu0 %v1643
          %1695 = vmatpush.bf16.msra.mxu0 %v1640
          %1696 = vmatmul.bf16.gmra.mxu0 %v1504
          %v1697 = vpop.f32.mrf.mxu0
          %v1698 = vadd.f32 %v1554, %v1697
          %v1699 = vpop.f32.mrf.mxu0
          %v1700 = vadd.f32 %v1554, %v1699
          %1701 = vmatmul.bf16.gmra.mxu0 %v1505
          %v1702 = vpop.f32.mrf.mxu0
          %v1703 = vadd.f32 %v1554, %v1702
          %v1704 = vpop.f32.mrf.mxu0
          %v1705 = vadd.f32 %v1554, %v1704
          %1706 = vmatmul.bf16.gmra.mxu0 %v1506
          %v1707 = vpop.f32.mrf.mxu0
          %v1708 = vadd.f32 %v1554, %v1707
          %v1709 = vpop.f32.mrf.mxu0
          %v1710 = vadd.f32 %v1554, %v1709
          %1711 = vmatmul.bf16.gmra.mxu0 %v1507
          %v1712 = vpop.f32.mrf.mxu0
          %v1713 = vadd.f32 %v1554, %v1712
          %v1714 = vpop.f32.mrf.mxu0
          %v1715 = vadd.f32 %v1554, %v1714
          %1716 = vmatmul.bf16.gmra.mxu0 %v1508
          %v1717 = vpop.f32.mrf.mxu0
          %v1718 = vadd.f32 %v1554, %v1717
          %v1719 = vpop.f32.mrf.mxu0
          %v1720 = vadd.f32 %v1554, %v1719
          %1721 = vmatmul.bf16.gmra.mxu0 %v1509
          %v1722 = vpop.f32.mrf.mxu0
          %v1723 = vadd.f32 %v1554, %v1722
          %v1724 = vpop.f32.mrf.mxu0
          %v1725 = vadd.f32 %v1554, %v1724
          %1726 = vmatmul.bf16.gmra.mxu0 %v1510
          %v1727 = vpop.f32.mrf.mxu0
          %v1728 = vadd.f32 %v1554, %v1727
          %v1729 = vpop.f32.mrf.mxu0
          %v1730 = vadd.f32 %v1554, %v1729
          %1731 = vmatmul.bf16.gmra.mxu0 %v1511
          %v1732 = vpop.f32.mrf.mxu0
          %v1733 = vadd.f32 %v1554, %v1732
          %v1734 = vpop.f32.mrf.mxu0
          %v1735 = vadd.f32 %v1554, %v1734
          %1736 = vmatmul.bf16.gmra.mxu0 %v1512
          %v1737 = vpop.f32.mrf.mxu0
          %v1738 = vadd.f32 %v1554, %v1737
          %v1739 = vpop.f32.mrf.mxu0
          %v1740 = vadd.f32 %v1554, %v1739
          %1741 = vmatmul.bf16.gmra.mxu0 %v1513
          %v1742 = vpop.f32.mrf.mxu0
          %v1743 = vadd.f32 %v1554, %v1742
          %v1744 = vpop.f32.mrf.mxu0
          %v1745 = vadd.f32 %v1554, %v1744
          %1746 = vmatmul.bf16.gmra.mxu0 %v1514
          %v1747 = vpop.f32.mrf.mxu0
          %v1748 = vadd.f32 %v1554, %v1747
          %v1749 = vpop.f32.mrf.mxu0
          %v1750 = vadd.f32 %v1554, %v1749
          %1751 = vmatmul.bf16.gmra.mxu0 %v1515
          %v1752 = vpop.f32.mrf.mxu0
          %v1753 = vadd.f32 %v1554, %v1752
          %v1754 = vpop.f32.mrf.mxu0
          %v1755 = vadd.f32 %v1554, %v1754
          %1756 = vmatmul.bf16.gmra.mxu0 %v1516
          %v1757 = vpop.f32.mrf.mxu0
          %v1758 = vadd.f32 %v1554, %v1757
          %v1759 = vpop.f32.mrf.mxu0
          %v1760 = vadd.f32 %v1554, %v1759
          %1761 = vmatmul.bf16.gmra.mxu0 %v1517
          %v1762 = vpop.f32.mrf.mxu0
          %v1763 = vadd.f32 %v1554, %v1762
          %v1764 = vpop.f32.mrf.mxu0
          %v1765 = vadd.f32 %v1554, %v1764
          %1766 = vmatmul.bf16.gmra.mxu0 %v1518
          %v1767 = vpop.f32.mrf.mxu0
          %v1768 = vadd.f32 %v1554, %v1767
          %v1769 = vpop.f32.mrf.mxu0
          %v1770 = vadd.f32 %v1554, %v1769
          %1771 = vmatmul.bf16.gmra.mxu0 %v1519
          %v1772 = vpop.f32.mrf.mxu0
          %v1773 = vadd.f32 %v1554, %v1772
          %v1774 = vpop.f32.mrf.mxu0
          %v1775 = vadd.f32 %v1554, %v1774
          %1776 = vdwg.mxu0
          %1777 = vmatpush.bf16.msra.mxu0 %v1662
          %1778 = vmatpush.bf16.msra.mxu0 %v1659
          %1779 = vmatpush.bf16.msra.mxu0 %v1656
          %1780 = vmatpush.bf16.msra.mxu0 %v1653
          %1781 = vmatpush.bf16.msra.mxu0 %v1650
          %1782 = vmatpush.bf16.msra.mxu0 %v1647
          %1783 = vmatpush.bf16.msra.mxu0 %v1644
          %1784 = vmatpush.bf16.msra.mxu0 %v1641
          %1785 = vmatmul.bf16.gmra.mxu0 %v1504
          %v1786 = vpop.f32.mrf.mxu0
          %v1787 = vadd.f32 %v1555, %v1786
          %v1788 = vpop.f32.mrf.mxu0
          %v1789 = vadd.f32 %v1555, %v1788
          %1790 = vmatmul.bf16.gmra.mxu0 %v1505
          %v1791 = vpop.f32.mrf.mxu0
          %v1792 = vadd.f32 %v1555, %v1791
          %v1793 = vpop.f32.mrf.mxu0
          %v1794 = vadd.f32 %v1555, %v1793
          %1795 = vmatmul.bf16.gmra.mxu0 %v1506
          %v1796 = vpop.f32.mrf.mxu0
          %v1797 = vadd.f32 %v1555, %v1796
          %v1798 = vpop.f32.mrf.mxu0
          %v1799 = vadd.f32 %v1555, %v1798
          %1800 = vmatmul.bf16.gmra.mxu0 %v1507
          %v1801 = vpop.f32.mrf.mxu0
          %v1802 = vadd.f32 %v1555, %v1801
          %v1803 = vpop.f32.mrf.mxu0
          %v1804 = vadd.f32 %v1555, %v1803
          %1805 = vmatmul.bf16.gmra.mxu0 %v1508
          %v1806 = vpop.f32.mrf.mxu0
          %v1807 = vadd.f32 %v1555, %v1806
          %v1808 = vpop.f32.mrf.mxu0
          %v1809 = vadd.f32 %v1555, %v1808
          %1810 = vmatmul.bf16.gmra.mxu0 %v1509
          %v1811 = vpop.f32.mrf.mxu0
          %v1812 = vadd.f32 %v1555, %v1811
          %v1813 = vpop.f32.mrf.mxu0
          %v1814 = vadd.f32 %v1555, %v1813
          %1815 = vmatmul.bf16.gmra.mxu0 %v1510
          %v1816 = vpop.f32.mrf.mxu0
          %v1817 = vadd.f32 %v1555, %v1816
          %v1818 = vpop.f32.mrf.mxu0
          %v1819 = vadd.f32 %v1555, %v1818
          %1820 = vmatmul.bf16.gmra.mxu0 %v1511
          %v1821 = vpop.f32.mrf.mxu0
          %v1822 = vadd.f32 %v1555, %v1821
          %v1823 = vpop.f32.mrf.mxu0
          %v1824 = vadd.f32 %v1555, %v1823
          %1825 = vmatmul.bf16.gmra.mxu0 %v1512
          %v1826 = vpop.f32.mrf.mxu0
          %v1827 = vadd.f32 %v1555, %v1826
          %v1828 = vpop.f32.mrf.mxu0
          %v1829 = vadd.f32 %v1555, %v1828
          %1830 = vmatmul.bf16.gmra.mxu0 %v1513
          %v1831 = vpop.f32.mrf.mxu0
          %v1832 = vadd.f32 %v1555, %v1831
          %v1833 = vpop.f32.mrf.mxu0
          %v1834 = vadd.f32 %v1555, %v1833
          %1835 = vmatmul.bf16.gmra.mxu0 %v1514
          %v1836 = vpop.f32.mrf.mxu0
          %v1837 = vadd.f32 %v1555, %v1836
          %v1838 = vpop.f32.mrf.mxu0
          %v1839 = vadd.f32 %v1555, %v1838
          %1840 = vmatmul.bf16.gmra.mxu0 %v1515
          %v1841 = vpop.f32.mrf.mxu0
          %v1842 = vadd.f32 %v1555, %v1841
          %v1843 = vpop.f32.mrf.mxu0
          %v1844 = vadd.f32 %v1555, %v1843
          %1845 = vmatmul.bf16.gmra.mxu0 %v1516
          %v1846 = vpop.f32.mrf.mxu0
          %v1847 = vadd.f32 %v1555, %v1846
          %v1848 = vpop.f32.mrf.mxu0
          %v1849 = vadd.f32 %v1555, %v1848
          %1850 = vmatmul.bf16.gmra.mxu0 %v1517
          %v1851 = vpop.f32.mrf.mxu0
          %v1852 = vadd.f32 %v1555, %v1851
          %v1853 = vpop.f32.mrf.mxu0
          %v1854 = vadd.f32 %v1555, %v1853
          %1855 = vmatmul.bf16.gmra.mxu0 %v1518
          %v1856 = vpop.f32.mrf.mxu0
          %v1857 = vadd.f32 %v1555, %v1856
          %v1858 = vpop.f32.mrf.mxu0
          %v1859 = vadd.f32 %v1555, %v1858
          %1860 = vmatmul.bf16.gmra.mxu0 %v1519
          %v1861 = vpop.f32.mrf.mxu0
          %v1862 = vadd.f32 %v1555, %v1861
          %v1863 = vpop.f32.mrf.mxu0
          %v1864 = vadd.f32 %v1555, %v1863
          %1865 = vdwg.mxu0
          %1866 = vmatpush.bf16.msra.mxu0 %v1663
          %1867 = vmatpush.bf16.msra.mxu0 %v1660
          %1868 = vmatpush.bf16.msra.mxu0 %v1657
          %1869 = vmatpush.bf16.msra.mxu0 %v1654
          %1870 = vmatpush.bf16.msra.mxu0 %v1651
          %1871 = vmatpush.bf16.msra.mxu0 %v1648
          %1872 = vmatpush.bf16.msra.mxu0 %v1645
          %1873 = vmatpush.bf16.msra.mxu0 %v1642
          %1874 = vmatmul.bf16.gmra.mxu0 %v1504
          %v1875 = vpop.f32.mrf.mxu0
          %v1876 = vadd.f32 %v1556, %v1875
          %v1877 = vpop.f32.mrf.mxu0
          %v1878 = vadd.f32 %v1556, %v1877
          %1879 = vmatmul.bf16.gmra.mxu0 %v1505
          %v1880 = vpop.f32.mrf.mxu0
          %v1881 = vadd.f32 %v1556, %v1880
          %v1882 = vpop.f32.mrf.mxu0
          %v1883 = vadd.f32 %v1556, %v1882
          %1884 = vmatmul.bf16.gmra.mxu0 %v1506
          %v1885 = vpop.f32.mrf.mxu0
          %v1886 = vadd.f32 %v1556, %v1885
          %v1887 = vpop.f32.mrf.mxu0
          %v1888 = vadd.f32 %v1556, %v1887
          %1889 = vmatmul.bf16.gmra.mxu0 %v1507
          %v1890 = vpop.f32.mrf.mxu0
          %v1891 = vadd.f32 %v1556, %v1890
          %v1892 = vpop.f32.mrf.mxu0
          %v1893 = vadd.f32 %v1556, %v1892
          %1894 = vmatmul.bf16.gmra.mxu0 %v1508
          %v1895 = vpop.f32.mrf.mxu0
          %v1896 = vadd.f32 %v1556, %v1895
          %v1897 = vpop.f32.mrf.mxu0
          %v1898 = vadd.f32 %v1556, %v1897
          %1899 = vmatmul.bf16.gmra.mxu0 %v1509
          %v1900 = vpop.f32.mrf.mxu0
          %v1901 = vadd.f32 %v1556, %v1900
          %v1902 = vpop.f32.mrf.mxu0
          %v1903 = vadd.f32 %v1556, %v1902
          %1904 = vmatmul.bf16.gmra.mxu0 %v1510
          %v1905 = vpop.f32.mrf.mxu0
          %v1906 = vadd.f32 %v1556, %v1905
          %v1907 = vpop.f32.mrf.mxu0
          %v1908 = vadd.f32 %v1556, %v1907
          %1909 = vmatmul.bf16.gmra.mxu0 %v1511
          %v1910 = vpop.f32.mrf.mxu0
          %v1911 = vadd.f32 %v1556, %v1910
          %v1912 = vpop.f32.mrf.mxu0
          %v1913 = vadd.f32 %v1556, %v1912
          %1914 = vmatmul.bf16.gmra.mxu0 %v1512
          %v1915 = vpop.f32.mrf.mxu0
          %v1916 = vadd.f32 %v1556, %v1915
          %v1917 = vpop.f32.mrf.mxu0
          %v1918 = vadd.f32 %v1556, %v1917
          %1919 = vmatmul.bf16.gmra.mxu0 %v1513
          %v1920 = vpop.f32.mrf.mxu0
          %v1921 = vadd.f32 %v1556, %v1920
          %v1922 = vpop.f32.mrf.mxu0
          %v1923 = vadd.f32 %v1556, %v1922
          %1924 = vmatmul.bf16.gmra.mxu0 %v1514
          %v1925 = vpop.f32.mrf.mxu0
          %v1926 = vadd.f32 %v1556, %v1925
          %v1927 = vpop.f32.mrf.mxu0
          %v1928 = vadd.f32 %v1556, %v1927
          %1929 = vmatmul.bf16.gmra.mxu0 %v1515
          %v1930 = vpop.f32.mrf.mxu0
          %v1931 = vadd.f32 %v1556, %v1930
          %v1932 = vpop.f32.mrf.mxu0
          %v1933 = vadd.f32 %v1556, %v1932
          %1934 = vmatmul.bf16.gmra.mxu0 %v1516
          %v1935 = vpop.f32.mrf.mxu0
          %v1936 = vadd.f32 %v1556, %v1935
          %v1937 = vpop.f32.mrf.mxu0
          %v1938 = vadd.f32 %v1556, %v1937
          %1939 = vmatmul.bf16.gmra.mxu0 %v1517
          %v1940 = vpop.f32.mrf.mxu0
          %v1941 = vadd.f32 %v1556, %v1940
          %v1942 = vpop.f32.mrf.mxu0
          %v1943 = vadd.f32 %v1556, %v1942
          %1944 = vmatmul.bf16.gmra.mxu0 %v1518
          %v1945 = vpop.f32.mrf.mxu0
          %v1946 = vadd.f32 %v1556, %v1945
          %v1947 = vpop.f32.mrf.mxu0
          %v1948 = vadd.f32 %v1556, %v1947
          %1949 = vmatmul.bf16.gmra.mxu0 %v1519
          %v1950 = vpop.f32.mrf.mxu0
          %v1951 = vadd.f32 %v1556, %v1950
          %v1952 = vpop.f32.mrf.mxu0
          %v1953 = vadd.f32 %v1556, %v1952
          %1954 = vdwg.mxu0
          %v1955 = vmul.f32 %v1698, 0.088388346
          %v1956 = vmul.f32 %v1700, 0.088388346
          %v1957 = vmul.f32 %v1703, 0.088388346
          %v1958 = vmul.f32 %v1705, 0.088388346
          %v1959 = vmul.f32 %v1708, 0.088388346
          %v1960 = vmul.f32 %v1710, 0.088388346
          %v1961 = vmul.f32 %v1713, 0.088388346
          %v1962 = vmul.f32 %v1715, 0.088388346
          %v1963 = vmul.f32 %v1718, 0.088388346
          %v1964 = vmul.f32 %v1720, 0.088388346
          %v1965 = vmul.f32 %v1723, 0.088388346
          %v1966 = vmul.f32 %v1725, 0.088388346
          %v1967 = vmul.f32 %v1728, 0.088388346
          %v1968 = vmul.f32 %v1730, 0.088388346
          %v1969 = vmul.f32 %v1733, 0.088388346
          %v1970 = vmul.f32 %v1735, 0.088388346
          %v1971 = vmul.f32 %v1738, 0.088388346
          %v1972 = vmul.f32 %v1740, 0.088388346
          %v1973 = vmul.f32 %v1743, 0.088388346
          %v1974 = vmul.f32 %v1745, 0.088388346
          %v1975 = vmul.f32 %v1748, 0.088388346
          %v1976 = vmul.f32 %v1750, 0.088388346
          %v1977 = vmul.f32 %v1753, 0.088388346
          %v1978 = vmul.f32 %v1755, 0.088388346
          %v1979 = vmul.f32 %v1758, 0.088388346
          %v1980 = vmul.f32 %v1760, 0.088388346
          %v1981 = vmul.f32 %v1763, 0.088388346
          %v1982 = vmul.f32 %v1765, 0.088388346
          %v1983 = vmul.f32 %v1768, 0.088388346
          %v1984 = vmul.f32 %v1770, 0.088388346
          %v1985 = vmul.f32 %v1773, 0.088388346
          %v1986 = vmul.f32 %v1775, 0.088388346
          %v1987 = vpack.c.bf16 %v1955, %v1955
          %v1988 = vpack.c.bf16 %v1956, %v1956
          %v1989 = vpack.c.bf16 %v1957, %v1957
          %v1990 = vpack.c.bf16 %v1958, %v1958
          %v1991 = vpack.c.bf16 %v1959, %v1959
          %v1992 = vpack.c.bf16 %v1960, %v1960
          %v1993 = vpack.c.bf16 %v1961, %v1961
          %v1994 = vpack.c.bf16 %v1962, %v1962
          %v1995 = vpack.c.bf16 %v1963, %v1963
          %v1996 = vpack.c.bf16 %v1964, %v1964
          %v1997 = vpack.c.bf16 %v1965, %v1965
          %v1998 = vpack.c.bf16 %v1966, %v1966
          %v1999 = vpack.c.bf16 %v1967, %v1967
          %v2000 = vpack.c.bf16 %v1968, %v1968
          %v2001 = vpack.c.bf16 %v1969, %v1969
          %v2002 = vpack.c.bf16 %v1970, %v1970
          %v2003 = vpack.c.bf16 %v1971, %v1971
          %v2004 = vpack.c.bf16 %v1972, %v1972
          %v2005 = vpack.c.bf16 %v1973, %v1973
          %v2006 = vpack.c.bf16 %v1974, %v1974
          %v2007 = vpack.c.bf16 %v1975, %v1975
          %v2008 = vpack.c.bf16 %v1976, %v1976
          %v2009 = vpack.c.bf16 %v1977, %v1977
          %v2010 = vpack.c.bf16 %v1978, %v1978
          %v2011 = vpack.c.bf16 %v1979, %v1979
          %v2012 = vpack.c.bf16 %v1980, %v1980
          %v2013 = vpack.c.bf16 %v1981, %v1981
          %v2014 = vpack.c.bf16 %v1982, %v1982
          %v2015 = vpack.c.bf16 %v1983, %v1983
          %v2016 = vpack.c.bf16 %v1984, %v1984
          %v2017 = vpack.c.bf16 %v1985, %v1985
          %v2018 = vpack.c.bf16 %v1986, %v1986
          %2019 = vst [vmem:[#allocation2] sm:$0xf] %v1987
          %2020 = vst [vmem:[#allocation2 + $0x4] sm:$0xf] %v1988
          %2021 = vst [vmem:[#allocation2 + $0x8] sm:$0xf] %v1989
          %2022 = vst [vmem:[#allocation2 + $0xc] sm:$0xf] %v1990
          %2023 = vst [vmem:[#allocation2 + $0x10] sm:$0xf] %v1991
          %2024 = vst [vmem:[#allocation2 + $0x14] sm:$0xf] %v1992
          %2025 = vst [vmem:[#allocation2 + $0x18] sm:$0xf] %v1993
          %2026 = vst [vmem:[#allocation2 + $0x1c] sm:$0xf] %v1994
          %2027 = vst [vmem:[#allocation2 + $0x20] sm:$0xf] %v1995
          %2028 = vst [vmem:[#allocation2 + $0x24] sm:$0xf] %v1996
          %2029 = vst [vmem:[#allocation2 + $0x28] sm:$0xf] %v1997
          %2030 = vst [vmem:[#allocation2 + $0x2c] sm:$0xf] %v1998
          %2031 = vst [vmem:[#allocation2 + $0x30] sm:$0xf] %v1999
          %2032 = vst [vmem:[#allocation2 + $0x34] sm:$0xf] %v2000
          %2033 = vst [vmem:[#allocation2 + $0x38] sm:$0xf] %v2001
          %2034 = vst [vmem:[#allocation2 + $0x3c] sm:$0xf] %v2002
          %2035 = vst [vmem:[#allocation2 + $0x40] sm:$0xf] %v2003
          %2036 = vst [vmem:[#allocation2 + $0x44] sm:$0xf] %v2004
          %2037 = vst [vmem:[#allocation2 + $0x48] sm:$0xf] %v2005
          %2038 = vst [vmem:[#allocation2 + $0x4c] sm:$0xf] %v2006
          %2039 = vst [vmem:[#allocation2 + $0x50] sm:$0xf] %v2007
          %2040 = vst [vmem:[#allocation2 + $0x54] sm:$0xf] %v2008
          %2041 = vst [vmem:[#allocation2 + $0x58] sm:$0xf] %v2009
          %2042 = vst [vmem:[#allocation2 + $0x5c] sm:$0xf] %v2010
          %2043 = vst [vmem:[#allocation2 + $0x60] sm:$0xf] %v2011
          %2044 = vst [vmem:[#allocation2 + $0x64] sm:$0xf] %v2012
          %2045 = vst [vmem:[#allocation2 + $0x68] sm:$0xf] %v2013
          %2046 = vst [vmem:[#allocation2 + $0x6c] sm:$0xf] %v2014
          %2047 = vst [vmem:[#allocation2 + $0x70] sm:$0xf] %v2015
          %2048 = vst [vmem:[#allocation2 + $0x74] sm:$0xf] %v2016
          %2049 = vst [vmem:[#allocation2 + $0x78] sm:$0xf] %v2017
          %2050 = vst [vmem:[#allocation2 + $0x7c] sm:$0xf] %v2018
          %v2051 = vpack.c.bf16 %v1787, %v1787
          %v2052 = vpack.c.bf16 %v1789, %v1789
          %v2053 = vpack.c.bf16 %v1792, %v1792
          %v2054 = vpack.c.bf16 %v1794, %v1794
          %v2055 = vpack.c.bf16 %v1797, %v1797
          %v2056 = vpack.c.bf16 %v1799, %v1799
          %v2057 = vpack.c.bf16 %v1802, %v1802
          %v2058 = vpack.c.bf16 %v1804, %v1804
          %v2059 = vpack.c.bf16 %v1807, %v1807
          %v2060 = vpack.c.bf16 %v1809, %v1809
          %v2061 = vpack.c.bf16 %v1812, %v1812
          %v2062 = vpack.c.bf16 %v1814, %v1814
          %v2063 = vpack.c.bf16 %v1817, %v1817
          %v2064 = vpack.c.bf16 %v1819, %v1819
          %v2065 = vpack.c.bf16 %v1822, %v1822
          %v2066 = vpack.c.bf16 %v1824, %v1824
          %v2067 = vpack.c.bf16 %v1827, %v1827
          %v2068 = vpack.c.bf16 %v1829, %v1829
          %v2069 = vpack.c.bf16 %v1832, %v1832
          %v2070 = vpack.c.bf16 %v1834, %v1834
          %v2071 = vpack.c.bf16 %v1837, %v1837
          %v2072 = vpack.c.bf16 %v1839, %v1839
          %v2073 = vpack.c.bf16 %v1842, %v1842
          %v2074 = vpack.c.bf16 %v1844, %v1844
          %v2075 = vpack.c.bf16 %v1847, %v1847
          %v2076 = vpack.c.bf16 %v1849, %v1849
          %v2077 = vpack.c.bf16 %v1852, %v1852
          %v2078 = vpack.c.bf16 %v1854, %v1854
          %v2079 = vpack.c.bf16 %v1857, %v1857
          %v2080 = vpack.c.bf16 %v1859, %v1859
          %v2081 = vpack.c.bf16 %v1862, %v1862
          %v2082 = vpack.c.bf16 %v1864, %v1864
          %2083 = vst [vmem:[#allocation3] sm:$0xf] %v2051
          %2084 = vst [vmem:[#allocation3 + $0x4] sm:$0xf] %v2052
          %2085 = vst [vmem:[#allocation3 + $0x8] sm:$0xf] %v2053
          %2086 = vst [vmem:[#allocation3 + $0xc] sm:$0xf] %v2054
          %2087 = vst [vmem:[#allocation3 + $0x10] sm:$0xf] %v2055
          %2088 = vst [vmem:[#allocation3 + $0x14] sm:$0xf] %v2056
          %2089 = vst [vmem:[#allocation3 + $0x18] sm:$0xf] %v2057
          %2090 = vst [vmem:[#allocation3 + $0x1c] sm:$0xf] %v2058
          %2091 = vst [vmem:[#allocation3 + $0x20] sm:$0xf] %v2059
          %2092 = vst [vmem:[#allocation3 + $0x24] sm:$0xf] %v2060
          %2093 = vst [vmem:[#allocation3 + $0x28] sm:$0xf] %v2061
          %2094 = vst [vmem:[#allocation3 + $0x2c] sm:$0xf] %v2062
          %2095 = vst [vmem:[#allocation3 + $0x30] sm:$0xf] %v2063
          %2096 = vst [vmem:[#allocation3 + $0x34] sm:$0xf] %v2064
          %2097 = vst [vmem:[#allocation3 + $0x38] sm:$0xf] %v2065
          %2098 = vst [vmem:[#allocation3 + $0x3c] sm:$0xf] %v2066
          %2099 = vst [vmem:[#allocation3 + $0x40] sm:$0xf] %v2067
          %2100 = vst [vmem:[#allocation3 + $0x44] sm:$0xf] %v2068
          %2101 = vst [vmem:[#allocation3 + $0x48] sm:$0xf] %v2069
          %2102 = vst [vmem:[#allocation3 + $0x4c] sm:$0xf] %v2070
          %2103 = vst [vmem:[#allocation3 + $0x50] sm:$0xf] %v2071
          %2104 = vst [vmem:[#allocation3 + $0x54] sm:$0xf] %v2072
          %2105 = vst [vmem:[#allocation3 + $0x58] sm:$0xf] %v2073
          %2106 = vst [vmem:[#allocation3 + $0x5c] sm:$0xf] %v2074
          %2107 = vst [vmem:[#allocation3 + $0x60] sm:$0xf] %v2075
          %2108 = vst [vmem:[#allocation3 + $0x64] sm:$0xf] %v2076
          %2109 = vst [vmem:[#allocation3 + $0x68] sm:$0xf] %v2077
          %2110 = vst [vmem:[#allocation3 + $0x6c] sm:$0xf] %v2078
          %2111 = vst [vmem:[#allocation3 + $0x70] sm:$0xf] %v2079
          %2112 = vst [vmem:[#allocation3 + $0x74] sm:$0xf] %v2080
          %2113 = vst [vmem:[#allocation3 + $0x78] sm:$0xf] %v2081
          %2114 = vst [vmem:[#allocation3 + $0x7c] sm:$0xf] %v2082
          %v2115 = vpack.c.bf16 %v1876, %v1876
          %v2116 = vpack.c.bf16 %v1878, %v1878
          %v2117 = vpack.c.bf16 %v1881, %v1881
          %v2118 = vpack.c.bf16 %v1883, %v1883
          %v2119 = vpack.c.bf16 %v1886, %v1886
          %v2120 = vpack.c.bf16 %v1888, %v1888
          %v2121 = vpack.c.bf16 %v1891, %v1891
          %v2122 = vpack.c.bf16 %v1893, %v1893
          %v2123 = vpack.c.bf16 %v1896, %v1896
          %v2124 = vpack.c.bf16 %v1898, %v1898
          %v2125 = vpack.c.bf16 %v1901, %v1901
          %v2126 = vpack.c.bf16 %v1903, %v1903
          %v2127 = vpack.c.bf16 %v1906, %v1906
          %v2128 = vpack.c.bf16 %v1908, %v1908
          %v2129 = vpack.c.bf16 %v1911, %v1911
          %v2130 = vpack.c.bf16 %v1913, %v1913
          %v2131 = vpack.c.bf16 %v1916, %v1916
          %v2132 = vpack.c.bf16 %v1918, %v1918
          %v2133 = vpack.c.bf16 %v1921, %v1921
          %v2134 = vpack.c.bf16 %v1923, %v1923
          %v2135 = vpack.c.bf16 %v1926, %v1926
          %v2136 = vpack.c.bf16 %v1928, %v1928
          %v2137 = vpack.c.bf16 %v1931, %v1931
          %v2138 = vpack.c.bf16 %v1933, %v1933
          %v2139 = vpack.c.bf16 %v1936, %v1936
          %v2140 = vpack.c.bf16 %v1938, %v1938
          %v2141 = vpack.c.bf16 %v1941, %v1941
          %v2142 = vpack.c.bf16 %v1943, %v1943
          %v2143 = vpack.c.bf16 %v1946, %v1946
          %v2144 = vpack.c.bf16 %v1948, %v1948
          %v2145 = vpack.c.bf16 %v1951, %v1951
          %v2146 = vpack.c.bf16 %v1953, %v1953
          %2147 = vst [vmem:[#allocation4] sm:$0xf] %v2115
          %2148 = vst [vmem:[#allocation4 + $0x4] sm:$0xf] %v2116
          %2149 = vst [vmem:[#allocation4 + $0x8] sm:$0xf] %v2117
          %2150 = vst [vmem:[#allocation4 + $0xc] sm:$0xf] %v2118
          %2151 = vst [vmem:[#allocation4 + $0x10] sm:$0xf] %v2119
          %2152 = vst [vmem:[#allocation4 + $0x14] sm:$0xf] %v2120
          %2153 = vst [vmem:[#allocation4 + $0x18] sm:$0xf] %v2121
          %2154 = vst [vmem:[#allocation4 + $0x1c] sm:$0xf] %v2122
          %2155 = vst [vmem:[#allocation4 + $0x20] sm:$0xf] %v2123
          %2156 = vst [vmem:[#allocation4 + $0x24] sm:$0xf] %v2124
          %2157 = vst [vmem:[#allocation4 + $0x28] sm:$0xf] %v2125
          %2158 = vst [vmem:[#allocation4 + $0x2c] sm:$0xf] %v2126
          %2159 = vst [vmem:[#allocation4 + $0x30] sm:$0xf] %v2127
          %2160 = vst [vmem:[#allocation4 + $0x34] sm:$0xf] %v2128
          %2161 = vst [vmem:[#allocation4 + $0x38] sm:$0xf] %v2129
          %2162 = vst [vmem:[#allocation4 + $0x3c] sm:$0xf] %v2130
          %2163 = vst [vmem:[#allocation4 + $0x40] sm:$0xf] %v2131
          %2164 = vst [vmem:[#allocation4 + $0x44] sm:$0xf] %v2132
          %2165 = vst [vmem:[#allocation4 + $0x48] sm:$0xf] %v2133
          %2166 = vst [vmem:[#allocation4 + $0x4c] sm:$0xf] %v2134
          %2167 = vst [vmem:[#allocation4 + $0x50] sm:$0xf] %v2135
          %2168 = vst [vmem:[#allocation4 + $0x54] sm:$0xf] %v2136
          %2169 = vst [vmem:[#allocation4 + $0x58] sm:$0xf] %v2137
          %2170 = vst [vmem:[#allocation4 + $0x5c] sm:$0xf] %v2138
          %2171 = vst [vmem:[#allocation4 + $0x60] sm:$0xf] %v2139
          %2172 = vst [vmem:[#allocation4 + $0x64] sm:$0xf] %v2140
          %2173 = vst [vmem:[#allocation4 + $0x68] sm:$0xf] %v2141
          %2174 = vst [vmem:[#allocation4 + $0x6c] sm:$0xf] %v2142
          %2175 = vst [vmem:[#allocation4 + $0x70] sm:$0xf] %v2143
          %2176 = vst [vmem:[#allocation4 + $0x74] sm:$0xf] %v2144
          %2177 = vst [vmem:[#allocation4 + $0x78] sm:$0xf] %v2145
          %2178 = vst [vmem:[#allocation4 + $0x7c] sm:$0xf] %v2146
        $region120: #{tpu_custom_call.1} parent=75 // pred_fallthru
          _
        %s2179 = smul.u32 %s46, 128
        %s2180 = scalar_lea.vmem %s585, %s2179 [#allocation5]
        %v2181 = vld [vmem:[%s2180] sm:$0xff]
        %v2182 = vld [vmem:[%s2180 + $0x8] sm:$0xff]
        %v2183 = vld [vmem:[%s2180 + $0x10] sm:$0xff]
        %v2184 = vld [vmem:[%s2180 + $0x18] sm:$0xff]
        %v2185 = vld [vmem:[%s2180 + $0x20] sm:$0xff]
        %v2186 = vld [vmem:[%s2180 + $0x28] sm:$0xff]
        %v2187 = vld [vmem:[%s2180 + $0x30] sm:$0xff]
        %v2188 = vld [vmem:[%s2180 + $0x38] sm:$0xff]
        %v2189 = vld [vmem:[%s2180 + $0x40] sm:$0xff]
        %v2190 = vld [vmem:[%s2180 + $0x48] sm:$0xff]
        %v2191 = vld [vmem:[%s2180 + $0x50] sm:$0xff]
        %v2192 = vld [vmem:[%s2180 + $0x58] sm:$0xff]
        %v2193 = vld [vmem:[%s2180 + $0x60] sm:$0xff]
        %v2194 = vld [vmem:[%s2180 + $0x68] sm:$0xff]
        %v2195 = vld [vmem:[%s2180 + $0x70] sm:$0xff]
        %v2196 = vld [vmem:[%s2180 + $0x78] sm:$0xff]
        %s2197 = scalar_lea.vmem [#allocation8], %s2179
        %v2198 = vld [vmem:[%s2197] sm:$0xff]
        %v2199 = vld [vmem:[%s2197 + $0x8] sm:$0xff]
        %v2200 = vld [vmem:[%s2197 + $0x10] sm:$0xff]
        %v2201 = vld [vmem:[%s2197 + $0x18] sm:$0xff]
        %v2202 = vld [vmem:[%s2197 + $0x20] sm:$0xff]
        %v2203 = vld [vmem:[%s2197 + $0x28] sm:$0xff]
        %v2204 = vld [vmem:[%s2197 + $0x30] sm:$0xff]
        %v2205 = vld [vmem:[%s2197 + $0x38] sm:$0xff]
        %v2206 = vld [vmem:[%s2197 + $0x40] sm:$0xff]
        %v2207 = vld [vmem:[%s2197 + $0x48] sm:$0xff]
        %v2208 = vld [vmem:[%s2197 + $0x50] sm:$0xff]
        %v2209 = vld [vmem:[%s2197 + $0x58] sm:$0xff]
        %v2210 = vld [vmem:[%s2197 + $0x60] sm:$0xff]
        %v2211 = vld [vmem:[%s2197 + $0x68] sm:$0xff]
        %v2212 = vld [vmem:[%s2197 + $0x70] sm:$0xff]
        %v2213 = vld [vmem:[%s2197 + $0x78] sm:$0xff]
        %v2214 = vadd.f32 %v2181, %v2198
        %v2215 = vadd.f32 %v2182, %v2199
        %v2216 = vadd.f32 %v2183, %v2200
        %v2217 = vadd.f32 %v2184, %v2201
        %v2218 = vadd.f32 %v2185, %v2202
        %v2219 = vadd.f32 %v2186, %v2203
        %v2220 = vadd.f32 %v2187, %v2204
        %v2221 = vadd.f32 %v2188, %v2205
        %v2222 = vadd.f32 %v2189, %v2206
        %v2223 = vadd.f32 %v2190, %v2207
        %v2224 = vadd.f32 %v2191, %v2208
        %v2225 = vadd.f32 %v2192, %v2209
        %v2226 = vadd.f32 %v2193, %v2210
        %v2227 = vadd.f32 %v2194, %v2211
        %v2228 = vadd.f32 %v2195, %v2212
        %v2229 = vadd.f32 %v2196, %v2213
        %s2230 = sshra.s32 %s2179, 3
        %s2231 = sand.u32 %s2179, 7
        %s2232 = smul.addr %s2230, 4
        %s2233 = scalar_lea.vmem [#allocation2], %s2232
        %v2234 = vld [vmem:[%s2233] sm:$0xf]
        %v2235 = vld [vmem:[%s2233 + $0x4] sm:$0xf]
        %v2236 = vld [vmem:[%s2233 + $0x8] sm:$0xf]
        %v2237 = vld [vmem:[%s2233 + $0xc] sm:$0xf]
        %v2238 = vld [vmem:[%s2233 + $0x10] sm:$0xf]
        %v2239 = vld [vmem:[%s2233 + $0x14] sm:$0xf]
        %v2240 = vld [vmem:[%s2233 + $0x18] sm:$0xf]
        %v2241 = vld [vmem:[%s2233 + $0x1c] sm:$0xf]
        %v2242 = vld [vmem:[%s2233 + $0x20] sm:$0xf]
        %v2243 = vld [vmem:[%s2233 + $0x24] sm:$0xf]
        %v2244 = vld [vmem:[%s2233 + $0x28] sm:$0xf]
        %v2245 = vld [vmem:[%s2233 + $0x2c] sm:$0xf]
        %v2246 = vld [vmem:[%s2233 + $0x30] sm:$0xf]
        %v2247 = vld [vmem:[%s2233 + $0x34] sm:$0xf]
        %v2248 = vld [vmem:[%s2233 + $0x38] sm:$0xf]
        %v2249 = vld [vmem:[%s2233 + $0x3c] sm:$0xf]
        %v2250 = vld [vmem:[#allocation3] sm:$0xf]
        %v2251 = vld [vmem:[#allocation3 + $0x4] sm:$0xf]
        %v2252 = vld [vmem:[#allocation3 + $0x8] sm:$0xf]
        %v2253 = vld [vmem:[#allocation3 + $0xc] sm:$0xf]
        %v2254 = vld [vmem:[#allocation3 + $0x10] sm:$0xf]
        %v2255 = vld [vmem:[#allocation3 + $0x14] sm:$0xf]
        %v2256 = vld [vmem:[#allocation3 + $0x18] sm:$0xf]
        %v2257 = vld [vmem:[#allocation3 + $0x1c] sm:$0xf]
        %v2258 = vld [vmem:[#allocation3 + $0x20] sm:$0xf]
        %v2259 = vld [vmem:[#allocation3 + $0x24] sm:$0xf]
        %v2260 = vld [vmem:[#allocation3 + $0x28] sm:$0xf]
        %v2261 = vld [vmem:[#allocation3 + $0x2c] sm:$0xf]
        %v2262 = vld [vmem:[#allocation3 + $0x30] sm:$0xf]
        %v2263 = vld [vmem:[#allocation3 + $0x34] sm:$0xf]
        %v2264 = vld [vmem:[#allocation3 + $0x38] sm:$0xf]
        %v2265 = vld [vmem:[#allocation3 + $0x3c] sm:$0xf]
        %v2266 = vld [vmem:[#allocation3 + $0x40] sm:$0xf]
        %v2267 = vld [vmem:[#allocation3 + $0x44] sm:$0xf]
        %v2268 = vld [vmem:[#allocation3 + $0x48] sm:$0xf]
        %v2269 = vld [vmem:[#allocation3 + $0x4c] sm:$0xf]
        %v2270 = vld [vmem:[#allocation3 + $0x50] sm:$0xf]
        %v2271 = vld [vmem:[#allocation3 + $0x54] sm:$0xf]
        %v2272 = vld [vmem:[#allocation3 + $0x58] sm:$0xf]
        %v2273 = vld [vmem:[#allocation3 + $0x5c] sm:$0xf]
        %v2274 = vld [vmem:[#allocation3 + $0x60] sm:$0xf]
        %v2275 = vld [vmem:[#allocation3 + $0x64] sm:$0xf]
        %v2276 = vld [vmem:[#allocation3 + $0x68] sm:$0xf]
        %v2277 = vld [vmem:[#allocation3 + $0x6c] sm:$0xf]
        %v2278 = vld [vmem:[#allocation3 + $0x70] sm:$0xf]
        %v2279 = vld [vmem:[#allocation3 + $0x74] sm:$0xf]
        %v2280 = vld [vmem:[#allocation3 + $0x78] sm:$0xf]
        %v2281 = vld [vmem:[#allocation3 + $0x7c] sm:$0xf]
        %v2298 = vunpack.c.l.b16 %v2234
        %v2299 = vunpack.c.l.b16 %v2235
        %v2300 = vunpack.c.l.b16 %v2236
        %v2301 = vunpack.c.l.b16 %v2237
        %v2302 = vunpack.c.l.b16 %v2238
        %v2303 = vunpack.c.l.b16 %v2239
        %v2304 = vunpack.c.l.b16 %v2240
        %v2305 = vunpack.c.l.b16 %v2241
        %v2306 = vunpack.c.l.b16 %v2242
        %v2307 = vunpack.c.l.b16 %v2243
        %v2308 = vunpack.c.l.b16 %v2244
        %v2309 = vunpack.c.l.b16 %v2245
        %v2310 = vunpack.c.l.b16 %v2246
        %v2311 = vunpack.c.l.b16 %v2247
        %v2312 = vunpack.c.l.b16 %v2248
        %v2313 = vunpack.c.l.b16 %v2249
        %v2314 = vpack.c.b16 %v2299, %v2298
        %v2315 = vpack.c.b16 %v2301, %v2300
        %v2316 = vpack.c.b16 %v2303, %v2302
        %v2317 = vpack.c.b16 %v2305, %v2304
        %v2318 = vpack.c.b16 %v2307, %v2306
        %v2319 = vpack.c.b16 %v2309, %v2308
        %v2320 = vpack.c.b16 %v2311, %v2310
        %v2321 = vpack.c.b16 %v2313, %v2312
        %v2362 = vunpack.c.l.b16 %v2250
        %v2363 = vunpack.c.l.b16 %v2251
        %v2364 = vunpack.c.l.b16 %v2252
        %v2365 = vunpack.c.l.b16 %v2253
        %v2366 = vunpack.c.l.b16 %v2254
        %v2367 = vunpack.c.l.b16 %v2255
        %v2368 = vunpack.c.l.b16 %v2256
        %v2369 = vunpack.c.l.b16 %v2257
        %v2370 = vunpack.c.l.b16 %v2258
        %v2371 = vunpack.c.l.b16 %v2259
        %v2372 = vunpack.c.l.b16 %v2260
        %v2373 = vunpack.c.l.b16 %v2261
        %v2374 = vunpack.c.l.b16 %v2262
        %v2375 = vunpack.c.l.b16 %v2263
        %v2376 = vunpack.c.l.b16 %v2264
        %v2377 = vunpack.c.l.b16 %v2265
        %v2378 = vunpack.c.l.b16 %v2266
        %v2379 = vunpack.c.l.b16 %v2267
        %v2380 = vunpack.c.l.b16 %v2268
        %v2381 = vunpack.c.l.b16 %v2269
        %v2382 = vunpack.c.l.b16 %v2270
        %v2383 = vunpack.c.l.b16 %v2271
        %v2384 = vunpack.c.l.b16 %v2272
        %v2385 = vunpack.c.l.b16 %v2273
        %v2386 = vunpack.c.l.b16 %v2274
        %v2387 = vunpack.c.l.b16 %v2275
        %v2388 = vunpack.c.l.b16 %v2276
        %v2389 = vunpack.c.l.b16 %v2277
        %v2390 = vunpack.c.l.b16 %v2278
        %v2391 = vunpack.c.l.b16 %v2279
        %v2392 = vunpack.c.l.b16 %v2280
        %v2393 = vunpack.c.l.b16 %v2281
        %v2394 = vpack.c.b16 %v2363, %v2362
        %v2395 = vpack.c.b16 %v2365, %v2364
        %v2396 = vpack.c.b16 %v2367, %v2366
        %v2397 = vpack.c.b16 %v2369, %v2368
        %v2398 = vpack.c.b16 %v2371, %v2370
        %v2399 = vpack.c.b16 %v2373, %v2372
        %v2400 = vpack.c.b16 %v2375, %v2374
        %v2401 = vpack.c.b16 %v2377, %v2376
        %v2402 = vpack.c.b16 %v2379, %v2378
        %v2403 = vpack.c.b16 %v2381, %v2380
        %v2404 = vpack.c.b16 %v2383, %v2382
        %v2405 = vpack.c.b16 %v2385, %v2384
        %v2406 = vpack.c.b16 %v2387, %v2386
        %v2407 = vpack.c.b16 %v2389, %v2388
        %v2408 = vpack.c.b16 %v2391, %v2390
        %v2409 = vpack.c.b16 %v2393, %v2392
        %2426 = vmatpush.bf16.xpose.msra.mxu0 %v2401
        %2427 = vmatpush.bf16.xpose.msra.mxu0 %v2400
        %2428 = vmatpush.bf16.xpose.msra.mxu0 %v2399
        %2429 = vmatpush.bf16.xpose.msra.mxu0 %v2398
        %2430 = vmatpush.bf16.xpose.msra.mxu0 %v2397
        %2431 = vmatpush.bf16.xpose.msra.mxu0 %v2396
        %2432 = vmatpush.bf16.xpose.msra.mxu0 %v2395
        %2433 = vmatpush.bf16.xpose.msra.mxu0 %v2394
        %2434 = vmatmul.bf16.gmra.mxu0 %v2314
        %v2435 = vpop.f32.mrf.mxu0
        %v2436 = vadd.f32 0.0, %v2435
        %v2437 = vpop.f32.mrf.mxu0
        %v2438 = vadd.f32 0.0, %v2437
        %2439 = vmatmul.bf16.gmra.mxu0 %v2315
        %v2440 = vpop.f32.mrf.mxu0
        %v2441 = vadd.f32 0.0, %v2440
        %v2442 = vpop.f32.mrf.mxu0
        %v2443 = vadd.f32 0.0, %v2442
        %2444 = vmatmul.bf16.gmra.mxu0 %v2316
        %v2445 = vpop.f32.mrf.mxu0
        %v2446 = vadd.f32 0.0, %v2445
        %v2447 = vpop.f32.mrf.mxu0
        %v2448 = vadd.f32 0.0, %v2447
        %2449 = vmatmul.bf16.gmra.mxu0 %v2317
        %v2450 = vpop.f32.mrf.mxu0
        %v2451 = vadd.f32 0.0, %v2450
        %v2452 = vpop.f32.mrf.mxu0
        %v2453 = vadd.f32 0.0, %v2452
        %2454 = vmatmul.bf16.gmra.mxu0 %v2318
        %v2455 = vpop.f32.mrf.mxu0
        %v2456 = vadd.f32 0.0, %v2455
        %v2457 = vpop.f32.mrf.mxu0
        %v2458 = vadd.f32 0.0, %v2457
        %2459 = vmatmul.bf16.gmra.mxu0 %v2319
        %v2460 = vpop.f32.mrf.mxu0
        %v2461 = vadd.f32 0.0, %v2460
        %v2462 = vpop.f32.mrf.mxu0
        %v2463 = vadd.f32 0.0, %v2462
        %2464 = vmatmul.bf16.gmra.mxu0 %v2320
        %v2465 = vpop.f32.mrf.mxu0
        %v2466 = vadd.f32 0.0, %v2465
        %v2467 = vpop.f32.mrf.mxu0
        %v2468 = vadd.f32 0.0, %v2467
        %2469 = vmatmul.bf16.gmra.mxu0 %v2321
        %v2470 = vpop.f32.mrf.mxu0
        %v2471 = vadd.f32 0.0, %v2470
        %v2472 = vpop.f32.mrf.mxu0
        %v2473 = vadd.f32 0.0, %v2472
        %2474 = vdwg.mxu0
        %2475 = vmatpush.bf16.xpose.msra.mxu0 %v2409
        %2476 = vmatpush.bf16.xpose.msra.mxu0 %v2408
        %2477 = vmatpush.bf16.xpose.msra.mxu0 %v2407
        %2478 = vmatpush.bf16.xpose.msra.mxu0 %v2406
        %2479 = vmatpush.bf16.xpose.msra.mxu0 %v2405
        %2480 = vmatpush.bf16.xpose.msra.mxu0 %v2404
        %2481 = vmatpush.bf16.xpose.msra.mxu0 %v2403
        %2482 = vmatpush.bf16.xpose.msra.mxu0 %v2402
        %2483 = vmatmul.bf16.gmra.mxu0 %v2314
        %v2484 = vpop.f32.mrf.mxu0
        %v2485 = vadd.f32 0.0, %v2484
        %v2486 = vpop.f32.mrf.mxu0
        %v2487 = vadd.f32 0.0, %v2486
        %2488 = vmatmul.bf16.gmra.mxu0 %v2315
        %v2489 = vpop.f32.mrf.mxu0
        %v2490 = vadd.f32 0.0, %v2489
        %v2491 = vpop.f32.mrf.mxu0
        %v2492 = vadd.f32 0.0, %v2491
        %2493 = vmatmul.bf16.gmra.mxu0 %v2316
        %v2494 = vpop.f32.mrf.mxu0
        %v2495 = vadd.f32 0.0, %v2494
        %v2496 = vpop.f32.mrf.mxu0
        %v2497 = vadd.f32 0.0, %v2496
        %2498 = vmatmul.bf16.gmra.mxu0 %v2317
        %v2499 = vpop.f32.mrf.mxu0
        %v2500 = vadd.f32 0.0, %v2499
        %v2501 = vpop.f32.mrf.mxu0
        %v2502 = vadd.f32 0.0, %v2501
        %2503 = vmatmul.bf16.gmra.mxu0 %v2318
        %v2504 = vpop.f32.mrf.mxu0
        %v2505 = vadd.f32 0.0, %v2504
        %v2506 = vpop.f32.mrf.mxu0
        %v2507 = vadd.f32 0.0, %v2506
        %2508 = vmatmul.bf16.gmra.mxu0 %v2319
        %v2509 = vpop.f32.mrf.mxu0
        %v2510 = vadd.f32 0.0, %v2509
        %v2511 = vpop.f32.mrf.mxu0
        %v2512 = vadd.f32 0.0, %v2511
        %2513 = vmatmul.bf16.gmra.mxu0 %v2320
        %v2514 = vpop.f32.mrf.mxu0
        %v2515 = vadd.f32 0.0, %v2514
        %v2516 = vpop.f32.mrf.mxu0
        %v2517 = vadd.f32 0.0, %v2516
        %2518 = vmatmul.bf16.gmra.mxu0 %v2321
        %v2519 = vpop.f32.mrf.mxu0
        %v2520 = vadd.f32 0.0, %v2519
        %v2521 = vpop.f32.mrf.mxu0
        %v2522 = vadd.f32 0.0, %v2521
        %2523 = vdwg.mxu0
        %v2524 = vmax.f32 %v2436, %v2485
        %2525 = vmax.xlane.f32.xlu0 %v2524
        %v2526 = vpop.xlane.xlu0 %2525
        %v2527 = vmax.f32 %v2438, %v2487
        %2528 = vmax.xlane.f32.xlu0 %v2527
        %v2529 = vpop.xlane.xlu0 %2528
        %v2530 = vmax.f32 %v2441, %v2490
        %2531 = vmax.xlane.f32.xlu0 %v2530
        %v2532 = vpop.xlane.xlu0 %2531
        %v2533 = vmax.f32 %v2443, %v2492
        %2534 = vmax.xlane.f32.xlu0 %v2533
        %v2535 = vpop.xlane.xlu0 %2534
        %v2536 = vmax.f32 %v2446, %v2495
        %2537 = vmax.xlane.f32.xlu0 %v2536
        %v2538 = vpop.xlane.xlu0 %2537
        %v2539 = vmax.f32 %v2448, %v2497
        %2540 = vmax.xlane.f32.xlu0 %v2539
        %v2541 = vpop.xlane.xlu0 %2540
        %v2542 = vmax.f32 %v2451, %v2500
        %2543 = vmax.xlane.f32.xlu0 %v2542
        %v2544 = vpop.xlane.xlu0 %2543
        %v2545 = vmax.f32 %v2453, %v2502
        %2546 = vmax.xlane.f32.xlu0 %v2545
        %v2547 = vpop.xlane.xlu0 %2546
        %v2548 = vmax.f32 %v2456, %v2505
        %2549 = vmax.xlane.f32.xlu0 %v2548
        %v2550 = vpop.xlane.xlu0 %2549
        %v2551 = vmax.f32 %v2458, %v2507
        %2552 = vmax.xlane.f32.xlu0 %v2551
        %v2553 = vpop.xlane.xlu0 %2552
        %v2554 = vmax.f32 %v2461, %v2510
        %2555 = vmax.xlane.f32.xlu0 %v2554
        %v2556 = vpop.xlane.xlu0 %2555
        %v2557 = vmax.f32 %v2463, %v2512
        %2558 = vmax.xlane.f32.xlu0 %v2557
        %v2559 = vpop.xlane.xlu0 %2558
        %v2560 = vmax.f32 %v2466, %v2515
        %2561 = vmax.xlane.f32.xlu0 %v2560
        %v2562 = vpop.xlane.xlu0 %2561
        %v2563 = vmax.f32 %v2468, %v2517
        %2564 = vmax.xlane.f32.xlu0 %v2563
        %v2565 = vpop.xlane.xlu0 %2564
        %v2566 = vmax.f32 %v2471, %v2520
        %2567 = vmax.xlane.f32.xlu0 %v2566
        %v2568 = vpop.xlane.xlu0 %2567
        %v2569 = vmax.f32 %v2473, %v2522
        %2570 = vmax.xlane.f32.xlu0 %v2569
        %v2571 = vpop.xlane.xlu0 %2570
        %v2572 = vsub.f32 %v2436, %v2526
        %v2573 = vsub.f32 %v2485, %v2526
        %v2574 = vsub.f32 %v2438, %v2529
        %v2575 = vsub.f32 %v2487, %v2529
        %v2576 = vsub.f32 %v2441, %v2532
        %v2577 = vsub.f32 %v2490, %v2532
        %v2578 = vsub.f32 %v2443, %v2535
        %v2579 = vsub.f32 %v2492, %v2535
        %v2580 = vsub.f32 %v2446, %v2538
        %v2581 = vsub.f32 %v2495, %v2538
        %v2582 = vsub.f32 %v2448, %v2541
        %v2583 = vsub.f32 %v2497, %v2541
        %v2584 = vsub.f32 %v2451, %v2544
        %v2585 = vsub.f32 %v2500, %v2544
        %v2586 = vsub.f32 %v2453, %v2547
        %v2587 = vsub.f32 %v2502, %v2547
        %v2588 = vsub.f32 %v2456, %v2550
        %v2589 = vsub.f32 %v2505, %v2550
        %v2590 = vsub.f32 %v2458, %v2553
        %v2591 = vsub.f32 %v2507, %v2553
        %v2592 = vsub.f32 %v2461, %v2556
        %v2593 = vsub.f32 %v2510, %v2556
        %v2594 = vsub.f32 %v2463, %v2559
        %v2595 = vsub.f32 %v2512, %v2559
        %v2596 = vsub.f32 %v2466, %v2562
        %v2597 = vsub.f32 %v2515, %v2562
        %v2598 = vsub.f32 %v2468, %v2565
        %v2599 = vsub.f32 %v2517, %v2565
        %v2600 = vsub.f32 %v2471, %v2568
        %v2601 = vsub.f32 %v2520, %v2568
        %v2602 = vsub.f32 %v2473, %v2571
        %v2603 = vsub.f32 %v2522, %v2571
        %v2604 = vmul.f32 %v2572, 1.442695
        %v2605 = vpow.pop %v2604
        %v2606 = vmul.f32 %v2573, 1.442695
        %v2607 = vpow.pop %v2606
        %v2608 = vmul.f32 %v2574, 1.442695
        %v2609 = vpow.pop %v2608
        %v2610 = vmul.f32 %v2575, 1.442695
        %v2611 = vpow.pop %v2610
        %v2612 = vmul.f32 %v2576, 1.442695
        %v2613 = vpow.pop %v2612
        %v2614 = vmul.f32 %v2577, 1.442695
        %v2615 = vpow.pop %v2614
        %v2616 = vmul.f32 %v2578, 1.442695
        %v2617 = vpow.pop %v2616
        %v2618 = vmul.f32 %v2579, 1.442695
        %v2619 = vpow.pop %v2618
        %v2620 = vmul.f32 %v2580, 1.442695
        %v2621 = vpow.pop %v2620
        %v2622 = vmul.f32 %v2581, 1.442695
        %v2623 = vpow.pop %v2622
        %v2624 = vmul.f32 %v2582, 1.442695
        %v2625 = vpow.pop %v2624
        %v2626 = vmul.f32 %v2583, 1.442695
        %v2627 = vpow.pop %v2626
        %v2628 = vmul.f32 %v2584, 1.442695
        %v2629 = vpow.pop %v2628
        %v2630 = vmul.f32 %v2585, 1.442695
        %v2631 = vpow.pop %v2630
        %v2632 = vmul.f32 %v2586, 1.442695
        %v2633 = vpow.pop %v2632
        %v2634 = vmul.f32 %v2587, 1.442695
        %v2635 = vpow.pop %v2634
        %v2636 = vmul.f32 %v2588, 1.442695
        %v2637 = vpow.pop %v2636
        %v2638 = vmul.f32 %v2589, 1.442695
        %v2639 = vpow.pop %v2638
        %v2640 = vmul.f32 %v2590, 1.442695
        %v2641 = vpow.pop %v2640
        %v2642 = vmul.f32 %v2591, 1.442695
        %v2643 = vpow.pop %v2642
        %v2644 = vmul.f32 %v2592, 1.442695
        %v2645 = vpow.pop %v2644
        %v2646 = vmul.f32 %v2593, 1.442695
        %v2647 = vpow.pop %v2646
        %v2648 = vmul.f32 %v2594, 1.442695
        %v2649 = vpow.pop %v2648
        %v2650 = vmul.f32 %v2595, 1.442695
        %v2651 = vpow.pop %v2650
        %v2652 = vmul.f32 %v2596, 1.442695
        %v2653 = vpow.pop %v2652
        %v2654 = vmul.f32 %v2597, 1.442695
        %v2655 = vpow.pop %v2654
        %v2656 = vmul.f32 %v2598, 1.442695
        %v2657 = vpow.pop %v2656
        %v2658 = vmul.f32 %v2599, 1.442695
        %v2659 = vpow.pop %v2658
        %v2660 = vmul.f32 %v2600, 1.442695
        %v2661 = vpow.pop %v2660
        %v2662 = vmul.f32 %v2601, 1.442695
        %v2663 = vpow.pop %v2662
        %v2664 = vmul.f32 %v2602, 1.442695
        %v2665 = vpow.pop %v2664
        %v2666 = vmul.f32 %v2603, 1.442695
        %v2667 = vpow.pop %v2666
        %v2668 = vadd.f32 %v2605, %v2607
        %2669 = vadd.xlane.f32.xlu0 %v2668
        %v2670 = vpop.xlane.xlu0 %2669
        %v2671 = vadd.f32 %v2609, %v2611
        %2672 = vadd.xlane.f32.xlu0 %v2671
        %v2673 = vpop.xlane.xlu0 %2672
        %v2674 = vadd.f32 %v2613, %v2615
        %2675 = vadd.xlane.f32.xlu0 %v2674
        %v2676 = vpop.xlane.xlu0 %2675
        %v2677 = vadd.f32 %v2617, %v2619
        %2678 = vadd.xlane.f32.xlu0 %v2677
        %v2679 = vpop.xlane.xlu0 %2678
        %v2680 = vadd.f32 %v2621, %v2623
        %2681 = vadd.xlane.f32.xlu0 %v2680
        %v2682 = vpop.xlane.xlu0 %2681
        %v2683 = vadd.f32 %v2625, %v2627
        %2684 = vadd.xlane.f32.xlu0 %v2683
        %v2685 = vpop.xlane.xlu0 %2684
        %v2686 = vadd.f32 %v2629, %v2631
        %2687 = vadd.xlane.f32.xlu0 %v2686
        %v2688 = vpop.xlane.xlu0 %2687
        %v2689 = vadd.f32 %v2633, %v2635
        %2690 = vadd.xlane.f32.xlu0 %v2689
        %v2691 = vpop.xlane.xlu0 %2690
        %v2692 = vadd.f32 %v2637, %v2639
        %2693 = vadd.xlane.f32.xlu0 %v2692
        %v2694 = vpop.xlane.xlu0 %2693
        %v2695 = vadd.f32 %v2641, %v2643
        %2696 = vadd.xlane.f32.xlu0 %v2695
        %v2697 = vpop.xlane.xlu0 %2696
        %v2698 = vadd.f32 %v2645, %v2647
        %2699 = vadd.xlane.f32.xlu0 %v2698
        %v2700 = vpop.xlane.xlu0 %2699
        %v2701 = vadd.f32 %v2649, %v2651
        %2702 = vadd.xlane.f32.xlu0 %v2701
        %v2703 = vpop.xlane.xlu0 %2702
        %v2704 = vadd.f32 %v2653, %v2655
        %2705 = vadd.xlane.f32.xlu0 %v2704
        %v2706 = vpop.xlane.xlu0 %2705
        %v2707 = vadd.f32 %v2657, %v2659
        %2708 = vadd.xlane.f32.xlu0 %v2707
        %v2709 = vpop.xlane.xlu0 %2708
        %v2710 = vadd.f32 %v2661, %v2663
        %2711 = vadd.xlane.f32.xlu0 %v2710
        %v2712 = vpop.xlane.xlu0 %2711
        %v2713 = vadd.f32 %v2665, %v2667
        %2714 = vadd.xlane.f32.xlu0 %v2713
        %v2715 = vpop.xlane.xlu0 %2714
        %v2716 = vrcp.pop %v2670
        %v2717 = vrcp.pop %v2673
        %v2718 = vrcp.pop %v2676
        %v2719 = vrcp.pop %v2679
        %v2720 = vrcp.pop %v2682
        %v2721 = vrcp.pop %v2685
        %v2722 = vrcp.pop %v2688
        %v2723 = vrcp.pop %v2691
        %v2724 = vrcp.pop %v2694
        %v2725 = vrcp.pop %v2697
        %v2726 = vrcp.pop %v2700
        %v2727 = vrcp.pop %v2703
        %v2728 = vrcp.pop %v2706
        %v2729 = vrcp.pop %v2709
        %v2730 = vrcp.pop %v2712
        %v2731 = vrcp.pop %v2715
        %v2732 = vmul.f32 %v2605, %v2716
        %v2733 = vmul.f32 %v2607, %v2716
        %v2734 = vmul.f32 %v2609, %v2717
        %v2735 = vmul.f32 %v2611, %v2717
        %v2736 = vmul.f32 %v2613, %v2718
        %v2737 = vmul.f32 %v2615, %v2718
        %v2738 = vmul.f32 %v2617, %v2719
        %v2739 = vmul.f32 %v2619, %v2719
        %v2740 = vmul.f32 %v2621, %v2720
        %v2741 = vmul.f32 %v2623, %v2720
        %v2742 = vmul.f32 %v2625, %v2721
        %v2743 = vmul.f32 %v2627, %v2721
        %v2744 = vmul.f32 %v2629, %v2722
        %v2745 = vmul.f32 %v2631, %v2722
        %v2746 = vmul.f32 %v2633, %v2723
        %v2747 = vmul.f32 %v2635, %v2723
        %v2748 = vmul.f32 %v2637, %v2724
        %v2749 = vmul.f32 %v2639, %v2724
        %v2750 = vmul.f32 %v2641, %v2725
        %v2751 = vmul.f32 %v2643, %v2725
        %v2752 = vmul.f32 %v2645, %v2726
        %v2753 = vmul.f32 %v2647, %v2726
        %v2754 = vmul.f32 %v2649, %v2727
        %v2755 = vmul.f32 %v2651, %v2727
        %v2756 = vmul.f32 %v2653, %v2728
        %v2757 = vmul.f32 %v2655, %v2728
        %v2758 = vmul.f32 %v2657, %v2729
        %v2759 = vmul.f32 %v2659, %v2729
        %v2760 = vmul.f32 %v2661, %v2730
        %v2761 = vmul.f32 %v2663, %v2730
        %v2762 = vmul.f32 %v2665, %v2731
        %v2763 = vmul.f32 %v2667, %v2731
        %2764 = vst [vmem:[%s682] sm:$0xff] %v2732
        %2765 = vst [vmem:[%s682 + $0x8] sm:$0xff] %v2733
        %2766 = vst [vmem:[%s682 + $0x10] sm:$0xff] %v2734
        %2767 = vst [vmem:[%s682 + $0x18] sm:$0xff] %v2735
        %2768 = vst [vmem:[%s682 + $0x20] sm:$0xff] %v2736
        %2769 = vst [vmem:[%s682 + $0x28] sm:$0xff] %v2737
        %2770 = vst [vmem:[%s682 + $0x30] sm:$0xff] %v2738
        %2771 = vst [vmem:[%s682 + $0x38] sm:$0xff] %v2739
        %2772 = vst [vmem:[%s682 + $0x40] sm:$0xff] %v2740
        %2773 = vst [vmem:[%s682 + $0x48] sm:$0xff] %v2741
        %2774 = vst [vmem:[%s682 + $0x50] sm:$0xff] %v2742
        %2775 = vst [vmem:[%s682 + $0x58] sm:$0xff] %v2743
        %2776 = vst [vmem:[%s682 + $0x60] sm:$0xff] %v2744
        %2777 = vst [vmem:[%s682 + $0x68] sm:$0xff] %v2745
        %2778 = vst [vmem:[%s682 + $0x70] sm:$0xff] %v2746
        %2779 = vst [vmem:[%s682 + $0x78] sm:$0xff] %v2747
        %2780 = vst [vmem:[%s682 + $0x80] sm:$0xff] %v2748
        %2781 = vst [vmem:[%s682 + $0x88] sm:$0xff] %v2749
        %2782 = vst [vmem:[%s682 + $0x90] sm:$0xff] %v2750
        %2783 = vst [vmem:[%s682 + $0x98] sm:$0xff] %v2751
        %2784 = vst [vmem:[%s682 + $0xa0] sm:$0xff] %v2752
        %2785 = vst [vmem:[%s682 + $0xa8] sm:$0xff] %v2753
        %2786 = vst [vmem:[%s682 + $0xb0] sm:$0xff] %v2754
        %2787 = vst [vmem:[%s682 + $0xb8] sm:$0xff] %v2755
        %2788 = vst [vmem:[%s682 + $0xc0] sm:$0xff] %v2756
        %2789 = vst [vmem:[%s682 + $0xc8] sm:$0xff] %v2757
        %2790 = vst [vmem:[%s682 + $0xd0] sm:$0xff] %v2758
        %2791 = vst [vmem:[%s682 + $0xd8] sm:$0xff] %v2759
        %2792 = vst [vmem:[%s682 + $0xe0] sm:$0xff] %v2760
        %2793 = vst [vmem:[%s682 + $0xe8] sm:$0xff] %v2761
        %2794 = vst [vmem:[%s682 + $0xf0] sm:$0xff] %v2762
        %2795 = vst [vmem:[%s682 + $0xf8] sm:$0xff] %v2763
        %v2796 = vpack.c.bf16 %v2734, %v2732
        %v2797 = vpack.c.bf16 %v2735, %v2733
        %v2798 = vpack.c.bf16 %v2738, %v2736
        %v2799 = vpack.c.bf16 %v2739, %v2737
        %v2800 = vpack.c.bf16 %v2742, %v2740
        %v2801 = vpack.c.bf16 %v2743, %v2741
        %v2802 = vpack.c.bf16 %v2746, %v2744
        %v2803 = vpack.c.bf16 %v2747, %v2745
        %v2804 = vpack.c.bf16 %v2750, %v2748
        %v2805 = vpack.c.bf16 %v2751, %v2749
        %v2806 = vpack.c.bf16 %v2754, %v2752
        %v2807 = vpack.c.bf16 %v2755, %v2753
        %v2808 = vpack.c.bf16 %v2758, %v2756
        %v2809 = vpack.c.bf16 %v2759, %v2757
        %v2810 = vpack.c.bf16 %v2762, %v2760
        %v2811 = vpack.c.bf16 %v2763, %v2761
        %v2812 = vld [vmem:[#allocation4] sm:$0xf]
        %v2813 = vld [vmem:[#allocation4 + $0x4] sm:$0xf]
        %v2814 = vld [vmem:[#allocation4 + $0x8] sm:$0xf]
        %v2815 = vld [vmem:[#allocation4 + $0xc] sm:$0xf]
        %v2816 = vld [vmem:[#allocation4 + $0x10] sm:$0xf]
        %v2817 = vld [vmem:[#allocation4 + $0x14] sm:$0xf]
        %v2818 = vld [vmem:[#allocation4 + $0x18] sm:$0xf]
        %v2819 = vld [vmem:[#allocation4 + $0x1c] sm:$0xf]
        %v2820 = vld [vmem:[#allocation4 + $0x20] sm:$0xf]
        %v2821 = vld [vmem:[#allocation4 + $0x24] sm:$0xf]
        %v2822 = vld [vmem:[#allocation4 + $0x28] sm:$0xf]
        %v2823 = vld [vmem:[#allocation4 + $0x2c] sm:$0xf]
        %v2824 = vld [vmem:[#allocation4 + $0x30] sm:$0xf]
        %v2825 = vld [vmem:[#allocation4 + $0x34] sm:$0xf]
        %v2826 = vld [vmem:[#allocation4 + $0x38] sm:$0xf]
        %v2827 = vld [vmem:[#allocation4 + $0x3c] sm:$0xf]
        %v2828 = vld [vmem:[#allocation4 + $0x40] sm:$0xf]
        %v2829 = vld [vmem:[#allocation4 + $0x44] sm:$0xf]
        %v2830 = vld [vmem:[#allocation4 + $0x48] sm:$0xf]
        %v2831 = vld [vmem:[#allocation4 + $0x4c] sm:$0xf]
        %v2832 = vld [vmem:[#allocation4 + $0x50] sm:$0xf]
        %v2833 = vld [vmem:[#allocation4 + $0x54] sm:$0xf]
        %v2834 = vld [vmem:[#allocation4 + $0x58] sm:$0xf]
        %v2835 = vld [vmem:[#allocation4 + $0x5c] sm:$0xf]
        %v2836 = vld [vmem:[#allocation4 + $0x60] sm:$0xf]
        %v2837 = vld [vmem:[#allocation4 + $0x64] sm:$0xf]
        %v2838 = vld [vmem:[#allocation4 + $0x68] sm:$0xf]
        %v2839 = vld [vmem:[#allocation4 + $0x6c] sm:$0xf]
        %v2840 = vld [vmem:[#allocation4 + $0x70] sm:$0xf]
        %v2841 = vld [vmem:[#allocation4 + $0x74] sm:$0xf]
        %v2842 = vld [vmem:[#allocation4 + $0x78] sm:$0xf]
        %v2843 = vld [vmem:[#allocation4 + $0x7c] sm:$0xf]
        %v2876 = vunpack.c.l.b16 %v2812
        %v2877 = vunpack.c.l.b16 %v2813
        %v2878 = vunpack.c.l.b16 %v2814
        %v2879 = vunpack.c.l.b16 %v2815
        %v2880 = vunpack.c.l.b16 %v2816
        %v2881 = vunpack.c.l.b16 %v2817
        %v2882 = vunpack.c.l.b16 %v2818
        %v2883 = vunpack.c.l.b16 %v2819
        %v2884 = vunpack.c.l.b16 %v2820
        %v2885 = vunpack.c.l.b16 %v2821
        %v2886 = vunpack.c.l.b16 %v2822
        %v2887 = vunpack.c.l.b16 %v2823
        %v2888 = vunpack.c.l.b16 %v2824
        %v2889 = vunpack.c.l.b16 %v2825
        %v2890 = vunpack.c.l.b16 %v2826
        %v2891 = vunpack.c.l.b16 %v2827
        %v2892 = vunpack.c.l.b16 %v2828
        %v2893 = vunpack.c.l.b16 %v2829
        %v2894 = vunpack.c.l.b16 %v2830
        %v2895 = vunpack.c.l.b16 %v2831
        %v2896 = vunpack.c.l.b16 %v2832
        %v2897 = vunpack.c.l.b16 %v2833
        %v2898 = vunpack.c.l.b16 %v2834
        %v2899 = vunpack.c.l.b16 %v2835
        %v2900 = vunpack.c.l.b16 %v2836
        %v2901 = vunpack.c.l.b16 %v2837
        %v2902 = vunpack.c.l.b16 %v2838
        %v2903 = vunpack.c.l.b16 %v2839
        %v2904 = vunpack.c.l.b16 %v2840
        %v2905 = vunpack.c.l.b16 %v2841
        %v2906 = vunpack.c.l.b16 %v2842
        %v2907 = vunpack.c.l.b16 %v2843
        %v2908 = vpack.c.b16 %v2877, %v2876
        %v2909 = vpack.c.b16 %v2879, %v2878
        %v2910 = vpack.c.b16 %v2881, %v2880
        %v2911 = vpack.c.b16 %v2883, %v2882
        %v2912 = vpack.c.b16 %v2885, %v2884
        %v2913 = vpack.c.b16 %v2887, %v2886
        %v2914 = vpack.c.b16 %v2889, %v2888
        %v2915 = vpack.c.b16 %v2891, %v2890
        %v2916 = vpack.c.b16 %v2893, %v2892
        %v2917 = vpack.c.b16 %v2895, %v2894
        %v2918 = vpack.c.b16 %v2897, %v2896
        %v2919 = vpack.c.b16 %v2899, %v2898
        %v2920 = vpack.c.b16 %v2901, %v2900
        %v2921 = vpack.c.b16 %v2903, %v2902
        %v2922 = vpack.c.b16 %v2905, %v2904
        %v2923 = vpack.c.b16 %v2907, %v2906
        %2940 = vmatpush.bf16.msra.mxu0 %v2915
        %2941 = vmatpush.bf16.msra.mxu0 %v2914
        %2942 = vmatpush.bf16.msra.mxu0 %v2913
        %2943 = vmatpush.bf16.msra.mxu0 %v2912
        %2944 = vmatpush.bf16.msra.mxu0 %v2911
        %2945 = vmatpush.bf16.msra.mxu0 %v2910
        %2946 = vmatpush.bf16.msra.mxu0 %v2909
        %2947 = vmatpush.bf16.msra.mxu0 %v2908
        %2948 = vmatmul.bf16.gmra.mxu0 %v2796
        %v2949 = vpop.f32.mrf.mxu0
        %v2950 = vadd.f32 0.0, %v2949
        %v2951 = vpop.f32.mrf.mxu0
        %v2952 = vadd.f32 0.0, %v2951
        %2953 = vmatmul.bf16.gmra.mxu0 %v2798
        %v2954 = vpop.f32.mrf.mxu0
        %v2955 = vadd.f32 0.0, %v2954
        %v2956 = vpop.f32.mrf.mxu0
        %v2957 = vadd.f32 0.0, %v2956
        %2958 = vmatmul.bf16.gmra.mxu0 %v2800
        %v2959 = vpop.f32.mrf.mxu0
        %v2960 = vadd.f32 0.0, %v2959
        %v2961 = vpop.f32.mrf.mxu0
        %v2962 = vadd.f32 0.0, %v2961
        %2963 = vmatmul.bf16.gmra.mxu0 %v2802
        %v2964 = vpop.f32.mrf.mxu0
        %v2965 = vadd.f32 0.0, %v2964
        %v2966 = vpop.f32.mrf.mxu0
        %v2967 = vadd.f32 0.0, %v2966
        %2968 = vmatmul.bf16.gmra.mxu0 %v2804
        %v2969 = vpop.f32.mrf.mxu0
        %v2970 = vadd.f32 0.0, %v2969
        %v2971 = vpop.f32.mrf.mxu0
        %v2972 = vadd.f32 0.0, %v2971
        %2973 = vmatmul.bf16.gmra.mxu0 %v2806
        %v2974 = vpop.f32.mrf.mxu0
        %v2975 = vadd.f32 0.0, %v2974
        %v2976 = vpop.f32.mrf.mxu0
        %v2977 = vadd.f32 0.0, %v2976
        %2978 = vmatmul.bf16.gmra.mxu0 %v2808
        %v2979 = vpop.f32.mrf.mxu0
        %v2980 = vadd.f32 0.0, %v2979
        %v2981 = vpop.f32.mrf.mxu0
        %v2982 = vadd.f32 0.0, %v2981
        %2983 = vmatmul.bf16.gmra.mxu0 %v2810
        %v2984 = vpop.f32.mrf.mxu0
        %v2985 = vadd.f32 0.0, %v2984
        %v2986 = vpop.f32.mrf.mxu0
        %v2987 = vadd.f32 0.0, %v2986
        %2988 = vdwg.mxu0
        %2989 = vmatpush.bf16.msra.mxu0 %v2923
        %2990 = vmatpush.bf16.msra.mxu0 %v2922
        %2991 = vmatpush.bf16.msra.mxu0 %v2921
        %2992 = vmatpush.bf16.msra.mxu0 %v2920
        %2993 = vmatpush.bf16.msra.mxu0 %v2919
        %2994 = vmatpush.bf16.msra.mxu0 %v2918
        %2995 = vmatpush.bf16.msra.mxu0 %v2917
        %2996 = vmatpush.bf16.msra.mxu0 %v2916
        %2997 = vmatmul.bf16.gmra.mxu0 %v2797
        %v2998 = vpop.f32.mrf.mxu0
        %v2999 = vadd.f32 %v2950, %v2998
        %v3000 = vpop.f32.mrf.mxu0
        %v3001 = vadd.f32 %v2952, %v3000
        %3002 = vmatmul.bf16.gmra.mxu0 %v2799
        %v3003 = vpop.f32.mrf.mxu0
        %v3004 = vadd.f32 %v2955, %v3003
        %v3005 = vpop.f32.mrf.mxu0
        %v3006 = vadd.f32 %v2957, %v3005
        %3007 = vmatmul.bf16.gmra.mxu0 %v2801
        %v3008 = vpop.f32.mrf.mxu0
        %v3009 = vadd.f32 %v2960, %v3008
        %v3010 = vpop.f32.mrf.mxu0
        %v3011 = vadd.f32 %v2962, %v3010
        %3012 = vmatmul.bf16.gmra.mxu0 %v2803
        %v3013 = vpop.f32.mrf.mxu0
        %v3014 = vadd.f32 %v2965, %v3013
        %v3015 = vpop.f32.mrf.mxu0
        %v3016 = vadd.f32 %v2967, %v3015
        %3017 = vmatmul.bf16.gmra.mxu0 %v2805
        %v3018 = vpop.f32.mrf.mxu0
        %v3019 = vadd.f32 %v2970, %v3018
        %v3020 = vpop.f32.mrf.mxu0
        %v3021 = vadd.f32 %v2972, %v3020
        %3022 = vmatmul.bf16.gmra.mxu0 %v2807
        %v3023 = vpop.f32.mrf.mxu0
        %v3024 = vadd.f32 %v2975, %v3023
        %v3025 = vpop.f32.mrf.mxu0
        %v3026 = vadd.f32 %v2977, %v3025
        %3027 = vmatmul.bf16.gmra.mxu0 %v2809
        %v3028 = vpop.f32.mrf.mxu0
        %v3029 = vadd.f32 %v2980, %v3028
        %v3030 = vpop.f32.mrf.mxu0
        %v3031 = vadd.f32 %v2982, %v3030
        %3032 = vmatmul.bf16.gmra.mxu0 %v2811
        %v3033 = vpop.f32.mrf.mxu0
        %v3034 = vadd.f32 %v2985, %v3033
        %v3035 = vpop.f32.mrf.mxu0
        %v3036 = vadd.f32 %v2987, %v3035
        %3037 = vdwg.mxu0
        %v3038 = vpack.c.bf16 %v3001, %v2999
        %v3039 = vpack.c.bf16 %v3006, %v3004
        %v3040 = vpack.c.bf16 %v3011, %v3009
        %v3041 = vpack.c.bf16 %v3016, %v3014
        %v3042 = vpack.c.bf16 %v3021, %v3019
        %v3043 = vpack.c.bf16 %v3026, %v3024
        %v3044 = vpack.c.bf16 %v3031, %v3029
        %v3045 = vpack.c.bf16 %v3036, %v3034
        %v3046 = vld [vmem:[#allocation14] sm:$0xf]
        %v3047 = vld [vmem:[#allocation14 + $0x4] sm:$0xf]
        %v3048 = vld [vmem:[#allocation14 + $0x8] sm:$0xf]
        %v3049 = vld [vmem:[#allocation14 + $0xc] sm:$0xf]
        %v3050 = vld [vmem:[#allocation14 + $0x10] sm:$0xf]
        %v3051 = vld [vmem:[#allocation14 + $0x14] sm:$0xf]
        %v3052 = vld [vmem:[#allocation14 + $0x18] sm:$0xf]
        %v3053 = vld [vmem:[#allocation14 + $0x1c] sm:$0xf]
        %v3054 = vld [vmem:[#allocation14 + $0x20] sm:$0xf]
        %v3055 = vld [vmem:[#allocation14 + $0x24] sm:$0xf]
        %v3056 = vld [vmem:[#allocation14 + $0x28] sm:$0xf]
        %v3057 = vld [vmem:[#allocation14 + $0x2c] sm:$0xf]
        %v3058 = vld [vmem:[#allocation14 + $0x30] sm:$0xf]
        %v3059 = vld [vmem:[#allocation14 + $0x34] sm:$0xf]
        %v3060 = vld [vmem:[#allocation14 + $0x38] sm:$0xf]
        %v3061 = vld [vmem:[#allocation14 + $0x3c] sm:$0xf]
        %v3062 = vld [vmem:[#allocation16] sm:$0x1]
        %v3064 = vperm.slane %v3062, 0
        %v3082 = vunpack.c.l.b16 %v3046
        %v3083 = vunpack.c.l.b16 %v3047
        %v3084 = vunpack.c.l.b16 %v3048
        %v3085 = vunpack.c.l.b16 %v3049
        %v3086 = vunpack.c.l.b16 %v3050
        %v3087 = vunpack.c.l.b16 %v3051
        %v3088 = vunpack.c.l.b16 %v3052
        %v3089 = vunpack.c.l.b16 %v3053
        %v3090 = vunpack.c.l.b16 %v3054
        %v3091 = vunpack.c.l.b16 %v3055
        %v3092 = vunpack.c.l.b16 %v3056
        %v3093 = vunpack.c.l.b16 %v3057
        %v3094 = vunpack.c.l.b16 %v3058
        %v3095 = vunpack.c.l.b16 %v3059
        %v3096 = vunpack.c.l.b16 %v3060
        %v3097 = vunpack.c.l.b16 %v3061
        %v3098 = vpack.c.b16 %v3083, %v3082
        %v3099 = vpack.c.b16 %v3085, %v3084
        %v3100 = vpack.c.b16 %v3087, %v3086
        %v3101 = vpack.c.b16 %v3089, %v3088
        %v3102 = vpack.c.b16 %v3091, %v3090
        %v3103 = vpack.c.b16 %v3093, %v3092
        %v3104 = vpack.c.b16 %v3095, %v3094
        %v3105 = vpack.c.b16 %v3097, %v3096
        %3114 = vmatpush.bf16.msra.mxu0 %v3105
        %3115 = vmatpush.bf16.msra.mxu0 %v3104
        %3116 = vmatpush.bf16.msra.mxu0 %v3103
        %3117 = vmatpush.bf16.msra.mxu0 %v3102
        %3118 = vmatpush.bf16.msra.mxu0 %v3101
        %3119 = vmatpush.bf16.msra.mxu0 %v3100
        %3120 = vmatpush.bf16.msra.mxu0 %v3099
        %3121 = vmatpush.bf16.msra.mxu0 %v3098
        %3122 = vmatmul.bf16.gmra.mxu0 %v3038
        %v3123 = vpop.f32.mrf.mxu0
        %v3124 = vadd.f32 %v3064, %v3123
        %v3125 = vpop.f32.mrf.mxu0
        %v3126 = vadd.f32 %v3064, %v3125
        %3127 = vmatmul.bf16.gmra.mxu0 %v3039
        %v3128 = vpop.f32.mrf.mxu0
        %v3129 = vadd.f32 %v3064, %v3128
        %v3130 = vpop.f32.mrf.mxu0
        %v3131 = vadd.f32 %v3064, %v3130
        %3132 = vmatmul.bf16.gmra.mxu0 %v3040
        %v3133 = vpop.f32.mrf.mxu0
        %v3134 = vadd.f32 %v3064, %v3133
        %v3135 = vpop.f32.mrf.mxu0
        %v3136 = vadd.f32 %v3064, %v3135
        %3137 = vmatmul.bf16.gmra.mxu0 %v3041
        %v3138 = vpop.f32.mrf.mxu0
        %v3139 = vadd.f32 %v3064, %v3138
        %v3140 = vpop.f32.mrf.mxu0
        %v3141 = vadd.f32 %v3064, %v3140
        %3142 = vmatmul.bf16.gmra.mxu0 %v3042
        %v3143 = vpop.f32.mrf.mxu0
        %v3144 = vadd.f32 %v3064, %v3143
        %v3145 = vpop.f32.mrf.mxu0
        %v3146 = vadd.f32 %v3064, %v3145
        %3147 = vmatmul.bf16.gmra.mxu0 %v3043
        %v3148 = vpop.f32.mrf.mxu0
        %v3149 = vadd.f32 %v3064, %v3148
        %v3150 = vpop.f32.mrf.mxu0
        %v3151 = vadd.f32 %v3064, %v3150
        %3152 = vmatmul.bf16.gmra.mxu0 %v3044
        %v3153 = vpop.f32.mrf.mxu0
        %v3154 = vadd.f32 %v3064, %v3153
        %v3155 = vpop.f32.mrf.mxu0
        %v3156 = vadd.f32 %v3064, %v3155
        %3157 = vmatmul.bf16.gmra.mxu0 %v3045
        %v3158 = vpop.f32.mrf.mxu0
        %v3159 = vadd.f32 %v3064, %v3158
        %v3160 = vpop.f32.mrf.mxu0
        %v3161 = vadd.f32 %v3064, %v3160
        %3162 = vdwg.mxu0
        %v3163 = vadd.f32 %v2214, %v3124
        %v3164 = vadd.f32 %v2215, %v3126
        %v3165 = vadd.f32 %v2216, %v3129
        %v3166 = vadd.f32 %v2217, %v3131
        %v3167 = vadd.f32 %v2218, %v3134
        %v3168 = vadd.f32 %v2219, %v3136
        %v3169 = vadd.f32 %v2220, %v3139
        %v3170 = vadd.f32 %v2221, %v3141
        %v3171 = vadd.f32 %v2222, %v3144
        %v3172 = vadd.f32 %v2223, %v3146
        %v3173 = vadd.f32 %v2224, %v3149
        %v3174 = vadd.f32 %v2225, %v3151
        %v3175 = vadd.f32 %v2226, %v3154
        %v3176 = vadd.f32 %v2227, %v3156
        %v3177 = vadd.f32 %v2228, %v3159
        %v3178 = vadd.f32 %v2229, %v3161
        %v3179 = vld [vmem:[#allocation17] sm:$0x1]
        %v3180 = vld [vmem:[%s9] sm:$0x1]
        %3181 = vadd.xlane.f32.xlu0 %v3163
        %v3182 = vpop.xlane.xlu0 %3181
        %3183 = vadd.xlane.f32.xlu0 %v3164
        %v3184 = vpop.xlane.xlu0 %3183
        %3185 = vadd.xlane.f32.xlu0 %v3165
        %v3186 = vpop.xlane.xlu0 %3185
        %3187 = vadd.xlane.f32.xlu0 %v3166
        %v3188 = vpop.xlane.xlu0 %3187
        %3189 = vadd.xlane.f32.xlu0 %v3167
        %v3190 = vpop.xlane.xlu0 %3189
        %3191 = vadd.xlane.f32.xlu0 %v3168
        %v3192 = vpop.xlane.xlu0 %3191
        %3193 = vadd.xlane.f32.xlu0 %v3169
        %v3194 = vpop.xlane.xlu0 %3193
        %3195 = vadd.xlane.f32.xlu0 %v3170
        %v3196 = vpop.xlane.xlu0 %3195
        %3197 = vadd.xlane.f32.xlu0 %v3171
        %v3198 = vpop.xlane.xlu0 %3197
        %3199 = vadd.xlane.f32.xlu0 %v3172
        %v3200 = vpop.xlane.xlu0 %3199
        %3201 = vadd.xlane.f32.xlu0 %v3173
        %v3202 = vpop.xlane.xlu0 %3201
        %3203 = vadd.xlane.f32.xlu0 %v3174
        %v3204 = vpop.xlane.xlu0 %3203
        %3205 = vadd.xlane.f32.xlu0 %v3175
        %v3206 = vpop.xlane.xlu0 %3205
        %3207 = vadd.xlane.f32.xlu0 %v3176
        %v3208 = vpop.xlane.xlu0 %3207
        %3209 = vadd.xlane.f32.xlu0 %v3177
        %v3210 = vpop.xlane.xlu0 %3209
        %3211 = vadd.xlane.f32.xlu0 %v3178
        %v3212 = vpop.xlane.xlu0 %3211
        %v3213 = vrcp.pop 128.0
        %v3214 = vmul.f32 128.0, %v3213
        %v3215 = vsub.f32 1.0, %v3214
        %v3216 = vmul.f32 %v3213, %v3215
        %v3217 = vadd.f32 %v3213, %v3216
        %vm3218 = vweird.f32 %v3213
        %v3219 = vsel %vm3218, %v3213, %v3217
        %v3220 = vmul.f32 %v3182, %v3219
        %v3221 = vmul.f32 %v3184, %v3219
        %v3222 = vmul.f32 %v3186, %v3219
        %v3223 = vmul.f32 %v3188, %v3219
        %v3224 = vmul.f32 %v3190, %v3219
        %v3225 = vmul.f32 %v3192, %v3219
        %v3226 = vmul.f32 %v3194, %v3219
        %v3227 = vmul.f32 %v3196, %v3219
        %v3228 = vmul.f32 %v3198, %v3219
        %v3229 = vmul.f32 %v3200, %v3219
        %v3230 = vmul.f32 %v3202, %v3219
        %v3231 = vmul.f32 %v3204, %v3219
        %v3232 = vmul.f32 %v3206, %v3219
        %v3233 = vmul.f32 %v3208, %v3219
        %v3234 = vmul.f32 %v3210, %v3219
        %v3235 = vmul.f32 %v3212, %v3219
        %v3236 = vsub.f32 %v3163, %v3220
        %v3237 = vsub.f32 %v3164, %v3221
        %v3238 = vsub.f32 %v3165, %v3222
        %v3239 = vsub.f32 %v3166, %v3223
        %v3240 = vsub.f32 %v3167, %v3224
        %v3241 = vsub.f32 %v3168, %v3225
        %v3242 = vsub.f32 %v3169, %v3226
        %v3243 = vsub.f32 %v3170, %v3227
        %v3244 = vsub.f32 %v3171, %v3228
        %v3245 = vsub.f32 %v3172, %v3229
        %v3246 = vsub.f32 %v3173, %v3230
        %v3247 = vsub.f32 %v3174, %v3231
        %v3248 = vsub.f32 %v3175, %v3232
        %v3249 = vsub.f32 %v3176, %v3233
        %v3250 = vsub.f32 %v3177, %v3234
        %v3251 = vsub.f32 %v3178, %v3235
        %v3252 = vmul.f32 %v3236, %v3236
        %v3253 = vmul.f32 %v3237, %v3237
        %v3254 = vmul.f32 %v3238, %v3238
        %v3255 = vmul.f32 %v3239, %v3239
        %v3256 = vmul.f32 %v3240, %v3240
        %v3257 = vmul.f32 %v3241, %v3241
        %v3258 = vmul.f32 %v3242, %v3242
        %v3259 = vmul.f32 %v3243, %v3243
        %v3260 = vmul.f32 %v3244, %v3244
        %v3261 = vmul.f32 %v3245, %v3245
        %v3262 = vmul.f32 %v3246, %v3246
        %v3263 = vmul.f32 %v3247, %v3247
        %v3264 = vmul.f32 %v3248, %v3248
        %v3265 = vmul.f32 %v3249, %v3249
        %v3266 = vmul.f32 %v3250, %v3250
        %v3267 = vmul.f32 %v3251, %v3251
        %3268 = vadd.xlane.f32.xlu0 %v3252
        %v3269 = vpop.xlane.xlu0 %3268
        %3270 = vadd.xlane.f32.xlu0 %v3253
        %v3271 = vpop.xlane.xlu0 %3270
        %3272 = vadd.xlane.f32.xlu0 %v3254
        %v3273 = vpop.xlane.xlu0 %3272
        %3274 = vadd.xlane.f32.xlu0 %v3255
        %v3275 = vpop.xlane.xlu0 %3274
        %3276 = vadd.xlane.f32.xlu0 %v3256
        %v3277 = vpop.xlane.xlu0 %3276
        %3278 = vadd.xlane.f32.xlu0 %v3257
        %v3279 = vpop.xlane.xlu0 %3278
        %3280 = vadd.xlane.f32.xlu0 %v3258
        %v3281 = vpop.xlane.xlu0 %3280
        %3282 = vadd.xlane.f32.xlu0 %v3259
        %v3283 = vpop.xlane.xlu0 %3282
        %3284 = vadd.xlane.f32.xlu0 %v3260
        %v3285 = vpop.xlane.xlu0 %3284
        %3286 = vadd.xlane.f32.xlu0 %v3261
        %v3287 = vpop.xlane.xlu0 %3286
        %3288 = vadd.xlane.f32.xlu0 %v3262
        %v3289 = vpop.xlane.xlu0 %3288
        %3290 = vadd.xlane.f32.xlu0 %v3263
        %v3291 = vpop.xlane.xlu0 %3290
        %3292 = vadd.xlane.f32.xlu0 %v3264
        %v3293 = vpop.xlane.xlu0 %3292
        %3294 = vadd.xlane.f32.xlu0 %v3265
        %v3295 = vpop.xlane.xlu0 %3294
        %3296 = vadd.xlane.f32.xlu0 %v3266
        %v3297 = vpop.xlane.xlu0 %3296
        %3298 = vadd.xlane.f32.xlu0 %v3267
        %v3299 = vpop.xlane.xlu0 %3298
        %v3300 = vmul.f32 %v3269, %v3219
        %v3301 = vmul.f32 %v3271, %v3219
        %v3302 = vmul.f32 %v3273, %v3219
        %v3303 = vmul.f32 %v3275, %v3219
        %v3304 = vmul.f32 %v3277, %v3219
        %v3305 = vmul.f32 %v3279, %v3219
        %v3306 = vmul.f32 %v3281, %v3219
        %v3307 = vmul.f32 %v3283, %v3219
        %v3308 = vmul.f32 %v3285, %v3219
        %v3309 = vmul.f32 %v3287, %v3219
        %v3310 = vmul.f32 %v3289, %v3219
        %v3311 = vmul.f32 %v3291, %v3219
        %v3312 = vmul.f32 %v3293, %v3219
        %v3313 = vmul.f32 %v3295, %v3219
        %v3314 = vmul.f32 %v3297, %v3219
        %v3315 = vmul.f32 %v3299, %v3219
        %v3316 = vadd.f32 %v3300, 1e-05
        %v3317 = vadd.f32 %v3301, 1e-05
        %v3318 = vadd.f32 %v3302, 1e-05
        %v3319 = vadd.f32 %v3303, 1e-05
        %v3320 = vadd.f32 %v3304, 1e-05
        %v3321 = vadd.f32 %v3305, 1e-05
        %v3322 = vadd.f32 %v3306, 1e-05
        %v3323 = vadd.f32 %v3307, 1e-05
        %v3324 = vadd.f32 %v3308, 1e-05
        %v3325 = vadd.f32 %v3309, 1e-05
        %v3326 = vadd.f32 %v3310, 1e-05
        %v3327 = vadd.f32 %v3311, 1e-05
        %v3328 = vadd.f32 %v3312, 1e-05
        %v3329 = vadd.f32 %v3313, 1e-05
        %v3330 = vadd.f32 %v3314, 1e-05
        %v3331 = vadd.f32 %v3315, 1e-05
        %v3332 = vrsqrt.pop %v3316
        %v3333 = vmul.f32 %v3332, %v3316
        %v3334 = vmul.f32 %v3333, %v3332
        %v3335 = vmul.f32 0.5, %v3334
        %v3336 = vsub.f32 1.5, %v3335
        %v3337 = vmul.f32 %v3332, %v3336
        %vm3338 = vweird.f32 %v3316
        %vm3339 = vweird.f32 %v3332
        %vm3340 = vmor %vm3338, %vm3339
        %v3341 = vsel %vm3340, %v3332, %v3337
        %v3342 = vrsqrt.pop %v3317
        %v3343 = vmul.f32 %v3342, %v3317
        %v3344 = vmul.f32 %v3343, %v3342
        %v3345 = vmul.f32 0.5, %v3344
        %v3346 = vsub.f32 1.5, %v3345
        %v3347 = vmul.f32 %v3342, %v3346
        %vm3348 = vweird.f32 %v3317
        %vm3349 = vweird.f32 %v3342
        %vm3350 = vmor %vm3348, %vm3349
        %v3351 = vsel %vm3350, %v3342, %v3347
        %v3352 = vrsqrt.pop %v3318
        %v3353 = vmul.f32 %v3352, %v3318
        %v3354 = vmul.f32 %v3353, %v3352
        %v3355 = vmul.f32 0.5, %v3354
        %v3356 = vsub.f32 1.5, %v3355
        %v3357 = vmul.f32 %v3352, %v3356
        %vm3358 = vweird.f32 %v3318
        %vm3359 = vweird.f32 %v3352
        %vm3360 = vmor %vm3358, %vm3359
        %v3361 = vsel %vm3360, %v3352, %v3357
        %v3362 = vrsqrt.pop %v3319
        %v3363 = vmul.f32 %v3362, %v3319
        %v3364 = vmul.f32 %v3363, %v3362
        %v3365 = vmul.f32 0.5, %v3364
        %v3366 = vsub.f32 1.5, %v3365
        %v3367 = vmul.f32 %v3362, %v3366
        %vm3368 = vweird.f32 %v3319
        %vm3369 = vweird.f32 %v3362
        %vm3370 = vmor %vm3368, %vm3369
        %v3371 = vsel %vm3370, %v3362, %v3367
        %v3372 = vrsqrt.pop %v3320
        %v3373 = vmul.f32 %v3372, %v3320
        %v3374 = vmul.f32 %v3373, %v3372
        %v3375 = vmul.f32 0.5, %v3374
        %v3376 = vsub.f32 1.5, %v3375
        %v3377 = vmul.f32 %v3372, %v3376
        %vm3378 = vweird.f32 %v3320
        %vm3379 = vweird.f32 %v3372
        %vm3380 = vmor %vm3378, %vm3379
        %v3381 = vsel %vm3380, %v3372, %v3377
        %v3382 = vrsqrt.pop %v3321
        %v3383 = vmul.f32 %v3382, %v3321
        %v3384 = vmul.f32 %v3383, %v3382
        %v3385 = vmul.f32 0.5, %v3384
        %v3386 = vsub.f32 1.5, %v3385
        %v3387 = vmul.f32 %v3382, %v3386
        %vm3388 = vweird.f32 %v3321
        %vm3389 = vweird.f32 %v3382
        %vm3390 = vmor %vm3388, %vm3389
        %v3391 = vsel %vm3390, %v3382, %v3387
        %v3392 = vrsqrt.pop %v3322
        %v3393 = vmul.f32 %v3392, %v3322
        %v3394 = vmul.f32 %v3393, %v3392
        %v3395 = vmul.f32 0.5, %v3394
        %v3396 = vsub.f32 1.5, %v3395
        %v3397 = vmul.f32 %v3392, %v3396
        %vm3398 = vweird.f32 %v3322
        %vm3399 = vweird.f32 %v3392
        %vm3400 = vmor %vm3398, %vm3399
        %v3401 = vsel %vm3400, %v3392, %v3397
        %v3402 = vrsqrt.pop %v3323
        %v3403 = vmul.f32 %v3402, %v3323
        %v3404 = vmul.f32 %v3403, %v3402
        %v3405 = vmul.f32 0.5, %v3404
        %v3406 = vsub.f32 1.5, %v3405
        %v3407 = vmul.f32 %v3402, %v3406
        %vm3408 = vweird.f32 %v3323
        %vm3409 = vweird.f32 %v3402
        %vm3410 = vmor %vm3408, %vm3409
        %v3411 = vsel %vm3410, %v3402, %v3407
        %v3412 = vrsqrt.pop %v3324
        %v3413 = vmul.f32 %v3412, %v3324
        %v3414 = vmul.f32 %v3413, %v3412
        %v3415 = vmul.f32 0.5, %v3414
        %v3416 = vsub.f32 1.5, %v3415
        %v3417 = vmul.f32 %v3412, %v3416
        %vm3418 = vweird.f32 %v3324
        %vm3419 = vweird.f32 %v3412
        %vm3420 = vmor %vm3418, %vm3419
        %v3421 = vsel %vm3420, %v3412, %v3417
        %v3422 = vrsqrt.pop %v3325
        %v3423 = vmul.f32 %v3422, %v3325
        %v3424 = vmul.f32 %v3423, %v3422
        %v3425 = vmul.f32 0.5, %v3424
        %v3426 = vsub.f32 1.5, %v3425
        %v3427 = vmul.f32 %v3422, %v3426
        %vm3428 = vweird.f32 %v3325
        %vm3429 = vweird.f32 %v3422
        %vm3430 = vmor %vm3428, %vm3429
        %v3431 = vsel %vm3430, %v3422, %v3427
        %v3432 = vrsqrt.pop %v3326
        %v3433 = vmul.f32 %v3432, %v3326
        %v3434 = vmul.f32 %v3433, %v3432
        %v3435 = vmul.f32 0.5, %v3434
        %v3436 = vsub.f32 1.5, %v3435
        %v3437 = vmul.f32 %v3432, %v3436
        %vm3438 = vweird.f32 %v3326
        %vm3439 = vweird.f32 %v3432
        %vm3440 = vmor %vm3438, %vm3439
        %v3441 = vsel %vm3440, %v3432, %v3437
        %v3442 = vrsqrt.pop %v3327
        %v3443 = vmul.f32 %v3442, %v3327
        %v3444 = vmul.f32 %v3443, %v3442
        %v3445 = vmul.f32 0.5, %v3444
        %v3446 = vsub.f32 1.5, %v3445
        %v3447 = vmul.f32 %v3442, %v3446
        %vm3448 = vweird.f32 %v3327
        %vm3449 = vweird.f32 %v3442
        %vm3450 = vmor %vm3448, %vm3449
        %v3451 = vsel %vm3450, %v3442, %v3447
        %v3452 = vrsqrt.pop %v3328
        %v3453 = vmul.f32 %v3452, %v3328
        %v3454 = vmul.f32 %v3453, %v3452
        %v3455 = vmul.f32 0.5, %v3454
        %v3456 = vsub.f32 1.5, %v3455
        %v3457 = vmul.f32 %v3452, %v3456
        %vm3458 = vweird.f32 %v3328
        %vm3459 = vweird.f32 %v3452
        %vm3460 = vmor %vm3458, %vm3459
        %v3461 = vsel %vm3460, %v3452, %v3457
        %v3462 = vrsqrt.pop %v3329
        %v3463 = vmul.f32 %v3462, %v3329
        %v3464 = vmul.f32 %v3463, %v3462
        %v3465 = vmul.f32 0.5, %v3464
        %v3466 = vsub.f32 1.5, %v3465
        %v3467 = vmul.f32 %v3462, %v3466
        %vm3468 = vweird.f32 %v3329
        %vm3469 = vweird.f32 %v3462
        %vm3470 = vmor %vm3468, %vm3469
        %v3471 = vsel %vm3470, %v3462, %v3467
        %v3472 = vrsqrt.pop %v3330
        %v3473 = vmul.f32 %v3472, %v3330
        %v3474 = vmul.f32 %v3473, %v3472
        %v3475 = vmul.f32 0.5, %v3474
        %v3476 = vsub.f32 1.5, %v3475
        %v3477 = vmul.f32 %v3472, %v3476
        %vm3478 = vweird.f32 %v3330
        %vm3479 = vweird.f32 %v3472
        %vm3480 = vmor %vm3478, %vm3479
        %v3481 = vsel %vm3480, %v3472, %v3477
        %v3482 = vrsqrt.pop %v3331
        %v3483 = vmul.f32 %v3482, %v3331
        %v3484 = vmul.f32 %v3483, %v3482
        %v3485 = vmul.f32 0.5, %v3484
        %v3486 = vsub.f32 1.5, %v3485
        %v3487 = vmul.f32 %v3482, %v3486
        %vm3488 = vweird.f32 %v3331
        %vm3489 = vweird.f32 %v3482
        %vm3490 = vmor %vm3488, %vm3489
        %v3491 = vsel %vm3490, %v3482, %v3487
        %v3492 = vmul.f32 %v3236, %v3341
        %v3493 = vmul.f32 %v3237, %v3351
        %v3494 = vmul.f32 %v3238, %v3361
        %v3495 = vmul.f32 %v3239, %v3371
        %v3496 = vmul.f32 %v3240, %v3381
        %v3497 = vmul.f32 %v3241, %v3391
        %v3498 = vmul.f32 %v3242, %v3401
        %v3499 = vmul.f32 %v3243, %v3411
        %v3500 = vmul.f32 %v3244, %v3421
        %v3501 = vmul.f32 %v3245, %v3431
        %v3502 = vmul.f32 %v3246, %v3441
        %v3503 = vmul.f32 %v3247, %v3451
        %v3504 = vmul.f32 %v3248, %v3461
        %v3505 = vmul.f32 %v3249, %v3471
        %v3506 = vmul.f32 %v3250, %v3481
        %v3507 = vmul.f32 %v3251, %v3491
        %v3509 = vperm.slane %v3179, 0
        %v3511 = vmul.f32 %v3492, %v3509
        %v3512 = vmul.f32 %v3493, %v3509
        %v3513 = vmul.f32 %v3494, %v3509
        %v3514 = vmul.f32 %v3495, %v3509
        %v3515 = vmul.f32 %v3496, %v3509
        %v3516 = vmul.f32 %v3497, %v3509
        %v3517 = vmul.f32 %v3498, %v3509
        %v3518 = vmul.f32 %v3499, %v3509
        %v3519 = vmul.f32 %v3500, %v3509
        %v3520 = vmul.f32 %v3501, %v3509
        %v3521 = vmul.f32 %v3502, %v3509
        %v3522 = vmul.f32 %v3503, %v3509
        %v3523 = vmul.f32 %v3504, %v3509
        %v3524 = vmul.f32 %v3505, %v3509
        %v3525 = vmul.f32 %v3506, %v3509
        %v3526 = vmul.f32 %v3507, %v3509
        %v3528 = vperm.slane %v3180, 0
        %v3530 = vadd.f32 %v3511, %v3528
        %v3531 = vadd.f32 %v3512, %v3528
        %v3532 = vadd.f32 %v3513, %v3528
        %v3533 = vadd.f32 %v3514, %v3528
        %v3534 = vadd.f32 %v3515, %v3528
        %v3535 = vadd.f32 %v3516, %v3528
        %v3536 = vadd.f32 %v3517, %v3528
        %v3537 = vadd.f32 %v3518, %v3528
        %v3538 = vadd.f32 %v3519, %v3528
        %v3539 = vadd.f32 %v3520, %v3528
        %v3540 = vadd.f32 %v3521, %v3528
        %v3541 = vadd.f32 %v3522, %v3528
        %v3542 = vadd.f32 %v3523, %v3528
        %v3543 = vadd.f32 %v3524, %v3528
        %v3544 = vadd.f32 %v3525, %v3528
        %v3545 = vadd.f32 %v3526, %v3528
        %v3546 = vpack.c.bf16 %v3531, %v3530
        %v3547 = vpack.c.bf16 %v3533, %v3532
        %v3548 = vpack.c.bf16 %v3535, %v3534
        %v3549 = vpack.c.bf16 %v3537, %v3536
        %v3550 = vpack.c.bf16 %v3539, %v3538
        %v3551 = vpack.c.bf16 %v3541, %v3540
        %v3552 = vpack.c.bf16 %v3543, %v3542
        %v3553 = vpack.c.bf16 %v3545, %v3544
        %v3554 = vld [vmem:[#allocation19] sm:$0xff]
        %v3555 = vld [vmem:[#allocation19 + $0x8] sm:$0xff]
        %v3556 = vld [vmem:[#allocation19 + $0x10] sm:$0xff]
        %v3557 = vld [vmem:[#allocation19 + $0x18] sm:$0xff]
        %v3558 = vld [vmem:[#allocation19 + $0x20] sm:$0xff]
        %v3559 = vld [vmem:[#allocation19 + $0x28] sm:$0xff]
        %v3560 = vld [vmem:[#allocation19 + $0x30] sm:$0xff]
        %v3561 = vld [vmem:[#allocation19 + $0x38] sm:$0xff]
        %v3562 = vld [vmem:[#allocation19 + $0x40] sm:$0xff]
        %v3563 = vld [vmem:[#allocation19 + $0x48] sm:$0xff]
        %v3564 = vld [vmem:[#allocation19 + $0x50] sm:$0xff]
        %v3565 = vld [vmem:[#allocation19 + $0x58] sm:$0xff]
        %v3566 = vld [vmem:[#allocation19 + $0x60] sm:$0xff]
        %v3567 = vld [vmem:[#allocation19 + $0x68] sm:$0xff]
        %v3568 = vld [vmem:[#allocation19 + $0x70] sm:$0xff]
        %v3569 = vld [vmem:[#allocation19 + $0x78] sm:$0xff]
        %v3570 = vld [vmem:[#allocation19 + $0x80] sm:$0xff]
        %v3571 = vld [vmem:[#allocation19 + $0x88] sm:$0xff]
        %v3572 = vld [vmem:[#allocation19 + $0x90] sm:$0xff]
        %v3573 = vld [vmem:[#allocation19 + $0x98] sm:$0xff]
        %v3574 = vld [vmem:[#allocation19 + $0xa0] sm:$0xff]
        %v3575 = vld [vmem:[#allocation19 + $0xa8] sm:$0xff]
        %v3576 = vld [vmem:[#allocation19 + $0xb0] sm:$0xff]
        %v3577 = vld [vmem:[#allocation19 + $0xb8] sm:$0xff]
        %v3578 = vld [vmem:[#allocation19 + $0xc0] sm:$0xff]
        %v3579 = vld [vmem:[#allocation19 + $0xc8] sm:$0xff]
        %v3580 = vld [vmem:[#allocation19 + $0xd0] sm:$0xff]
        %v3581 = vld [vmem:[#allocation19 + $0xd8] sm:$0xff]
        %v3582 = vld [vmem:[#allocation19 + $0xe0] sm:$0xff]
        %v3583 = vld [vmem:[#allocation19 + $0xe8] sm:$0xff]
        %v3584 = vld [vmem:[#allocation19 + $0xf0] sm:$0xff]
        %v3585 = vld [vmem:[#allocation19 + $0xf8] sm:$0xff]
        %v3586 = vld [vmem:[%s11] sm:$0xf]
        %v3588 = vperm.slane %v3586, 0
        %v3589 = vperm.slane %v3586, 1
        %v3590 = vperm.slane %v3586, 2
        %v3591 = vperm.slane %v3586, 3
        %v3628 = vunpack.c.l.b16 %v3554
        %v3629 = vunpack.c.h.b16 %v3554
        %v3630 = vunpack.c.l.b16 %v3555
        %v3631 = vunpack.c.h.b16 %v3555
        %v3632 = vunpack.c.l.b16 %v3556
        %v3633 = vunpack.c.h.b16 %v3556
        %v3634 = vunpack.c.l.b16 %v3557
        %v3635 = vunpack.c.h.b16 %v3557
        %v3636 = vunpack.c.l.b16 %v3558
        %v3637 = vunpack.c.h.b16 %v3558
        %v3638 = vunpack.c.l.b16 %v3559
        %v3639 = vunpack.c.h.b16 %v3559
        %v3640 = vunpack.c.l.b16 %v3560
        %v3641 = vunpack.c.h.b16 %v3560
        %v3642 = vunpack.c.l.b16 %v3561
        %v3643 = vunpack.c.h.b16 %v3561
        %v3644 = vunpack.c.l.b16 %v3562
        %v3645 = vunpack.c.h.b16 %v3562
        %v3646 = vunpack.c.l.b16 %v3563
        %v3647 = vunpack.c.h.b16 %v3563
        %v3648 = vunpack.c.l.b16 %v3564
        %v3649 = vunpack.c.h.b16 %v3564
        %v3650 = vunpack.c.l.b16 %v3565
        %v3651 = vunpack.c.h.b16 %v3565
        %v3652 = vunpack.c.l.b16 %v3566
        %v3653 = vunpack.c.h.b16 %v3566
        %v3654 = vunpack.c.l.b16 %v3567
        %v3655 = vunpack.c.h.b16 %v3567
        %v3656 = vunpack.c.l.b16 %v3568
        %v3657 = vunpack.c.h.b16 %v3568
        %v3658 = vunpack.c.l.b16 %v3569
        %v3659 = vunpack.c.h.b16 %v3569
        %v3660 = vunpack.c.l.b16 %v3570
        %v3661 = vunpack.c.h.b16 %v3570
        %v3662 = vunpack.c.l.b16 %v3571
        %v3663 = vunpack.c.h.b16 %v3571
        %v3664 = vunpack.c.l.b16 %v3572
        %v3665 = vunpack.c.h.b16 %v3572
        %v3666 = vunpack.c.l.b16 %v3573
        %v3667 = vunpack.c.h.b16 %v3573
        %v3668 = vunpack.c.l.b16 %v3574
        %v3669 = vunpack.c.h.b16 %v3574
        %v3670 = vunpack.c.l.b16 %v3575
        %v3671 = vunpack.c.h.b16 %v3575
        %v3672 = vunpack.c.l.b16 %v3576
        %v3673 = vunpack.c.h.b16 %v3576
        %v3674 = vunpack.c.l.b16 %v3577
        %v3675 = vunpack.c.h.b16 %v3577
        %v3676 = vunpack.c.l.b16 %v3578
        %v3677 = vunpack.c.h.b16 %v3578
        %v3678 = vunpack.c.l.b16 %v3579
        %v3679 = vunpack.c.h.b16 %v3579
        %v3680 = vunpack.c.l.b16 %v3580
        %v3681 = vunpack.c.h.b16 %v3580
        %v3682 = vunpack.c.l.b16 %v3581
        %v3683 = vunpack.c.h.b16 %v3581
        %v3684 = vunpack.c.l.b16 %v3582
        %v3685 = vunpack.c.h.b16 %v3582
        %v3686 = vunpack.c.l.b16 %v3583
        %v3687 = vunpack.c.h.b16 %v3583
        %v3688 = vunpack.c.l.b16 %v3584
        %v3689 = vunpack.c.h.b16 %v3584
        %v3690 = vunpack.c.l.b16 %v3585
        %v3691 = vunpack.c.h.b16 %v3585
        %v3692 = vpack.c.b16 %v3632, %v3628
        %v3693 = vpack.c.b16 %v3633, %v3629
        %v3694 = vpack.c.b16 %v3634, %v3630
        %v3695 = vpack.c.b16 %v3635, %v3631
        %v3696 = vpack.c.b16 %v3640, %v3636
        %v3697 = vpack.c.b16 %v3641, %v3637
        %v3698 = vpack.c.b16 %v3642, %v3638
        %v3699 = vpack.c.b16 %v3643, %v3639
        %v3700 = vpack.c.b16 %v3648, %v3644
        %v3701 = vpack.c.b16 %v3649, %v3645
        %v3702 = vpack.c.b16 %v3650, %v3646
        %v3703 = vpack.c.b16 %v3651, %v3647
        %v3704 = vpack.c.b16 %v3656, %v3652
        %v3705 = vpack.c.b16 %v3657, %v3653
        %v3706 = vpack.c.b16 %v3658, %v3654
        %v3707 = vpack.c.b16 %v3659, %v3655
        %v3708 = vpack.c.b16 %v3664, %v3660
        %v3709 = vpack.c.b16 %v3665, %v3661
        %v3710 = vpack.c.b16 %v3666, %v3662
        %v3711 = vpack.c.b16 %v3667, %v3663
        %v3712 = vpack.c.b16 %v3672, %v3668
        %v3713 = vpack.c.b16 %v3673, %v3669
        %v3714 = vpack.c.b16 %v3674, %v3670
        %v3715 = vpack.c.b16 %v3675, %v3671
        %v3716 = vpack.c.b16 %v3680, %v3676
        %v3717 = vpack.c.b16 %v3681, %v3677
        %v3718 = vpack.c.b16 %v3682, %v3678
        %v3719 = vpack.c.b16 %v3683, %v3679
        %v3720 = vpack.c.b16 %v3688, %v3684
        %v3721 = vpack.c.b16 %v3689, %v3685
        %v3722 = vpack.c.b16 %v3690, %v3686
        %v3723 = vpack.c.b16 %v3691, %v3687
        %3756 = vmatpush.bf16.msra.mxu0 %v3720
        %3757 = vmatpush.bf16.msra.mxu0 %v3716
        %3758 = vmatpush.bf16.msra.mxu0 %v3712
        %3759 = vmatpush.bf16.msra.mxu0 %v3708
        %3760 = vmatpush.bf16.msra.mxu0 %v3704
        %3761 = vmatpush.bf16.msra.mxu0 %v3700
        %3762 = vmatpush.bf16.msra.mxu0 %v3696
        %3763 = vmatpush.bf16.msra.mxu0 %v3692
        %3764 = vmatmul.bf16.gmra.mxu0 %v3546
        %v3765 = vpop.f32.mrf.mxu0
        %v3766 = vadd.f32 %v3588, %v3765
        %v3767 = vpop.f32.mrf.mxu0
        %v3768 = vadd.f32 %v3588, %v3767
        %3769 = vmatmul.bf16.gmra.mxu0 %v3547
        %v3770 = vpop.f32.mrf.mxu0
        %v3771 = vadd.f32 %v3588, %v3770
        %v3772 = vpop.f32.mrf.mxu0
        %v3773 = vadd.f32 %v3588, %v3772
        %3774 = vmatmul.bf16.gmra.mxu0 %v3548
        %v3775 = vpop.f32.mrf.mxu0
        %v3776 = vadd.f32 %v3588, %v3775
        %v3777 = vpop.f32.mrf.mxu0
        %v3778 = vadd.f32 %v3588, %v3777
        %3779 = vmatmul.bf16.gmra.mxu0 %v3549
        %v3780 = vpop.f32.mrf.mxu0
        %v3781 = vadd.f32 %v3588, %v3780
        %v3782 = vpop.f32.mrf.mxu0
        %v3783 = vadd.f32 %v3588, %v3782
        %3784 = vmatmul.bf16.gmra.mxu0 %v3550
        %v3785 = vpop.f32.mrf.mxu0
        %v3786 = vadd.f32 %v3588, %v3785
        %v3787 = vpop.f32.mrf.mxu0
        %v3788 = vadd.f32 %v3588, %v3787
        %3789 = vmatmul.bf16.gmra.mxu0 %v3551
        %v3790 = vpop.f32.mrf.mxu0
        %v3791 = vadd.f32 %v3588, %v3790
        %v3792 = vpop.f32.mrf.mxu0
        %v3793 = vadd.f32 %v3588, %v3792
        %3794 = vmatmul.bf16.gmra.mxu0 %v3552
        %v3795 = vpop.f32.mrf.mxu0
        %v3796 = vadd.f32 %v3588, %v3795
        %v3797 = vpop.f32.mrf.mxu0
        %v3798 = vadd.f32 %v3588, %v3797
        %3799 = vmatmul.bf16.gmra.mxu0 %v3553
        %v3800 = vpop.f32.mrf.mxu0
        %v3801 = vadd.f32 %v3588, %v3800
        %v3802 = vpop.f32.mrf.mxu0
        %v3803 = vadd.f32 %v3588, %v3802
        %3804 = vdwg.mxu0
        %3805 = vmatpush.bf16.msra.mxu0 %v3721
        %3806 = vmatpush.bf16.msra.mxu0 %v3717
        %3807 = vmatpush.bf16.msra.mxu0 %v3713
        %3808 = vmatpush.bf16.msra.mxu0 %v3709
        %3809 = vmatpush.bf16.msra.mxu0 %v3705
        %3810 = vmatpush.bf16.msra.mxu0 %v3701
        %3811 = vmatpush.bf16.msra.mxu0 %v3697
        %3812 = vmatpush.bf16.msra.mxu0 %v3693
        %3813 = vmatmul.bf16.gmra.mxu0 %v3546
        %v3814 = vpop.f32.mrf.mxu0
        %v3815 = vadd.f32 %v3589, %v3814
        %v3816 = vpop.f32.mrf.mxu0
        %v3817 = vadd.f32 %v3589, %v3816
        %3818 = vmatmul.bf16.gmra.mxu0 %v3547
        %v3819 = vpop.f32.mrf.mxu0
        %v3820 = vadd.f32 %v3589, %v3819
        %v3821 = vpop.f32.mrf.mxu0
        %v3822 = vadd.f32 %v3589, %v3821
        %3823 = vmatmul.bf16.gmra.mxu0 %v3548
        %v3824 = vpop.f32.mrf.mxu0
        %v3825 = vadd.f32 %v3589, %v3824
        %v3826 = vpop.f32.mrf.mxu0
        %v3827 = vadd.f32 %v3589, %v3826
        %3828 = vmatmul.bf16.gmra.mxu0 %v3549
        %v3829 = vpop.f32.mrf.mxu0
        %v3830 = vadd.f32 %v3589, %v3829
        %v3831 = vpop.f32.mrf.mxu0
        %v3832 = vadd.f32 %v3589, %v3831
        %3833 = vmatmul.bf16.gmra.mxu0 %v3550
        %v3834 = vpop.f32.mrf.mxu0
        %v3835 = vadd.f32 %v3589, %v3834
        %v3836 = vpop.f32.mrf.mxu0
        %v3837 = vadd.f32 %v3589, %v3836
        %3838 = vmatmul.bf16.gmra.mxu0 %v3551
        %v3839 = vpop.f32.mrf.mxu0
        %v3840 = vadd.f32 %v3589, %v3839
        %v3841 = vpop.f32.mrf.mxu0
        %v3842 = vadd.f32 %v3589, %v3841
        %3843 = vmatmul.bf16.gmra.mxu0 %v3552
        %v3844 = vpop.f32.mrf.mxu0
        %v3845 = vadd.f32 %v3589, %v3844
        %v3846 = vpop.f32.mrf.mxu0
        %v3847 = vadd.f32 %v3589, %v3846
        %3848 = vmatmul.bf16.gmra.mxu0 %v3553
        %v3849 = vpop.f32.mrf.mxu0
        %v3850 = vadd.f32 %v3589, %v3849
        %v3851 = vpop.f32.mrf.mxu0
        %v3852 = vadd.f32 %v3589, %v3851
        %3853 = vdwg.mxu0
        %3854 = vmatpush.bf16.msra.mxu0 %v3722
        %3855 = vmatpush.bf16.msra.mxu0 %v3718
        %3856 = vmatpush.bf16.msra.mxu0 %v3714
        %3857 = vmatpush.bf16.msra.mxu0 %v3710
        %3858 = vmatpush.bf16.msra.mxu0 %v3706
        %3859 = vmatpush.bf16.msra.mxu0 %v3702
        %3860 = vmatpush.bf16.msra.mxu0 %v3698
        %3861 = vmatpush.bf16.msra.mxu0 %v3694
        %3862 = vmatmul.bf16.gmra.mxu0 %v3546
        %v3863 = vpop.f32.mrf.mxu0
        %v3864 = vadd.f32 %v3590, %v3863
        %v3865 = vpop.f32.mrf.mxu0
        %v3866 = vadd.f32 %v3590, %v3865
        %3867 = vmatmul.bf16.gmra.mxu0 %v3547
        %v3868 = vpop.f32.mrf.mxu0
        %v3869 = vadd.f32 %v3590, %v3868
        %v3870 = vpop.f32.mrf.mxu0
        %v3871 = vadd.f32 %v3590, %v3870
        %3872 = vmatmul.bf16.gmra.mxu0 %v3548
        %v3873 = vpop.f32.mrf.mxu0
        %v3874 = vadd.f32 %v3590, %v3873
        %v3875 = vpop.f32.mrf.mxu0
        %v3876 = vadd.f32 %v3590, %v3875
        %3877 = vmatmul.bf16.gmra.mxu0 %v3549
        %v3878 = vpop.f32.mrf.mxu0
        %v3879 = vadd.f32 %v3590, %v3878
        %v3880 = vpop.f32.mrf.mxu0
        %v3881 = vadd.f32 %v3590, %v3880
        %3882 = vmatmul.bf16.gmra.mxu0 %v3550
        %v3883 = vpop.f32.mrf.mxu0
        %v3884 = vadd.f32 %v3590, %v3883
        %v3885 = vpop.f32.mrf.mxu0
        %v3886 = vadd.f32 %v3590, %v3885
        %3887 = vmatmul.bf16.gmra.mxu0 %v3551
        %v3888 = vpop.f32.mrf.mxu0
        %v3889 = vadd.f32 %v3590, %v3888
        %v3890 = vpop.f32.mrf.mxu0
        %v3891 = vadd.f32 %v3590, %v3890
        %3892 = vmatmul.bf16.gmra.mxu0 %v3552
        %v3893 = vpop.f32.mrf.mxu0
        %v3894 = vadd.f32 %v3590, %v3893
        %v3895 = vpop.f32.mrf.mxu0
        %v3896 = vadd.f32 %v3590, %v3895
        %3897 = vmatmul.bf16.gmra.mxu0 %v3553
        %v3898 = vpop.f32.mrf.mxu0
        %v3899 = vadd.f32 %v3590, %v3898
        %v3900 = vpop.f32.mrf.mxu0
        %v3901 = vadd.f32 %v3590, %v3900
        %3902 = vdwg.mxu0
        %3903 = vmatpush.bf16.msra.mxu0 %v3723
        %3904 = vmatpush.bf16.msra.mxu0 %v3719
        %3905 = vmatpush.bf16.msra.mxu0 %v3715
        %3906 = vmatpush.bf16.msra.mxu0 %v3711
        %3907 = vmatpush.bf16.msra.mxu0 %v3707
        %3908 = vmatpush.bf16.msra.mxu0 %v3703
        %3909 = vmatpush.bf16.msra.mxu0 %v3699
        %3910 = vmatpush.bf16.msra.mxu0 %v3695
        %3911 = vmatmul.bf16.gmra.mxu0 %v3546
        %v3912 = vpop.f32.mrf.mxu0
        %v3913 = vadd.f32 %v3591, %v3912
        %v3914 = vpop.f32.mrf.mxu0
        %v3915 = vadd.f32 %v3591, %v3914
        %3916 = vmatmul.bf16.gmra.mxu0 %v3547
        %v3917 = vpop.f32.mrf.mxu0
        %v3918 = vadd.f32 %v3591, %v3917
        %v3919 = vpop.f32.mrf.mxu0
        %v3920 = vadd.f32 %v3591, %v3919
        %3921 = vmatmul.bf16.gmra.mxu0 %v3548
        %v3922 = vpop.f32.mrf.mxu0
        %v3923 = vadd.f32 %v3591, %v3922
        %v3924 = vpop.f32.mrf.mxu0
        %v3925 = vadd.f32 %v3591, %v3924
        %3926 = vmatmul.bf16.gmra.mxu0 %v3549
        %v3927 = vpop.f32.mrf.mxu0
        %v3928 = vadd.f32 %v3591, %v3927
        %v3929 = vpop.f32.mrf.mxu0
        %v3930 = vadd.f32 %v3591, %v3929
        %3931 = vmatmul.bf16.gmra.mxu0 %v3550
        %v3932 = vpop.f32.mrf.mxu0
        %v3933 = vadd.f32 %v3591, %v3932
        %v3934 = vpop.f32.mrf.mxu0
        %v3935 = vadd.f32 %v3591, %v3934
        %3936 = vmatmul.bf16.gmra.mxu0 %v3551
        %v3937 = vpop.f32.mrf.mxu0
        %v3938 = vadd.f32 %v3591, %v3937
        %v3939 = vpop.f32.mrf.mxu0
        %v3940 = vadd.f32 %v3591, %v3939
        %3941 = vmatmul.bf16.gmra.mxu0 %v3552
        %v3942 = vpop.f32.mrf.mxu0
        %v3943 = vadd.f32 %v3591, %v3942
        %v3944 = vpop.f32.mrf.mxu0
        %v3945 = vadd.f32 %v3591, %v3944
        %3946 = vmatmul.bf16.gmra.mxu0 %v3553
        %v3947 = vpop.f32.mrf.mxu0
        %v3948 = vadd.f32 %v3591, %v3947
        %v3949 = vpop.f32.mrf.mxu0
        %v3950 = vadd.f32 %v3591, %v3949
        %3951 = vdwg.mxu0
        %v3952 = vmax.f32 %v3766, 0.0
        %v3953 = vmax.f32 %v3815, 0.0
        %v3954 = vmax.f32 %v3864, 0.0
        %v3955 = vmax.f32 %v3913, 0.0
        %v3956 = vmax.f32 %v3768, 0.0
        %v3957 = vmax.f32 %v3817, 0.0
        %v3958 = vmax.f32 %v3866, 0.0
        %v3959 = vmax.f32 %v3915, 0.0
        %v3960 = vmax.f32 %v3771, 0.0
        %v3961 = vmax.f32 %v3820, 0.0
        %v3962 = vmax.f32 %v3869, 0.0
        %v3963 = vmax.f32 %v3918, 0.0
        %v3964 = vmax.f32 %v3773, 0.0
        %v3965 = vmax.f32 %v3822, 0.0
        %v3966 = vmax.f32 %v3871, 0.0
        %v3967 = vmax.f32 %v3920, 0.0
        %v3968 = vmax.f32 %v3776, 0.0
        %v3969 = vmax.f32 %v3825, 0.0
        %v3970 = vmax.f32 %v3874, 0.0
        %v3971 = vmax.f32 %v3923, 0.0
        %v3972 = vmax.f32 %v3778, 0.0
        %v3973 = vmax.f32 %v3827, 0.0
        %v3974 = vmax.f32 %v3876, 0.0
        %v3975 = vmax.f32 %v3925, 0.0
        %v3976 = vmax.f32 %v3781, 0.0
        %v3977 = vmax.f32 %v3830, 0.0
        %v3978 = vmax.f32 %v3879, 0.0
        %v3979 = vmax.f32 %v3928, 0.0
        %v3980 = vmax.f32 %v3783, 0.0
        %v3981 = vmax.f32 %v3832, 0.0
        %v3982 = vmax.f32 %v3881, 0.0
        %v3983 = vmax.f32 %v3930, 0.0
        %v3984 = vmax.f32 %v3786, 0.0
        %v3985 = vmax.f32 %v3835, 0.0
        %v3986 = vmax.f32 %v3884, 0.0
        %v3987 = vmax.f32 %v3933, 0.0
        %v3988 = vmax.f32 %v3788, 0.0
        %v3989 = vmax.f32 %v3837, 0.0
        %v3990 = vmax.f32 %v3886, 0.0
        %v3991 = vmax.f32 %v3935, 0.0
        %v3992 = vmax.f32 %v3791, 0.0
        %v3993 = vmax.f32 %v3840, 0.0
        %v3994 = vmax.f32 %v3889, 0.0
        %v3995 = vmax.f32 %v3938, 0.0
        %v3996 = vmax.f32 %v3793, 0.0
        %v3997 = vmax.f32 %v3842, 0.0
        %v3998 = vmax.f32 %v3891, 0.0
        %v3999 = vmax.f32 %v3940, 0.0
        %v4000 = vmax.f32 %v3796, 0.0
        %v4001 = vmax.f32 %v3845, 0.0
        %v4002 = vmax.f32 %v3894, 0.0
        %v4003 = vmax.f32 %v3943, 0.0
        %v4004 = vmax.f32 %v3798, 0.0
        %v4005 = vmax.f32 %v3847, 0.0
        %v4006 = vmax.f32 %v3896, 0.0
        %v4007 = vmax.f32 %v3945, 0.0
        %v4008 = vmax.f32 %v3801, 0.0
        %v4009 = vmax.f32 %v3850, 0.0
        %v4010 = vmax.f32 %v3899, 0.0
        %v4011 = vmax.f32 %v3948, 0.0
        %v4012 = vmax.f32 %v3803, 0.0
        %v4013 = vmax.f32 %v3852, 0.0
        %v4014 = vmax.f32 %v3901, 0.0
        %v4015 = vmax.f32 %v3950, 0.0
        %v4016 = vpack.c.bf16 %v3956, %v3952
        %v4017 = vpack.c.bf16 %v3957, %v3953
        %v4018 = vpack.c.bf16 %v3958, %v3954
        %v4019 = vpack.c.bf16 %v3959, %v3955
        %v4020 = vpack.c.bf16 %v3964, %v3960
        %v4021 = vpack.c.bf16 %v3965, %v3961
        %v4022 = vpack.c.bf16 %v3966, %v3962
        %v4023 = vpack.c.bf16 %v3967, %v3963
        %v4024 = vpack.c.bf16 %v3972, %v3968
        %v4025 = vpack.c.bf16 %v3973, %v3969
        %v4026 = vpack.c.bf16 %v3974, %v3970
        %v4027 = vpack.c.bf16 %v3975, %v3971
        %v4028 = vpack.c.bf16 %v3980, %v3976
        %v4029 = vpack.c.bf16 %v3981, %v3977
        %v4030 = vpack.c.bf16 %v3982, %v3978
        %v4031 = vpack.c.bf16 %v3983, %v3979
        %v4032 = vpack.c.bf16 %v3988, %v3984
        %v4033 = vpack.c.bf16 %v3989, %v3985
        %v4034 = vpack.c.bf16 %v3990, %v3986
        %v4035 = vpack.c.bf16 %v3991, %v3987
        %v4036 = vpack.c.bf16 %v3996, %v3992
        %v4037 = vpack.c.bf16 %v3997, %v3993
        %v4038 = vpack.c.bf16 %v3998, %v3994
        %v4039 = vpack.c.bf16 %v3999, %v3995
        %v4040 = vpack.c.bf16 %v4004, %v4000
        %v4041 = vpack.c.bf16 %v4005, %v4001
        %v4042 = vpack.c.bf16 %v4006, %v4002
        %v4043 = vpack.c.bf16 %v4007, %v4003
        %v4044 = vpack.c.bf16 %v4012, %v4008
        %v4045 = vpack.c.bf16 %v4013, %v4009
        %v4046 = vpack.c.bf16 %v4014, %v4010
        %v4047 = vpack.c.bf16 %v4015, %v4011
        %v4048 = vld [vmem:[#allocation20] sm:$0xf]
        %v4049 = vld [vmem:[#allocation20 + $0x4] sm:$0xf]
        %v4050 = vld [vmem:[#allocation20 + $0x8] sm:$0xf]
        %v4051 = vld [vmem:[#allocation20 + $0xc] sm:$0xf]
        %v4052 = vld [vmem:[#allocation20 + $0x10] sm:$0xf]
        %v4053 = vld [vmem:[#allocation20 + $0x14] sm:$0xf]
        %v4054 = vld [vmem:[#allocation20 + $0x18] sm:$0xf]
        %v4055 = vld [vmem:[#allocation20 + $0x1c] sm:$0xf]
        %v4056 = vld [vmem:[#allocation20 + $0x20] sm:$0xf]
        %v4057 = vld [vmem:[#allocation20 + $0x24] sm:$0xf]
        %v4058 = vld [vmem:[#allocation20 + $0x28] sm:$0xf]
        %v4059 = vld [vmem:[#allocation20 + $0x2c] sm:$0xf]
        %v4060 = vld [vmem:[#allocation20 + $0x30] sm:$0xf]
        %v4061 = vld [vmem:[#allocation20 + $0x34] sm:$0xf]
        %v4062 = vld [vmem:[#allocation20 + $0x38] sm:$0xf]
        %v4063 = vld [vmem:[#allocation20 + $0x3c] sm:$0xf]
        %v4064 = vld [vmem:[#allocation20 + $0x40] sm:$0xf]
        %v4065 = vld [vmem:[#allocation20 + $0x44] sm:$0xf]
        %v4066 = vld [vmem:[#allocation20 + $0x48] sm:$0xf]
        %v4067 = vld [vmem:[#allocation20 + $0x4c] sm:$0xf]
        %v4068 = vld [vmem:[#allocation20 + $0x50] sm:$0xf]
        %v4069 = vld [vmem:[#allocation20 + $0x54] sm:$0xf]
        %v4070 = vld [vmem:[#allocation20 + $0x58] sm:$0xf]
        %v4071 = vld [vmem:[#allocation20 + $0x5c] sm:$0xf]
        %v4072 = vld [vmem:[#allocation20 + $0x60] sm:$0xf]
        %v4073 = vld [vmem:[#allocation20 + $0x64] sm:$0xf]
        %v4074 = vld [vmem:[#allocation20 + $0x68] sm:$0xf]
        %v4075 = vld [vmem:[#allocation20 + $0x6c] sm:$0xf]
        %v4076 = vld [vmem:[#allocation20 + $0x70] sm:$0xf]
        %v4077 = vld [vmem:[#allocation20 + $0x74] sm:$0xf]
        %v4078 = vld [vmem:[#allocation20 + $0x78] sm:$0xf]
        %v4079 = vld [vmem:[#allocation20 + $0x7c] sm:$0xf]
        %v4080 = vld [vmem:[#allocation20 + $0x80] sm:$0xf]
        %v4081 = vld [vmem:[#allocation20 + $0x84] sm:$0xf]
        %v4082 = vld [vmem:[#allocation20 + $0x88] sm:$0xf]
        %v4083 = vld [vmem:[#allocation20 + $0x8c] sm:$0xf]
        %v4084 = vld [vmem:[#allocation20 + $0x90] sm:$0xf]
        %v4085 = vld [vmem:[#allocation20 + $0x94] sm:$0xf]
        %v4086 = vld [vmem:[#allocation20 + $0x98] sm:$0xf]
        %v4087 = vld [vmem:[#allocation20 + $0x9c] sm:$0xf]
        %v4088 = vld [vmem:[#allocation20 + $0xa0] sm:$0xf]
        %v4089 = vld [vmem:[#allocation20 + $0xa4] sm:$0xf]
        %v4090 = vld [vmem:[#allocation20 + $0xa8] sm:$0xf]
        %v4091 = vld [vmem:[#allocation20 + $0xac] sm:$0xf]
        %v4092 = vld [vmem:[#allocation20 + $0xb0] sm:$0xf]
        %v4093 = vld [vmem:[#allocation20 + $0xb4] sm:$0xf]
        %v4094 = vld [vmem:[#allocation20 + $0xb8] sm:$0xf]
        %v4095 = vld [vmem:[#allocation20 + $0xbc] sm:$0xf]
        %v4096 = vld [vmem:[#allocation20 + $0xc0] sm:$0xf]
        %v4097 = vld [vmem:[#allocation20 + $0xc4] sm:$0xf]
        %v4098 = vld [vmem:[#allocation20 + $0xc8] sm:$0xf]
        %v4099 = vld [vmem:[#allocation20 + $0xcc] sm:$0xf]
        %v4100 = vld [vmem:[#allocation20 + $0xd0] sm:$0xf]
        %v4101 = vld [vmem:[#allocation20 + $0xd4] sm:$0xf]
        %v4102 = vld [vmem:[#allocation20 + $0xd8] sm:$0xf]
        %v4103 = vld [vmem:[#allocation20 + $0xdc] sm:$0xf]
        %v4104 = vld [vmem:[#allocation20 + $0xe0] sm:$0xf]
        %v4105 = vld [vmem:[#allocation20 + $0xe4] sm:$0xf]
        %v4106 = vld [vmem:[#allocation20 + $0xe8] sm:$0xf]
        %v4107 = vld [vmem:[#allocation20 + $0xec] sm:$0xf]
        %v4108 = vld [vmem:[#allocation20 + $0xf0] sm:$0xf]
        %v4109 = vld [vmem:[#allocation20 + $0xf4] sm:$0xf]
        %v4110 = vld [vmem:[#allocation20 + $0xf8] sm:$0xf]
        %v4111 = vld [vmem:[#allocation20 + $0xfc] sm:$0xf]
        %v4112 = vld [vmem:[%s13] sm:$0x1]
        %v4114 = vperm.slane %v4112, 0
        %v4180 = vunpack.c.l.b16 %v4048
        %v4181 = vunpack.c.l.b16 %v4049
        %v4182 = vunpack.c.l.b16 %v4050
        %v4183 = vunpack.c.l.b16 %v4051
        %v4184 = vunpack.c.l.b16 %v4052
        %v4185 = vunpack.c.l.b16 %v4053
        %v4186 = vunpack.c.l.b16 %v4054
        %v4187 = vunpack.c.l.b16 %v4055
        %v4188 = vunpack.c.l.b16 %v4056
        %v4189 = vunpack.c.l.b16 %v4057
        %v4190 = vunpack.c.l.b16 %v4058
        %v4191 = vunpack.c.l.b16 %v4059
        %v4192 = vunpack.c.l.b16 %v4060
        %v4193 = vunpack.c.l.b16 %v4061
        %v4194 = vunpack.c.l.b16 %v4062
        %v4195 = vunpack.c.l.b16 %v4063
        %v4196 = vunpack.c.l.b16 %v4064
        %v4197 = vunpack.c.l.b16 %v4065
        %v4198 = vunpack.c.l.b16 %v4066
        %v4199 = vunpack.c.l.b16 %v4067
        %v4200 = vunpack.c.l.b16 %v4068
        %v4201 = vunpack.c.l.b16 %v4069
        %v4202 = vunpack.c.l.b16 %v4070
        %v4203 = vunpack.c.l.b16 %v4071
        %v4204 = vunpack.c.l.b16 %v4072
        %v4205 = vunpack.c.l.b16 %v4073
        %v4206 = vunpack.c.l.b16 %v4074
        %v4207 = vunpack.c.l.b16 %v4075
        %v4208 = vunpack.c.l.b16 %v4076
        %v4209 = vunpack.c.l.b16 %v4077
        %v4210 = vunpack.c.l.b16 %v4078
        %v4211 = vunpack.c.l.b16 %v4079
        %v4212 = vunpack.c.l.b16 %v4080
        %v4213 = vunpack.c.l.b16 %v4081
        %v4214 = vunpack.c.l.b16 %v4082
        %v4215 = vunpack.c.l.b16 %v4083
        %v4216 = vunpack.c.l.b16 %v4084
        %v4217 = vunpack.c.l.b16 %v4085
        %v4218 = vunpack.c.l.b16 %v4086
        %v4219 = vunpack.c.l.b16 %v4087
        %v4220 = vunpack.c.l.b16 %v4088
        %v4221 = vunpack.c.l.b16 %v4089
        %v4222 = vunpack.c.l.b16 %v4090
        %v4223 = vunpack.c.l.b16 %v4091
        %v4224 = vunpack.c.l.b16 %v4092
        %v4225 = vunpack.c.l.b16 %v4093
        %v4226 = vunpack.c.l.b16 %v4094
        %v4227 = vunpack.c.l.b16 %v4095
        %v4228 = vunpack.c.l.b16 %v4096
        %v4229 = vunpack.c.l.b16 %v4097
        %v4230 = vunpack.c.l.b16 %v4098
        %v4231 = vunpack.c.l.b16 %v4099
        %v4232 = vunpack.c.l.b16 %v4100
        %v4233 = vunpack.c.l.b16 %v4101
        %v4234 = vunpack.c.l.b16 %v4102
        %v4235 = vunpack.c.l.b16 %v4103
        %v4236 = vunpack.c.l.b16 %v4104
        %v4237 = vunpack.c.l.b16 %v4105
        %v4238 = vunpack.c.l.b16 %v4106
        %v4239 = vunpack.c.l.b16 %v4107
        %v4240 = vunpack.c.l.b16 %v4108
        %v4241 = vunpack.c.l.b16 %v4109
        %v4242 = vunpack.c.l.b16 %v4110
        %v4243 = vunpack.c.l.b16 %v4111
        %v4244 = vpack.c.b16 %v4181, %v4180
        %v4245 = vpack.c.b16 %v4183, %v4182
        %v4246 = vpack.c.b16 %v4185, %v4184
        %v4247 = vpack.c.b16 %v4187, %v4186
        %v4248 = vpack.c.b16 %v4189, %v4188
        %v4249 = vpack.c.b16 %v4191, %v4190
        %v4250 = vpack.c.b16 %v4193, %v4192
        %v4251 = vpack.c.b16 %v4195, %v4194
        %v4252 = vpack.c.b16 %v4197, %v4196
        %v4253 = vpack.c.b16 %v4199, %v4198
        %v4254 = vpack.c.b16 %v4201, %v4200
        %v4255 = vpack.c.b16 %v4203, %v4202
        %v4256 = vpack.c.b16 %v4205, %v4204
        %v4257 = vpack.c.b16 %v4207, %v4206
        %v4258 = vpack.c.b16 %v4209, %v4208
        %v4259 = vpack.c.b16 %v4211, %v4210
        %v4260 = vpack.c.b16 %v4213, %v4212
        %v4261 = vpack.c.b16 %v4215, %v4214
        %v4262 = vpack.c.b16 %v4217, %v4216
        %v4263 = vpack.c.b16 %v4219, %v4218
        %v4264 = vpack.c.b16 %v4221, %v4220
        %v4265 = vpack.c.b16 %v4223, %v4222
        %v4266 = vpack.c.b16 %v4225, %v4224
        %v4267 = vpack.c.b16 %v4227, %v4226
        %v4268 = vpack.c.b16 %v4229, %v4228
        %v4269 = vpack.c.b16 %v4231, %v4230
        %v4270 = vpack.c.b16 %v4233, %v4232
        %v4271 = vpack.c.b16 %v4235, %v4234
        %v4272 = vpack.c.b16 %v4237, %v4236
        %v4273 = vpack.c.b16 %v4239, %v4238
        %v4274 = vpack.c.b16 %v4241, %v4240
        %v4275 = vpack.c.b16 %v4243, %v4242
        %4308 = vmatpush.bf16.msra.mxu0 %v4251
        %4309 = vmatpush.bf16.msra.mxu0 %v4250
        %4310 = vmatpush.bf16.msra.mxu0 %v4249
        %4311 = vmatpush.bf16.msra.mxu0 %v4248
        %4312 = vmatpush.bf16.msra.mxu0 %v4247
        %4313 = vmatpush.bf16.msra.mxu0 %v4246
        %4314 = vmatpush.bf16.msra.mxu0 %v4245
        %4315 = vmatpush.bf16.msra.mxu0 %v4244
        %4316 = vmatmul.bf16.gmra.mxu0 %v4016
        %v4317 = vpop.f32.mrf.mxu0
        %v4318 = vadd.f32 %v4114, %v4317
        %v4319 = vpop.f32.mrf.mxu0
        %v4320 = vadd.f32 %v4114, %v4319
        %4321 = vmatmul.bf16.gmra.mxu0 %v4020
        %v4322 = vpop.f32.mrf.mxu0
        %v4323 = vadd.f32 %v4114, %v4322
        %v4324 = vpop.f32.mrf.mxu0
        %v4325 = vadd.f32 %v4114, %v4324
        %4326 = vmatmul.bf16.gmra.mxu0 %v4024
        %v4327 = vpop.f32.mrf.mxu0
        %v4328 = vadd.f32 %v4114, %v4327
        %v4329 = vpop.f32.mrf.mxu0
        %v4330 = vadd.f32 %v4114, %v4329
        %4331 = vmatmul.bf16.gmra.mxu0 %v4028
        %v4332 = vpop.f32.mrf.mxu0
        %v4333 = vadd.f32 %v4114, %v4332
        %v4334 = vpop.f32.mrf.mxu0
        %v4335 = vadd.f32 %v4114, %v4334
        %4336 = vmatmul.bf16.gmra.mxu0 %v4032
        %v4337 = vpop.f32.mrf.mxu0
        %v4338 = vadd.f32 %v4114, %v4337
        %v4339 = vpop.f32.mrf.mxu0
        %v4340 = vadd.f32 %v4114, %v4339
        %4341 = vmatmul.bf16.gmra.mxu0 %v4036
        %v4342 = vpop.f32.mrf.mxu0
        %v4343 = vadd.f32 %v4114, %v4342
        %v4344 = vpop.f32.mrf.mxu0
        %v4345 = vadd.f32 %v4114, %v4344
        %4346 = vmatmul.bf16.gmra.mxu0 %v4040
        %v4347 = vpop.f32.mrf.mxu0
        %v4348 = vadd.f32 %v4114, %v4347
        %v4349 = vpop.f32.mrf.mxu0
        %v4350 = vadd.f32 %v4114, %v4349
        %4351 = vmatmul.bf16.gmra.mxu0 %v4044
        %v4352 = vpop.f32.mrf.mxu0
        %v4353 = vadd.f32 %v4114, %v4352
        %v4354 = vpop.f32.mrf.mxu0
        %v4355 = vadd.f32 %v4114, %v4354
        %4356 = vdwg.mxu0
        %4357 = vmatpush.bf16.msra.mxu0 %v4259
        %4358 = vmatpush.bf16.msra.mxu0 %v4258
        %4359 = vmatpush.bf16.msra.mxu0 %v4257
        %4360 = vmatpush.bf16.msra.mxu0 %v4256
        %4361 = vmatpush.bf16.msra.mxu0 %v4255
        %4362 = vmatpush.bf16.msra.mxu0 %v4254
        %4363 = vmatpush.bf16.msra.mxu0 %v4253
        %4364 = vmatpush.bf16.msra.mxu0 %v4252
        %4365 = vmatmul.bf16.gmra.mxu0 %v4017
        %v4366 = vpop.f32.mrf.mxu0
        %v4367 = vadd.f32 %v4318, %v4366
        %v4368 = vpop.f32.mrf.mxu0
        %v4369 = vadd.f32 %v4320, %v4368
        %4370 = vmatmul.bf16.gmra.mxu0 %v4021
        %v4371 = vpop.f32.mrf.mxu0
        %v4372 = vadd.f32 %v4323, %v4371
        %v4373 = vpop.f32.mrf.mxu0
        %v4374 = vadd.f32 %v4325, %v4373
        %4375 = vmatmul.bf16.gmra.mxu0 %v4025
        %v4376 = vpop.f32.mrf.mxu0
        %v4377 = vadd.f32 %v4328, %v4376
        %v4378 = vpop.f32.mrf.mxu0
        %v4379 = vadd.f32 %v4330, %v4378
        %4380 = vmatmul.bf16.gmra.mxu0 %v4029
        %v4381 = vpop.f32.mrf.mxu0
        %v4382 = vadd.f32 %v4333, %v4381
        %v4383 = vpop.f32.mrf.mxu0
        %v4384 = vadd.f32 %v4335, %v4383
        %4385 = vmatmul.bf16.gmra.mxu0 %v4033
        %v4386 = vpop.f32.mrf.mxu0
        %v4387 = vadd.f32 %v4338, %v4386
        %v4388 = vpop.f32.mrf.mxu0
        %v4389 = vadd.f32 %v4340, %v4388
        %4390 = vmatmul.bf16.gmra.mxu0 %v4037
        %v4391 = vpop.f32.mrf.mxu0
        %v4392 = vadd.f32 %v4343, %v4391
        %v4393 = vpop.f32.mrf.mxu0
        %v4394 = vadd.f32 %v4345, %v4393
        %4395 = vmatmul.bf16.gmra.mxu0 %v4041
        %v4396 = vpop.f32.mrf.mxu0
        %v4397 = vadd.f32 %v4348, %v4396
        %v4398 = vpop.f32.mrf.mxu0
        %v4399 = vadd.f32 %v4350, %v4398
        %4400 = vmatmul.bf16.gmra.mxu0 %v4045
        %v4401 = vpop.f32.mrf.mxu0
        %v4402 = vadd.f32 %v4353, %v4401
        %v4403 = vpop.f32.mrf.mxu0
        %v4404 = vadd.f32 %v4355, %v4403
        %4405 = vdwg.mxu0
        %4406 = vmatpush.bf16.msra.mxu0 %v4267
        %4407 = vmatpush.bf16.msra.mxu0 %v4266
        %4408 = vmatpush.bf16.msra.mxu0 %v4265
        %4409 = vmatpush.bf16.msra.mxu0 %v4264
        %4410 = vmatpush.bf16.msra.mxu0 %v4263
        %4411 = vmatpush.bf16.msra.mxu0 %v4262
        %4412 = vmatpush.bf16.msra.mxu0 %v4261
        %4413 = vmatpush.bf16.msra.mxu0 %v4260
        %4414 = vmatmul.bf16.gmra.mxu0 %v4018
        %v4415 = vpop.f32.mrf.mxu0
        %v4416 = vadd.f32 %v4367, %v4415
        %v4417 = vpop.f32.mrf.mxu0
        %v4418 = vadd.f32 %v4369, %v4417
        %4419 = vmatmul.bf16.gmra.mxu0 %v4022
        %v4420 = vpop.f32.mrf.mxu0
        %v4421 = vadd.f32 %v4372, %v4420
        %v4422 = vpop.f32.mrf.mxu0
        %v4423 = vadd.f32 %v4374, %v4422
        %4424 = vmatmul.bf16.gmra.mxu0 %v4026
        %v4425 = vpop.f32.mrf.mxu0
        %v4426 = vadd.f32 %v4377, %v4425
        %v4427 = vpop.f32.mrf.mxu0
        %v4428 = vadd.f32 %v4379, %v4427
        %4429 = vmatmul.bf16.gmra.mxu0 %v4030
        %v4430 = vpop.f32.mrf.mxu0
        %v4431 = vadd.f32 %v4382, %v4430
        %v4432 = vpop.f32.mrf.mxu0
        %v4433 = vadd.f32 %v4384, %v4432
        %4434 = vmatmul.bf16.gmra.mxu0 %v4034
        %v4435 = vpop.f32.mrf.mxu0
        %v4436 = vadd.f32 %v4387, %v4435
        %v4437 = vpop.f32.mrf.mxu0
        %v4438 = vadd.f32 %v4389, %v4437
        %4439 = vmatmul.bf16.gmra.mxu0 %v4038
        %v4440 = vpop.f32.mrf.mxu0
        %v4441 = vadd.f32 %v4392, %v4440
        %v4442 = vpop.f32.mrf.mxu0
        %v4443 = vadd.f32 %v4394, %v4442
        %4444 = vmatmul.bf16.gmra.mxu0 %v4042
        %v4445 = vpop.f32.mrf.mxu0
        %v4446 = vadd.f32 %v4397, %v4445
        %v4447 = vpop.f32.mrf.mxu0
        %v4448 = vadd.f32 %v4399, %v4447
        %4449 = vmatmul.bf16.gmra.mxu0 %v4046
        %v4450 = vpop.f32.mrf.mxu0
        %v4451 = vadd.f32 %v4402, %v4450
        %v4452 = vpop.f32.mrf.mxu0
        %v4453 = vadd.f32 %v4404, %v4452
        %4454 = vdwg.mxu0
        %4455 = vmatpush.bf16.msra.mxu0 %v4275
        %4456 = vmatpush.bf16.msra.mxu0 %v4274
        %4457 = vmatpush.bf16.msra.mxu0 %v4273
        %4458 = vmatpush.bf16.msra.mxu0 %v4272
        %4459 = vmatpush.bf16.msra.mxu0 %v4271
        %4460 = vmatpush.bf16.msra.mxu0 %v4270
        %4461 = vmatpush.bf16.msra.mxu0 %v4269
        %4462 = vmatpush.bf16.msra.mxu0 %v4268
        %4463 = vmatmul.bf16.gmra.mxu0 %v4019
        %v4464 = vpop.f32.mrf.mxu0
        %v4465 = vadd.f32 %v4416, %v4464
        %v4466 = vpop.f32.mrf.mxu0
        %v4467 = vadd.f32 %v4418, %v4466
        %4468 = vmatmul.bf16.gmra.mxu0 %v4023
        %v4469 = vpop.f32.mrf.mxu0
        %v4470 = vadd.f32 %v4421, %v4469
        %v4471 = vpop.f32.mrf.mxu0
        %v4472 = vadd.f32 %v4423, %v4471
        %4473 = vmatmul.bf16.gmra.mxu0 %v4027
        %v4474 = vpop.f32.mrf.mxu0
        %v4475 = vadd.f32 %v4426, %v4474
        %v4476 = vpop.f32.mrf.mxu0
        %v4477 = vadd.f32 %v4428, %v4476
        %4478 = vmatmul.bf16.gmra.mxu0 %v4031
        %v4479 = vpop.f32.mrf.mxu0
        %v4480 = vadd.f32 %v4431, %v4479
        %v4481 = vpop.f32.mrf.mxu0
        %v4482 = vadd.f32 %v4433, %v4481
        %4483 = vmatmul.bf16.gmra.mxu0 %v4035
        %v4484 = vpop.f32.mrf.mxu0
        %v4485 = vadd.f32 %v4436, %v4484
        %v4486 = vpop.f32.mrf.mxu0
        %v4487 = vadd.f32 %v4438, %v4486
        %4488 = vmatmul.bf16.gmra.mxu0 %v4039
        %v4489 = vpop.f32.mrf.mxu0
        %v4490 = vadd.f32 %v4441, %v4489
        %v4491 = vpop.f32.mrf.mxu0
        %v4492 = vadd.f32 %v4443, %v4491
        %4493 = vmatmul.bf16.gmra.mxu0 %v4043
        %v4494 = vpop.f32.mrf.mxu0
        %v4495 = vadd.f32 %v4446, %v4494
        %v4496 = vpop.f32.mrf.mxu0
        %v4497 = vadd.f32 %v4448, %v4496
        %4498 = vmatmul.bf16.gmra.mxu0 %v4047
        %v4499 = vpop.f32.mrf.mxu0
        %v4500 = vadd.f32 %v4451, %v4499
        %v4501 = vpop.f32.mrf.mxu0
        %v4502 = vadd.f32 %v4453, %v4501
        %4503 = vdwg.mxu0
        %v4504 = vadd.f32 %v3163, %v4465
        %v4505 = vadd.f32 %v3164, %v4467
        %v4506 = vadd.f32 %v3165, %v4470
        %v4507 = vadd.f32 %v3166, %v4472
        %v4508 = vadd.f32 %v3167, %v4475
        %v4509 = vadd.f32 %v3168, %v4477
        %v4510 = vadd.f32 %v3169, %v4480
        %v4511 = vadd.f32 %v3170, %v4482
        %v4512 = vadd.f32 %v3171, %v4485
        %v4513 = vadd.f32 %v3172, %v4487
        %v4514 = vadd.f32 %v3173, %v4490
        %v4515 = vadd.f32 %v3174, %v4492
        %v4516 = vadd.f32 %v3175, %v4495
        %v4517 = vadd.f32 %v3176, %v4497
        %v4518 = vadd.f32 %v3177, %v4500
        %v4519 = vadd.f32 %v3178, %v4502
        %4520 = vst [vmem:[%s675] sm:$0xff] %v4504
        %4521 = vst [vmem:[%s675 + $0x8] sm:$0xff] %v4505
        %4522 = vst [vmem:[%s675 + $0x10] sm:$0xff] %v4506
        %4523 = vst [vmem:[%s675 + $0x18] sm:$0xff] %v4507
        %4524 = vst [vmem:[%s675 + $0x20] sm:$0xff] %v4508
        %4525 = vst [vmem:[%s675 + $0x28] sm:$0xff] %v4509
        %4526 = vst [vmem:[%s675 + $0x30] sm:$0xff] %v4510
        %4527 = vst [vmem:[%s675 + $0x38] sm:$0xff] %v4511
        %4528 = vst [vmem:[%s675 + $0x40] sm:$0xff] %v4512
        %4529 = vst [vmem:[%s675 + $0x48] sm:$0xff] %v4513
        %4530 = vst [vmem:[%s675 + $0x50] sm:$0xff] %v4514
        %4531 = vst [vmem:[%s675 + $0x58] sm:$0xff] %v4515
        %4532 = vst [vmem:[%s675 + $0x60] sm:$0xff] %v4516
        %4533 = vst [vmem:[%s675 + $0x68] sm:$0xff] %v4517
        %4534 = vst [vmem:[%s675 + $0x70] sm:$0xff] %v4518
        %4535 = vst [vmem:[%s675 + $0x78] sm:$0xff] %v4519
        %s4536 = sand.u32 %s362, 1
        %s4537 = scalar_lea.sflag [#allocation7], %s4536
        %s4538 = sand.u32 %s362, 1
        %s4539 = smul.addr %s4538, 128
        %s4540 = scalar_lea.vmem [#allocation22], %s4539
        %s4541 = sand.u32 %s390, 1
        %s4542 = scalar_lea.sflag [#allocation24], %s4541
        %s4543 = sand.u32 %s390, 1
        %s4544 = smul.addr %s4543, 256
        %s4545 = scalar_lea.vmem [#allocation23], %s4544
        // Predicated region
        $region121: #{tpu_custom_call.1} parent=75 // pred_check
          %p4546 = pneg %p372
        $region122: #{tpu_custom_call.1} parent=75 // pred_check_branch
          %4548 = sbr.rel (%p4546) target = $region124
        $region123: #{tpu_custom_call.1} parent=75 // pred_region
          %s4549 = smul.u32 16, %s46
          %4551 = vsyncadd %s4537, 0
          %s4552 = smul.addr %s45, 32
          %s4553 = sadd.s32 %s4549, %s4552
          %s4554 = smul.addr %s4553, 8
          %s4555 = scalar_lea.hbm %s14, %s4554
          %s4556 = sshll.u32 %s4540, 4
          %s4557 = int_to_ptr.vmem [resolvable:$true] %s4556
          %s4558 = sshll.u32 %s4555, 4
          %s4559 = int_to_ptr.hbm [resolvable:$true] %s4558
          %4564 = dma.vmem_to_hbm [thread:$0]  %s4557, 2048, %s4559, %s4537, 128, 128, 8
        $region124: #{tpu_custom_call.1} parent=75 // pred_fallthru
          _
        // Predicated region
        $region125: #{tpu_custom_call.1} parent=75 // pred_check
          %p4565 = pneg %p400
        $region126: #{tpu_custom_call.1} parent=75 // pred_check_branch
          %4567 = sbr.rel (%p4565) target = $region128
        $region127: #{tpu_custom_call.1} parent=75 // pred_region
          %s4568 = smul.u32 16, %s46
          %4570 = vsyncadd %s4542, 0
          %s4571 = smul.addr %s4568, 2
          %s4572 = smul.addr %s45, 64
          %s4573 = sadd.s32 %s4571, %s4572
          %s4574 = smul.addr %s4573, 8
          %s4575 = scalar_lea.hbm %s15, %s4574
          %s4576 = sshll.u32 %s4545, 4
          %s4577 = int_to_ptr.vmem [resolvable:$true] %s4576
          %s4578 = sshll.u32 %s4575, 4
          %s4579 = int_to_ptr.hbm [resolvable:$true] %s4578
          %4584 = dma.vmem_to_hbm [thread:$0]  %s4577, 4096, %s4579, %s4542, 256, 256, 16
        $region128: #{tpu_custom_call.1} parent=75 // pred_fallthru
          _
      $region76: #{tpu_custom_call.1} parent=5 // pred_fallthru
        _
      %p4585 = scmp.le.s32.totalorder 2, %s36
      // Predicated region
      $region129: #{tpu_custom_call.1} parent=5 // pred_check
        %p4586 = pneg %p4585
      $region130: #{tpu_custom_call.1} parent=5 // pred_check_branch
        %4588 = sbr.rel (%p4586) target = $region132
      $region131: #{tpu_custom_call.1} parent=5 // pred_region
        %s4589 = ssub.s32 %s36, 2
        // Predicated region
        $region133: #{tpu_custom_call.1} parent=131 // pred_check
          %p4590 = pneg %p378
        $region134: #{tpu_custom_call.1} parent=131 // pred_check_branch
          %4592 = sbr.rel (%p4590) target = $region136
        $region135: #{tpu_custom_call.1} parent=131 // pred_region
          %s4593 = sand.u32 %s363, 1
          %s4594 = scalar_lea.sflag [#allocation7], %s4593
          %s4595 = sand.u32 %s363, 1
          %s4596 = smul.addr %s4595, 128
          %s4597 = scalar_lea.vmem [#allocation22], %s4596
          %4599 = dma.done %s4594, 2048
        $region136: #{tpu_custom_call.1} parent=131 // pred_fallthru
          _
        // Predicated region
        $region137: #{tpu_custom_call.1} parent=131 // pred_check
          %p4600 = pneg %p406
        $region138: #{tpu_custom_call.1} parent=131 // pred_check_branch
          %4602 = sbr.rel (%p4600) target = $region140
        $region139: #{tpu_custom_call.1} parent=131 // pred_region
          %s4603 = sand.u32 %s391, 1
          %s4604 = scalar_lea.sflag [#allocation24], %s4603
          %s4605 = sand.u32 %s391, 1
          %s4606 = smul.addr %s4605, 256
          %s4607 = scalar_lea.vmem [#allocation23], %s4606
          %4609 = dma.done %s4604, 4096
        $region140: #{tpu_custom_call.1} parent=131 // pred_fallthru
          _
      $region132: #{tpu_custom_call.1} parent=5 // pred_fallthru
        _
    $region6: #{tpu_custom_call.1} parent=1 // loop_footer
      %s40 = sadd.s32 1, %s36
    $region7: #{tpu_custom_call.1} parent=1 // loop_footer_branch
      %35 = sbr.rel target = $region3
    $region8: #{tpu_custom_call.1} parent=1 // loop_exit
      _
    %4610 = vsyncpa [#allocation6], 1
    %s4611 = scalar_lea.sflag [#allocation6], 1
    %4612 = vsyncpa %s4611, 1
    %4613 = vsyncpa [#allocation9], 1
    %4614 = vsyncpa [#allocation12], 1
    %4615 = vsyncpa [#allocation15], 1
    %4616 = vsyncpa [#allocation18], 1
    %4617 = vsyncpa [#allocation21], 1
    %4618 = vsyncpa [#allocation7], 1
    %s4619 = scalar_lea.sflag [#allocation7], 1
    %4620 = vsyncpa %s4619, 1
    %4621 = vsyncpa [#allocation24], 1
    %s4622 = scalar_lea.sflag [#allocation24], 1
    %4623 = vsyncpa %s4622, 1

</llo_original>
